<compile_context>
chip_gen: v6e
topology: v6e:2x2x1
jax: 0.10.0
libtpu: 0.0.40
codegen_flags: <defaults>
</compile_context>

<pallas_src>
import functools

import jax
import jax.numpy as jnp
from jax.experimental import pallas as pl
from jax.experimental.pallas import tpu as pltpu

KSIZE = 5
PAD = 2
EPS = 1e-5


def _resnet_block_kernel(xp_ref, w1_ref, w2_ref, out_ref, slab_ref, *,
                         H, W, WPP):
    Cp = xp_ref.shape[1]            # channels, zero-padded to a multiple of 8
    L = xp_ref.shape[2]             # HP * WPP, padded to a multiple of 128
    HP = H + 2 * PAD                # padded frame height
    WP = W + 2 * PAD                # padded frame width (<= WPP storage lanes)
    shift_bits = WPP.bit_length() - 1   # WPP is a power of two
    inv_hw = 1.0 / float(H * W)

    # Padded-frame coordinates of every lane via shift/mask (no int division).
    lane = jax.lax.broadcasted_iota(jnp.int32, (Cp, L), 1)
    hp = lane >> shift_bits
    wp = lane & (WPP - 1)
    center = ((hp >= PAD) & (hp < PAD + H) &
              (wp >= PAD) & (wp < PAD + W))     # interior (true image) lanes

    xp = xp_ref[0]                  # (Cp, L) float32; center(xp) == x

    def lane_shift(a, s):
        # result[:, p] = a[:, (p + s) % L].  Circular XLU roll; wrapped lanes
        # only ever reach non-center outputs, which are masked away.
        if s == 0:
            return a
        return pltpu.roll(a, shift=(-s) % L, axis=1)

    def conv5x5(p_in, w_ref):
        # im2col slab (25*Cp, L): tap k = kh*5+kw holds p_in lane-rolled by
        # (kh-PAD)*WPP + (kw-PAD), stored as bf16 full-row lane-dense stores.
        # Then ONE MXU matmul: (Cp, 25*Cp) bf16 @ (25*Cp, L) bf16 -> f32.
        # Every slab row is rewritten, so no zero-init is ever needed.
        for kh in range(KSIZE):
            for kw in range(KSIZE):
                k = kh * KSIZE + kw
                s = (kh - PAD) * WPP + (kw - PAD)
                slab_ref[pl.ds(k * Cp, Cp), :] = (
                    lane_shift(p_in, s).astype(jnp.bfloat16))
        return jnp.dot(w_ref[...], slab_ref[...],
                       preferred_element_type=jnp.float32)

    def instance_norm(a):
        # nn.InstanceNorm2d(affine=False, eps=1e-5): per-(n,c) stats over the
        # H*W interior lanes only (biased variance, eps inside rsqrt).
        am = jnp.where(center, a, 0.0)
        mean = jnp.sum(am, axis=-1, keepdims=True) * inv_hw
        d = jnp.where(center, a - mean, 0.0)
        var = jnp.sum(d * d, axis=-1, keepdims=True) * inv_hw
        return (a - mean) * jax.lax.rsqrt(var + EPS)

    # --- stage 1: conv -> InstanceNorm -> ReLU ------------------------------
    h1 = jnp.maximum(instance_norm(conv5x5(xp, w1_ref)), 0.0)
    # TODO(synk): nn.Dropout(0.5) would be inserted here for use_dropout=True.

    # --- in-kernel ReflectionPad2d(2) of h1's interior (rows, then cols) ----
    p2 = jnp.where(center, h1, 0.0)
    for j in range(PAD):                      # top row j <- 2*PAD-j, bottom mirrored
        d = 2 * (PAD - j)
        p2 = jnp.where(hp == j,          lane_shift(p2,  d * WPP), p2)
        p2 = jnp.where(hp == HP - 1 - j, lane_shift(p2, -d * WPP), p2)
    q2 = p2
    for j in range(PAD):                      # columns, using row-completed p2
        d = 2 * (PAD - j)
        q2 = jnp.where(wp == j,          lane_shift(p2,  d), q2)
        q2 = jnp.where(wp == WP - 1 - j, lane_shift(p2, -d), q2)

    # --- stage 2: conv -> InstanceNorm, then residual add -------------------
    y2 = instance_norm(conv5x5(q2, w2_ref))
    out_ref[0] = xp + jnp.where(center, y2, 0.0)


def _round_up(x, m):
    return (x + m - 1) // m * m


@jax.jit
def resnet_block_forward(x_nchw, w1_hwio, b1, w2_hwio, b2):
    """Forward matching the PyTorch ResnetBlock (NCHW in / NCHW out).

    b1/b2 are accepted for parity with the PyTorch module but are not sent to
    the kernel: a per-channel conv bias is exactly cancelled by the non-affine
    InstanceNorm that follows it.
    """
    del b1, b2
    x = x_nchw.astype(jnp.float32)
    N, C, H, W = x.shape
    HP, WP = H + 2 * PAD, W + 2 * PAD

    # Lane-dense padded layout: channels -> multiple of 8, padded rows stored
    # in WPP = next_pow2(WP) lanes, flattened spatial axis -> multiple of 128.
    Cp = _round_up(C, 8)
    WPP = int(pl.next_power_of_2(WP))
    L = _round_up(HP * WPP, 128)

    xpad = jnp.pad(x, ((0, 0), (0, 0), (PAD, PAD), (PAD, PAD)), mode="reflect")
    xpad = jnp.pad(xpad, ((0, 0), (0, Cp - C), (0, 0), (0, WPP - WP)))
    xpad = xpad.reshape(N, Cp, HP * WPP)
    xpad = jnp.pad(xpad, ((0, 0), (0, 0), (0, L - HP * WPP)))

    # Conv weights as bf16 (Cp, 25*Cp), flattened in (kh, kw, ci) order to
    # match the im2col slab rows; zero-padded on both channel dims.
    def flat_w(w_hwio):
        wpad = jnp.pad(w_hwio, ((0, 0), (0, 0), (0, Cp - C), (0, Cp - C)))
        return (jnp.transpose(wpad, (3, 0, 1, 2))
                .reshape(Cp, KSIZE * KSIZE * Cp).astype(jnp.bfloat16))

    wf1, wf2 = flat_w(w1_hwio), flat_w(w2_hwio)

    out_pad = pl.pallas_call(
        functools.partial(_resnet_block_kernel, H=H, W=W, WPP=WPP),
        out_shape=jax.ShapeDtypeStruct((N, Cp, L), jnp.float32),
        grid_spec=pltpu.PrefetchScalarGridSpec(
            num_scalar_prefetch=0,
            grid=(N,),
            in_specs=[
                pl.BlockSpec((1, Cp, L), lambda n: (n, 0, 0)),
                pl.BlockSpec((Cp, KSIZE * KSIZE * Cp), lambda n: (0, 0)),
                pl.BlockSpec((Cp, KSIZE * KSIZE * Cp), lambda n: (0, 0)),
            ],
            out_specs=pl.BlockSpec((1, Cp, L), lambda n: (n, 0, 0)),
            scratch_shapes=[pltpu.VMEM((KSIZE * KSIZE * Cp, L), jnp.bfloat16)],
        ),
        compiler_params=pltpu.CompilerParams(
            dimension_semantics=("parallel",)),     # one image per TC on v7x
        input_output_aliases={0: 0},   # write result over the padded-x buffer
    )(xpad, wf1, wf2)

    # Extract the valid C x H x W interior and return NCHW like the module.
    out = out_pad[:, :C, :HP * WPP].reshape(N, C, HP, WPP)
    return out[:, :, PAD:PAD + H, PAD:PAD + W]


def _reference_forward(x_nchw, w1, b1, w2, b2, *, mxu_bf16=False):
    """Pure-JAX reference (lax.conv, with biases).  mxu_bf16=True mirrors the
    kernel's precision (bf16 conv operands, f32 accumulation)."""
    x = jnp.transpose(x_nchw, (0, 2, 3, 1)).astype(jnp.float32)  # -> NHWC

    def conv(a, w, b):
        a = jnp.pad(a, ((0, 0), (PAD, PAD), (PAD, PAD), (0, 0)), mode="reflect")
        if mxu_bf16:
            a = a.astype(jnp.bfloat16)
            w = w.astype(jnp.bfloat16)
        y = jax.lax.conv_general_dilated(
            a, w, window_strides=(1, 1), padding="VALID",
            dimension_numbers=("NHWC", "HWIO", "NHWC"),
            preferred_element_type=jnp.float32)
        return y + b.reshape(1, 1, 1, -1)

    def instnorm(a):
        m = a.mean(axis=(1, 2), keepdims=True)
        v = ((a - m) ** 2).mean(axis=(1, 2), keepdims=True)
        return (a - m) * jax.lax.rsqrt(v + EPS)

    h = jnp.maximum(instnorm(conv(x, w1, b1)), 0.0)
    o = instnorm(conv(h, w2, b2))
    return jnp.transpose(x + o, (0, 3, 1, 2))  # -> NCHW


if __name__ == "__main__":
    # Small shapes consistent with the module: NCHW input, dim = channels.
    N, C, H, W = 2, 4, 16, 16

    key = jax.random.PRNGKey(0)
    kx, kw1, kb1, kw2, kb2 = jax.random.split(key, 5)

    x = jax.random.normal(kx, (N, C, H, W), dtype=jnp.float32)
    w1 = 0.1 * jax.random.normal(kw1, (KSIZE, KSIZE, C, C), dtype=jnp.float32)
    b1 = 0.1 * jax.random.normal(kb1, (C,), dtype=jnp.float32)
    w2 = 0.1 * jax.random.normal(kw2, (KSIZE, KSIZE, C, C), dtype=jnp.float32)
    b2 = 0.1 * jax.random.normal(kb2, (C,), dtype=jnp.float32)

    out = jax.block_until_ready(resnet_block_forward(x, w1, b1, w2, b2))
    assert out.shape == (N, C, H, W), out.shape

    # Tight check vs a precision-matched reference (bf16 conv operands, f32
    # accumulation) proves kernel correctness.
    ref_bf16 = _reference_forward(x, w1, b1, w2, b2, mxu_bf16=True)
    err_bf16 = float(jnp.max(jnp.abs(out - ref_bf16)))
    assert jnp.allclose(out, ref_bf16, rtol=5e-3, atol=5e-3), err_bf16

    # Coarse check vs the full-f32 PyTorch-equivalent math documents the
    # bf16-MXU quantization cost (review: re-verify tolerance after bf16).
    ref_f32 = _reference_forward(x, w1, b1, w2, b2, mxu_bf16=False)
    err_f32 = float(jnp.max(jnp.abs(out - ref_f32)))
    assert jnp.allclose(out, ref_f32, rtol=5e-2, atol=5e-2), err_f32

    print("KERNEL_OK")
</pallas_src>

<mosaic_0001>
module attributes {stable_mosaic.version = 11 : i64} {
  func.func @_resnet_block_kernel(%arg0: i32, %arg1: memref<1x8x640xf32, #tpu.memory_space<vmem>>, %arg2: memref<8x200xbf16, #tpu.memory_space<vmem>>, %arg3: memref<8x200xbf16, #tpu.memory_space<vmem>>, %arg4: memref<1x8x640xf32, #tpu.memory_space<vmem>>, %arg5: memref<200x640xbf16, #tpu.memory_space<vmem>>) attributes {dimension_semantics = [#tpu.dimension_semantics<parallel>], iteration_bounds = array<i64: 2>, scalar_prefetch = 0 : i64, scratch_operands = 1 : i64, tpu.core_type = #tpu.core_type<tc>, window_params = [{transform_indices = @transform_0, window_bounds = array<i64: 1, 8, 640>}, {pipeline_mode = #tpu.pipeline_mode<synchronous>, transform_indices = @transform_1, window_bounds = array<i64: 8, 200>}, {pipeline_mode = #tpu.pipeline_mode<synchronous>, transform_indices = @transform_2, window_bounds = array<i64: 8, 200>}, {transform_indices = @transform_3, window_bounds = array<i64: 1, 8, 640>}]} {
    %0 = tpu.iota {dimensions = array<i32: 1>} : vector<8x640xi32>
    %c5_i32 = arith.constant 5 : i32
    %1 = vector.broadcast %c5_i32 : i32 to vector<8x640xi32>
    %2 = arith.shrsi %0, %1 : vector<8x640xi32>
    %c31_i32 = arith.constant 31 : i32
    %3 = vector.broadcast %c31_i32 : i32 to vector<8x640xi32>
    %4 = arith.andi %0, %3 : vector<8x640xi32>
    %c2_i32 = arith.constant 2 : i32
    %5 = vector.broadcast %c2_i32 : i32 to vector<8x640xi32>
    %6 = arith.cmpi sge, %2, %5 : vector<8x640xi32>
    %c18_i32 = arith.constant 18 : i32
    %7 = vector.broadcast %c18_i32 : i32 to vector<8x640xi32>
    %8 = arith.cmpi slt, %2, %7 : vector<8x640xi32>
    %9 = arith.andi %6, %8 : vector<8x640xi1>
    %c2_i32_0 = arith.constant 2 : i32
    %10 = vector.broadcast %c2_i32_0 : i32 to vector<8x640xi32>
    %11 = arith.cmpi sge, %4, %10 : vector<8x640xi32>
    %12 = arith.andi %9, %11 : vector<8x640xi1>
    %c18_i32_1 = arith.constant 18 : i32
    %13 = vector.broadcast %c18_i32_1 : i32 to vector<8x640xi32>
    %14 = arith.cmpi slt, %4, %13 : vector<8x640xi32>
    %15 = arith.andi %12, %14 : vector<8x640xi1>
    %c0 = arith.constant 0 : index
    %c0_2 = arith.constant 0 : index
    %c0_3 = arith.constant 0 : index
    %16 = vector.load %arg1[%c0, %c0_2, %c0_3] : memref<1x8x640xf32, #tpu.memory_space<vmem>>, vector<1x8x640xf32>
    %17 = vector.shape_cast %16 : vector<1x8x640xf32> to vector<8x640xf32>
    %c66_i32 = arith.constant 66 : i32
    %18 = tpu.dynamic_rotate %17 by %c66_i32 dim 1 : vector<8x640xf32>, i32 -> vector<8x640xf32>
    %19 = arith.truncf %18 : vector<8x640xf32> to vector<8x640xbf16>
    %c0_4 = arith.constant 0 : index
    %c0_5 = arith.constant 0 : index
    %20 = vector.load %arg5[%c0_4, %c0_5] : memref<200x640xbf16, #tpu.memory_space<vmem>>, vector<8x640xbf16>
    tpu.vector_store %arg5[%c0_4, %c0_5], %19 {strides = array<i32>} : memref<200x640xbf16, #tpu.memory_space<vmem>>, vector<8x640xbf16>,
    %c65_i32 = arith.constant 65 : i32
    %21 = tpu.dynamic_rotate %17 by %c65_i32 dim 1 : vector<8x640xf32>, i32 -> vector<8x640xf32>
    %22 = arith.truncf %21 : vector<8x640xf32> to vector<8x640xbf16>
    %c8 = arith.constant 8 : index
    %c0_6 = arith.constant 0 : index
    %23 = vector.load %arg5[%c8, %c0_6] : memref<200x640xbf16, #tpu.memory_space<vmem>>, vector<8x640xbf16>
    tpu.vector_store %arg5[%c8, %c0_6], %22 {strides = array<i32>} : memref<200x640xbf16, #tpu.memory_space<vmem>>, vector<8x640xbf16>,
    %c64_i32 = arith.constant 64 : i32
    %24 = tpu.dynamic_rotate %17 by %c64_i32 dim 1 : vector<8x640xf32>, i32 -> vector<8x640xf32>
    %25 = arith.truncf %24 : vector<8x640xf32> to vector<8x640xbf16>
    %c16 = arith.constant 16 : index
    %c0_7 = arith.constant 0 : index
    %26 = vector.load %arg5[%c16, %c0_7] : memref<200x640xbf16, #tpu.memory_space<vmem>>, vector<8x640xbf16>
    tpu.vector_store %arg5[%c16, %c0_7], %25 {strides = array<i32>} : memref<200x640xbf16, #tpu.memory_space<vmem>>, vector<8x640xbf16>,
    %c63_i32 = arith.constant 63 : i32
    %27 = tpu.dynamic_rotate %17 by %c63_i32 dim 1 : vector<8x640xf32>, i32 -> vector<8x640xf32>
    %28 = arith.truncf %27 : vector<8x640xf32> to vector<8x640xbf16>
    %c24 = arith.constant 24 : index
    %c0_8 = arith.constant 0 : index
    %29 = vector.load %arg5[%c24, %c0_8] : memref<200x640xbf16, #tpu.memory_space<vmem>>, vector<8x640xbf16>
    tpu.vector_store %arg5[%c24, %c0_8], %28 {strides = array<i32>} : memref<200x640xbf16, #tpu.memory_space<vmem>>, vector<8x640xbf16>,
    %c62_i32 = arith.constant 62 : i32
    %30 = tpu.dynamic_rotate %17 by %c62_i32 dim 1 : vector<8x640xf32>, i32 -> vector<8x640xf32>
    %31 = arith.truncf %30 : vector<8x640xf32> to vector<8x640xbf16>
    %c32 = arith.constant 32 : index
    %c0_9 = arith.constant 0 : index
    %32 = vector.load %arg5[%c32, %c0_9] : memref<200x640xbf16, #tpu.memory_space<vmem>>, vector<8x640xbf16>
    tpu.vector_store %arg5[%c32, %c0_9], %31 {strides = array<i32>} : memref<200x640xbf16, #tpu.memory_space<vmem>>, vector<8x640xbf16>,
    %c34_i32 = arith.constant 34 : i32
    %33 = tpu.dynamic_rotate %17 by %c34_i32 dim 1 : vector<8x640xf32>, i32 -> vector<8x640xf32>
    %34 = arith.truncf %33 : vector<8x640xf32> to vector<8x640xbf16>
    %c40 = arith.constant 40 : index
    %c0_10 = arith.constant 0 : index
    %35 = vector.load %arg5[%c40, %c0_10] : memref<200x640xbf16, #tpu.memory_space<vmem>>, vector<8x640xbf16>
    tpu.vector_store %arg5[%c40, %c0_10], %34 {strides = array<i32>} : memref<200x640xbf16, #tpu.memory_space<vmem>>, vector<8x640xbf16>,
    %c33_i32 = arith.constant 33 : i32
    %36 = tpu.dynamic_rotate %17 by %c33_i32 dim 1 : vector<8x640xf32>, i32 -> vector<8x640xf32>
    %37 = arith.truncf %36 : vector<8x640xf32> to vector<8x640xbf16>
    %c48 = arith.constant 48 : index
    %c0_11 = arith.constant 0 : index
    %38 = vector.load %arg5[%c48, %c0_11] : memref<200x640xbf16, #tpu.memory_space<vmem>>, vector<8x640xbf16>
    tpu.vector_store %arg5[%c48, %c0_11], %37 {strides = array<i32>} : memref<200x640xbf16, #tpu.memory_space<vmem>>, vector<8x640xbf16>,
    %c32_i32 = arith.constant 32 : i32
    %39 = tpu.dynamic_rotate %17 by %c32_i32 dim 1 : vector<8x640xf32>, i32 -> vector<8x640xf32>
    %40 = arith.truncf %39 : vector<8x640xf32> to vector<8x640xbf16>
    %c56 = arith.constant 56 : index
    %c0_12 = arith.constant 0 : index
    %41 = vector.load %arg5[%c56, %c0_12] : memref<200x640xbf16, #tpu.memory_space<vmem>>, vector<8x640xbf16>
    tpu.vector_store %arg5[%c56, %c0_12], %40 {strides = array<i32>} : memref<200x640xbf16, #tpu.memory_space<vmem>>, vector<8x640xbf16>,
    %c31_i32_13 = arith.constant 31 : i32
    %42 = tpu.dynamic_rotate %17 by %c31_i32_13 dim 1 : vector<8x640xf32>, i32 -> vector<8x640xf32>
    %43 = arith.truncf %42 : vector<8x640xf32> to vector<8x640xbf16>
    %c64 = arith.constant 64 : index
    %c0_14 = arith.constant 0 : index
    %44 = vector.load %arg5[%c64, %c0_14] : memref<200x640xbf16, #tpu.memory_space<vmem>>, vector<8x640xbf16>
    tpu.vector_store %arg5[%c64, %c0_14], %43 {strides = array<i32>} : memref<200x640xbf16, #tpu.memory_space<vmem>>, vector<8x640xbf16>,
    %c30_i32 = arith.constant 30 : i32
    %45 = tpu.dynamic_rotate %17 by %c30_i32 dim 1 : vector<8x640xf32>, i32 -> vector<8x640xf32>
    %46 = arith.truncf %45 : vector<8x640xf32> to vector<8x640xbf16>
    %c72 = arith.constant 72 : index
    %c0_15 = arith.constant 0 : index
    %47 = vector.load %arg5[%c72, %c0_15] : memref<200x640xbf16, #tpu.memory_space<vmem>>, vector<8x640xbf16>
    tpu.vector_store %arg5[%c72, %c0_15], %46 {strides = array<i32>} : memref<200x640xbf16, #tpu.memory_space<vmem>>, vector<8x640xbf16>,
    %c2_i32_16 = arith.constant 2 : i32
    %48 = tpu.dynamic_rotate %17 by %c2_i32_16 dim 1 : vector<8x640xf32>, i32 -> vector<8x640xf32>
    %49 = arith.truncf %48 : vector<8x640xf32> to vector<8x640xbf16>
    %c80 = arith.constant 80 : index
    %c0_17 = arith.constant 0 : index
    %50 = vector.load %arg5[%c80, %c0_17] : memref<200x640xbf16, #tpu.memory_space<vmem>>, vector<8x640xbf16>
    tpu.vector_store %arg5[%c80, %c0_17], %49 {strides = array<i32>} : memref<200x640xbf16, #tpu.memory_space<vmem>>, vector<8x640xbf16>,
    %c1_i32 = arith.constant 1 : i32
    %51 = tpu.dynamic_rotate %17 by %c1_i32 dim 1 : vector<8x640xf32>, i32 -> vector<8x640xf32>
    %52 = arith.truncf %51 : vector<8x640xf32> to vector<8x640xbf16>
    %c88 = arith.constant 88 : index
    %c0_18 = arith.constant 0 : index
    %53 = vector.load %arg5[%c88, %c0_18] : memref<200x640xbf16, #tpu.memory_space<vmem>>, vector<8x640xbf16>
    tpu.vector_store %arg5[%c88, %c0_18], %52 {strides = array<i32>} : memref<200x640xbf16, #tpu.memory_space<vmem>>, vector<8x640xbf16>,
    %54 = arith.truncf %17 : vector<8x640xf32> to vector<8x640xbf16>
    %c96 = arith.constant 96 : index
    %c0_19 = arith.constant 0 : index
    %55 = vector.load %arg5[%c96, %c0_19] : memref<200x640xbf16, #tpu.memory_space<vmem>>, vector<8x640xbf16>
    tpu.vector_store %arg5[%c96, %c0_19], %54 {strides = array<i32>} : memref<200x640xbf16, #tpu.memory_space<vmem>>, vector<8x640xbf16>,
    %c639_i32 = arith.constant 639 : i32
    %56 = tpu.dynamic_rotate %17 by %c639_i32 dim 1 : vector<8x640xf32>, i32 -> vector<8x640xf32>
    %57 = arith.truncf %56 : vector<8x640xf32> to vector<8x640xbf16>
    %c104 = arith.constant 104 : index
    %c0_20 = arith.constant 0 : index
    %58 = vector.load %arg5[%c104, %c0_20] : memref<200x640xbf16, #tpu.memory_space<vmem>>, vector<8x640xbf16>
    tpu.vector_store %arg5[%c104, %c0_20], %57 {strides = array<i32>} : memref<200x640xbf16, #tpu.memory_space<vmem>>, vector<8x640xbf16>,
    %c638_i32 = arith.constant 638 : i32
    %59 = tpu.dynamic_rotate %17 by %c638_i32 dim 1 : vector<8x640xf32>, i32 -> vector<8x640xf32>
    %60 = arith.truncf %59 : vector<8x640xf32> to vector<8x640xbf16>
    %c112 = arith.constant 112 : index
    %c0_21 = arith.constant 0 : index
    %61 = vector.load %arg5[%c112, %c0_21] : memref<200x640xbf16, #tpu.memory_space<vmem>>, vector<8x640xbf16>
    tpu.vector_store %arg5[%c112, %c0_21], %60 {strides = array<i32>} : memref<200x640xbf16, #tpu.memory_space<vmem>>, vector<8x640xbf16>,
    %c610_i32 = arith.constant 610 : i32
    %62 = tpu.dynamic_rotate %17 by %c610_i32 dim 1 : vector<8x640xf32>, i32 -> vector<8x640xf32>
    %63 = arith.truncf %62 : vector<8x640xf32> to vector<8x640xbf16>
    %c120 = arith.constant 120 : index
    %c0_22 = arith.constant 0 : index
    %64 = vector.load %arg5[%c120, %c0_22] : memref<200x640xbf16, #tpu.memory_space<vmem>>, vector<8x640xbf16>
    tpu.vector_store %arg5[%c120, %c0_22], %63 {strides = array<i32>} : memref<200x640xbf16, #tpu.memory_space<vmem>>, vector<8x640xbf16>,
    %c609_i32 = arith.constant 609 : i32
    %65 = tpu.dynamic_rotate %17 by %c609_i32 dim 1 : vector<8x640xf32>, i32 -> vector<8x640xf32>
    %66 = arith.truncf %65 : vector<8x640xf32> to vector<8x640xbf16>
    %c128 = arith.constant 128 : index
    %c0_23 = arith.constant 0 : index
    %67 = vector.load %arg5[%c128, %c0_23] : memref<200x640xbf16, #tpu.memory_space<vmem>>, vector<8x640xbf16>
    tpu.vector_store %arg5[%c128, %c0_23], %66 {strides = array<i32>} : memref<200x640xbf16, #tpu.memory_space<vmem>>, vector<8x640xbf16>,
    %c608_i32 = arith.constant 608 : i32
    %68 = tpu.dynamic_rotate %17 by %c608_i32 dim 1 : vector<8x640xf32>, i32 -> vector<8x640xf32>
    %69 = arith.truncf %68 : vector<8x640xf32> to vector<8x640xbf16>
    %c136 = arith.constant 136 : index
    %c0_24 = arith.constant 0 : index
    %70 = vector.load %arg5[%c136, %c0_24] : memref<200x640xbf16, #tpu.memory_space<vmem>>, vector<8x640xbf16>
    tpu.vector_store %arg5[%c136, %c0_24], %69 {strides = array<i32>} : memref<200x640xbf16, #tpu.memory_space<vmem>>, vector<8x640xbf16>,
    %c607_i32 = arith.constant 607 : i32
    %71 = tpu.dynamic_rotate %17 by %c607_i32 dim 1 : vector<8x640xf32>, i32 -> vector<8x640xf32>
    %72 = arith.truncf %71 : vector<8x640xf32> to vector<8x640xbf16>
    %c144 = arith.constant 144 : index
    %c0_25 = arith.constant 0 : index
    %73 = vector.load %arg5[%c144, %c0_25] : memref<200x640xbf16, #tpu.memory_space<vmem>>, vector<8x640xbf16>
    tpu.vector_store %arg5[%c144, %c0_25], %72 {strides = array<i32>} : memref<200x640xbf16, #tpu.memory_space<vmem>>, vector<8x640xbf16>,
    %c606_i32 = arith.constant 606 : i32
    %74 = tpu.dynamic_rotate %17 by %c606_i32 dim 1 : vector<8x640xf32>, i32 -> vector<8x640xf32>
    %75 = arith.truncf %74 : vector<8x640xf32> to vector<8x640xbf16>
    %c152 = arith.constant 152 : index
    %c0_26 = arith.constant 0 : index
    %76 = vector.load %arg5[%c152, %c0_26] : memref<200x640xbf16, #tpu.memory_space<vmem>>, vector<8x640xbf16>
    tpu.vector_store %arg5[%c152, %c0_26], %75 {strides = array<i32>} : memref<200x640xbf16, #tpu.memory_space<vmem>>, vector<8x640xbf16>,
    %c578_i32 = arith.constant 578 : i32
    %77 = tpu.dynamic_rotate %17 by %c578_i32 dim 1 : vector<8x640xf32>, i32 -> vector<8x640xf32>
    %78 = arith.truncf %77 : vector<8x640xf32> to vector<8x640xbf16>
    %c160 = arith.constant 160 : index
    %c0_27 = arith.constant 0 : index
    %79 = vector.load %arg5[%c160, %c0_27] : memref<200x640xbf16, #tpu.memory_space<vmem>>, vector<8x640xbf16>
    tpu.vector_store %arg5[%c160, %c0_27], %78 {strides = array<i32>} : memref<200x640xbf16, #tpu.memory_space<vmem>>, vector<8x640xbf16>,
    %c577_i32 = arith.constant 577 : i32
    %80 = tpu.dynamic_rotate %17 by %c577_i32 dim 1 : vector<8x640xf32>, i32 -> vector<8x640xf32>
    %81 = arith.truncf %80 : vector<8x640xf32> to vector<8x640xbf16>
    %c168 = arith.constant 168 : index
    %c0_28 = arith.constant 0 : index
    %82 = vector.load %arg5[%c168, %c0_28] : memref<200x640xbf16, #tpu.memory_space<vmem>>, vector<8x640xbf16>
    tpu.vector_store %arg5[%c168, %c0_28], %81 {strides = array<i32>} : memref<200x640xbf16, #tpu.memory_space<vmem>>, vector<8x640xbf16>,
    %c576_i32 = arith.constant 576 : i32
    %83 = tpu.dynamic_rotate %17 by %c576_i32 dim 1 : vector<8x640xf32>, i32 -> vector<8x640xf32>
    %84 = arith.truncf %83 : vector<8x640xf32> to vector<8x640xbf16>
    %c176 = arith.constant 176 : index
    %c0_29 = arith.constant 0 : index
    %85 = vector.load %arg5[%c176, %c0_29] : memref<200x640xbf16, #tpu.memory_space<vmem>>, vector<8x640xbf16>
    tpu.vector_store %arg5[%c176, %c0_29], %84 {strides = array<i32>} : memref<200x640xbf16, #tpu.memory_space<vmem>>, vector<8x640xbf16>,
    %c575_i32 = arith.constant 575 : i32
    %86 = tpu.dynamic_rotate %17 by %c575_i32 dim 1 : vector<8x640xf32>, i32 -> vector<8x640xf32>
    %87 = arith.truncf %86 : vector<8x640xf32> to vector<8x640xbf16>
    %c184 = arith.constant 184 : index
    %c0_30 = arith.constant 0 : index
    %88 = vector.load %arg5[%c184, %c0_30] : memref<200x640xbf16, #tpu.memory_space<vmem>>, vector<8x640xbf16>
    tpu.vector_store %arg5[%c184, %c0_30], %87 {strides = array<i32>} : memref<200x640xbf16, #tpu.memory_space<vmem>>, vector<8x640xbf16>,
    %c574_i32 = arith.constant 574 : i32
    %89 = tpu.dynamic_rotate %17 by %c574_i32 dim 1 : vector<8x640xf32>, i32 -> vector<8x640xf32>
    %90 = arith.truncf %89 : vector<8x640xf32> to vector<8x640xbf16>
    %c192 = arith.constant 192 : index
    %c0_31 = arith.constant 0 : index
    %91 = vector.load %arg5[%c192, %c0_31] : memref<200x640xbf16, #tpu.memory_space<vmem>>, vector<8x640xbf16>
    tpu.vector_store %arg5[%c192, %c0_31], %90 {strides = array<i32>} : memref<200x640xbf16, #tpu.memory_space<vmem>>, vector<8x640xbf16>,
    %c0_32 = arith.constant 0 : index
    %c0_33 = arith.constant 0 : index
    %92 = vector.load %arg2[%c0_32, %c0_33] : memref<8x200xbf16, #tpu.memory_space<vmem>>, vector<8x200xbf16>
    %c0_34 = arith.constant 0 : index
    %c0_35 = arith.constant 0 : index
    %93 = vector.load %arg5[%c0_34, %c0_35] : memref<200x640xbf16, #tpu.memory_space<vmem>>, vector<200x640xbf16>
    %cst = arith.constant dense<0.000000e+00> : vector<8x640xf32>
    %94 = tpu.matmul %92, %93, %cst {dimension_numbers = #tpu.dot_dimension_numbers<[1], [0], [0], [1], [0, 0, 1, 1], [], []>} : vector<8x200xbf16>, vector<200x640xbf16>, vector<8x640xf32> -> vector<8x640xf32>
    %cst_36 = arith.constant 0.000000e+00 : f32
    %95 = vector.broadcast %cst_36 : f32 to vector<8x640xf32>
    %96 = arith.select %15, %94, %95 : vector<8x640xi1>, vector<8x640xf32>
    %cst_37 = arith.constant dense<0.000000e+00> : vector<8xf32>
    %97 = vector.multi_reduction <add>, %96, %cst_37 [1] : vector<8x640xf32> to vector<8xf32>
    %98 = vector.shape_cast %97 : vector<8xf32> to vector<8x1xf32>
    %cst_38 = arith.constant 3.906250e-03 : f32
    %99 = vector.broadcast %cst_38 : f32 to vector<8x1xf32>
    %100 = arith.mulf %98, %99 : vector<8x1xf32>
    %101 = vector.broadcast %100 : vector<8x1xf32> to vector<8x640xf32>
    %102 = arith.subf %94, %101 : vector<8x640xf32>
    %cst_39 = arith.constant 0.000000e+00 : f32
    %103 = vector.broadcast %cst_39 : f32 to vector<8x640xf32>
    %104 = arith.select %15, %102, %103 : vector<8x640xi1>, vector<8x640xf32>
    %105 = arith.mulf %104, %104 : vector<8x640xf32>
    %cst_40 = arith.constant dense<0.000000e+00> : vector<8xf32>
    %106 = vector.multi_reduction <add>, %105, %cst_40 [1] : vector<8x640xf32> to vector<8xf32>
    %107 = vector.shape_cast %106 : vector<8xf32> to vector<8x1xf32>
    %cst_41 = arith.constant 3.906250e-03 : f32
    %108 = vector.broadcast %cst_41 : f32 to vector<8x1xf32>
    %109 = arith.mulf %107, %108 : vector<8x1xf32>
    %110 = vector.broadcast %100 : vector<8x1xf32> to vector<8x640xf32>
    %111 = arith.subf %94, %110 : vector<8x640xf32>
    %cst_42 = arith.constant 9.99999974E-6 : f32
    %112 = vector.broadcast %cst_42 : f32 to vector<8x1xf32>
    %113 = arith.addf %109, %112 : vector<8x1xf32>
    %114 = math.rsqrt %113 : vector<8x1xf32>
    %115 = vector.broadcast %114 : vector<8x1xf32> to vector<8x640xf32>
    %116 = arith.mulf %111, %115 : vector<8x640xf32>
    %cst_43 = arith.constant 0.000000e+00 : f32
    %117 = vector.broadcast %cst_43 : f32 to vector<8x640xf32>
    %118 = arith.maximumf %116, %117 : vector<8x640xf32>
    %cst_44 = arith.constant 0.000000e+00 : f32
    %119 = vector.broadcast %cst_44 : f32 to vector<8x640xf32>
    %120 = arith.select %15, %118, %119 : vector<8x640xi1>, vector<8x640xf32>
    %c0_i32 = arith.constant 0 : i32
    %121 = vector.broadcast %c0_i32 : i32 to vector<8x640xi32>
    %122 = arith.cmpi eq, %2, %121 : vector<8x640xi32>
    %c512_i32 = arith.constant 512 : i32
    %123 = tpu.dynamic_rotate %120 by %c512_i32 dim 1 : vector<8x640xf32>, i32 -> vector<8x640xf32>
    %124 = arith.select %122, %123, %120 : vector<8x640xi1>, vector<8x640xf32>
    %c19_i32 = arith.constant 19 : i32
    %125 = vector.broadcast %c19_i32 : i32 to vector<8x640xi32>
    %126 = arith.cmpi eq, %2, %125 : vector<8x640xi32>
    %c128_i32 = arith.constant 128 : i32
    %127 = tpu.dynamic_rotate %124 by %c128_i32 dim 1 : vector<8x640xf32>, i32 -> vector<8x640xf32>
    %128 = arith.select %126, %127, %124 : vector<8x640xi1>, vector<8x640xf32>
    %c1_i32_45 = arith.constant 1 : i32
    %129 = vector.broadcast %c1_i32_45 : i32 to vector<8x640xi32>
    %130 = arith.cmpi eq, %2, %129 : vector<8x640xi32>
    %c576_i32_46 = arith.constant 576 : i32
    %131 = tpu.dynamic_rotate %128 by %c576_i32_46 dim 1 : vector<8x640xf32>, i32 -> vector<8x640xf32>
    %132 = arith.select %130, %131, %128 : vector<8x640xi1>, vector<8x640xf32>
    %c18_i32_47 = arith.constant 18 : i32
    %133 = vector.broadcast %c18_i32_47 : i32 to vector<8x640xi32>
    %134 = arith.cmpi eq, %2, %133 : vector<8x640xi32>
    %c64_i32_48 = arith.constant 64 : i32
    %135 = tpu.dynamic_rotate %132 by %c64_i32_48 dim 1 : vector<8x640xf32>, i32 -> vector<8x640xf32>
    %136 = arith.select %134, %135, %132 : vector<8x640xi1>, vector<8x640xf32>
    %c0_i32_49 = arith.constant 0 : i32
    %137 = vector.broadcast %c0_i32_49 : i32 to vector<8x640xi32>
    %138 = arith.cmpi eq, %4, %137 : vector<8x640xi32>
    %c636_i32 = arith.constant 636 : i32
    %139 = tpu.dynamic_rotate %136 by %c636_i32 dim 1 : vector<8x640xf32>, i32 -> vector<8x640xf32>
    %140 = arith.select %138, %139, %136 : vector<8x640xi1>, vector<8x640xf32>
    %c19_i32_50 = arith.constant 19 : i32
    %141 = vector.broadcast %c19_i32_50 : i32 to vector<8x640xi32>
    %142 = arith.cmpi eq, %4, %141 : vector<8x640xi32>
    %c4_i32 = arith.constant 4 : i32
    %143 = tpu.dynamic_rotate %136 by %c4_i32 dim 1 : vector<8x640xf32>, i32 -> vector<8x640xf32>
    %144 = arith.select %142, %143, %140 : vector<8x640xi1>, vector<8x640xf32>
    %c1_i32_51 = arith.constant 1 : i32
    %145 = vector.broadcast %c1_i32_51 : i32 to vector<8x640xi32>
    %146 = arith.cmpi eq, %4, %145 : vector<8x640xi32>
    %c638_i32_52 = arith.constant 638 : i32
    %147 = tpu.dynamic_rotate %136 by %c638_i32_52 dim 1 : vector<8x640xf32>, i32 -> vector<8x640xf32>
    %148 = arith.select %146, %147, %144 : vector<8x640xi1>, vector<8x640xf32>
    %c18_i32_53 = arith.constant 18 : i32
    %149 = vector.broadcast %c18_i32_53 : i32 to vector<8x640xi32>
    %150 = arith.cmpi eq, %4, %149 : vector<8x640xi32>
    %c2_i32_54 = arith.constant 2 : i32
    %151 = tpu.dynamic_rotate %136 by %c2_i32_54 dim 1 : vector<8x640xf32>, i32 -> vector<8x640xf32>
    %152 = arith.select %150, %151, %148 : vector<8x640xi1>, vector<8x640xf32>
    %c66_i32_55 = arith.constant 66 : i32
    %153 = tpu.dynamic_rotate %152 by %c66_i32_55 dim 1 : vector<8x640xf32>, i32 -> vector<8x640xf32>
    %154 = arith.truncf %153 : vector<8x640xf32> to vector<8x640xbf16>
    %c0_56 = arith.constant 0 : index
    %c0_57 = arith.constant 0 : index
    %155 = vector.load %arg5[%c0_56, %c0_57] : memref<200x640xbf16, #tpu.memory_space<vmem>>, vector<8x640xbf16>
    tpu.vector_store %arg5[%c0_56, %c0_57], %154 {strides = array<i32>} : memref<200x640xbf16, #tpu.memory_space<vmem>>, vector<8x640xbf16>,
    %c65_i32_58 = arith.constant 65 : i32
    %156 = tpu.dynamic_rotate %152 by %c65_i32_58 dim 1 : vector<8x640xf32>, i32 -> vector<8x640xf32>
    %157 = arith.truncf %156 : vector<8x640xf32> to vector<8x640xbf16>
    %c8_59 = arith.constant 8 : index
    %c0_60 = arith.constant 0 : index
    %158 = vector.load %arg5[%c8_59, %c0_60] : memref<200x640xbf16, #tpu.memory_space<vmem>>, vector<8x640xbf16>
    tpu.vector_store %arg5[%c8_59, %c0_60], %157 {strides = array<i32>} : memref<200x640xbf16, #tpu.memory_space<vmem>>, vector<8x640xbf16>,
    %c64_i32_61 = arith.constant 64 : i32
    %159 = tpu.dynamic_rotate %152 by %c64_i32_61 dim 1 : vector<8x640xf32>, i32 -> vector<8x640xf32>
    %160 = arith.truncf %159 : vector<8x640xf32> to vector<8x640xbf16>
    %c16_62 = arith.constant 16 : index
    %c0_63 = arith.constant 0 : index
    %161 = vector.load %arg5[%c16_62, %c0_63] : memref<200x640xbf16, #tpu.memory_space<vmem>>, vector<8x640xbf16>
    tpu.vector_store %arg5[%c16_62, %c0_63], %160 {strides = array<i32>} : memref<200x640xbf16, #tpu.memory_space<vmem>>, vector<8x640xbf16>,
    %c63_i32_64 = arith.constant 63 : i32
    %162 = tpu.dynamic_rotate %152 by %c63_i32_64 dim 1 : vector<8x640xf32>, i32 -> vector<8x640xf32>
    %163 = arith.truncf %162 : vector<8x640xf32> to vector<8x640xbf16>
    %c24_65 = arith.constant 24 : index
    %c0_66 = arith.constant 0 : index
    %164 = vector.load %arg5[%c24_65, %c0_66] : memref<200x640xbf16, #tpu.memory_space<vmem>>, vector<8x640xbf16>
    tpu.vector_store %arg5[%c24_65, %c0_66], %163 {strides = array<i32>} : memref<200x640xbf16, #tpu.memory_space<vmem>>, vector<8x640xbf16>,
    %c62_i32_67 = arith.constant 62 : i32
    %165 = tpu.dynamic_rotate %152 by %c62_i32_67 dim 1 : vector<8x640xf32>, i32 -> vector<8x640xf32>
    %166 = arith.truncf %165 : vector<8x640xf32> to vector<8x640xbf16>
    %c32_68 = arith.constant 32 : index
    %c0_69 = arith.constant 0 : index
    %167 = vector.load %arg5[%c32_68, %c0_69] : memref<200x640xbf16, #tpu.memory_space<vmem>>, vector<8x640xbf16>
    tpu.vector_store %arg5[%c32_68, %c0_69], %166 {strides = array<i32>} : memref<200x640xbf16, #tpu.memory_space<vmem>>, vector<8x640xbf16>,
    %c34_i32_70 = arith.constant 34 : i32
    %168 = tpu.dynamic_rotate %152 by %c34_i32_70 dim 1 : vector<8x640xf32>, i32 -> vector<8x640xf32>
    %169 = arith.truncf %168 : vector<8x640xf32> to vector<8x640xbf16>
    %c40_71 = arith.constant 40 : index
    %c0_72 = arith.constant 0 : index
    %170 = vector.load %arg5[%c40_71, %c0_72] : memref<200x640xbf16, #tpu.memory_space<vmem>>, vector<8x640xbf16>
    tpu.vector_store %arg5[%c40_71, %c0_72], %169 {strides = array<i32>} : memref<200x640xbf16, #tpu.memory_space<vmem>>, vector<8x640xbf16>,
    %c33_i32_73 = arith.constant 33 : i32
    %171 = tpu.dynamic_rotate %152 by %c33_i32_73 dim 1 : vector<8x640xf32>, i32 -> vector<8x640xf32>
    %172 = arith.truncf %171 : vector<8x640xf32> to vector<8x640xbf16>
    %c48_74 = arith.constant 48 : index
    %c0_75 = arith.constant 0 : index
    %173 = vector.load %arg5[%c48_74, %c0_75] : memref<200x640xbf16, #tpu.memory_space<vmem>>, vector<8x640xbf16>
    tpu.vector_store %arg5[%c48_74, %c0_75], %172 {strides = array<i32>} : memref<200x640xbf16, #tpu.memory_space<vmem>>, vector<8x640xbf16>,
    %c32_i32_76 = arith.constant 32 : i32
    %174 = tpu.dynamic_rotate %152 by %c32_i32_76 dim 1 : vector<8x640xf32>, i32 -> vector<8x640xf32>
    %175 = arith.truncf %174 : vector<8x640xf32> to vector<8x640xbf16>
    %c56_77 = arith.constant 56 : index
    %c0_78 = arith.constant 0 : index
    %176 = vector.load %arg5[%c56_77, %c0_78] : memref<200x640xbf16, #tpu.memory_space<vmem>>, vector<8x640xbf16>
    tpu.vector_store %arg5[%c56_77, %c0_78], %175 {strides = array<i32>} : memref<200x640xbf16, #tpu.memory_space<vmem>>, vector<8x640xbf16>,
    %c31_i32_79 = arith.constant 31 : i32
    %177 = tpu.dynamic_rotate %152 by %c31_i32_79 dim 1 : vector<8x640xf32>, i32 -> vector<8x640xf32>
    %178 = arith.truncf %177 : vector<8x640xf32> to vector<8x640xbf16>
    %c64_80 = arith.constant 64 : index
    %c0_81 = arith.constant 0 : index
    %179 = vector.load %arg5[%c64_80, %c0_81] : memref<200x640xbf16, #tpu.memory_space<vmem>>, vector<8x640xbf16>
    tpu.vector_store %arg5[%c64_80, %c0_81], %178 {strides = array<i32>} : memref<200x640xbf16, #tpu.memory_space<vmem>>, vector<8x640xbf16>,
    %c30_i32_82 = arith.constant 30 : i32
    %180 = tpu.dynamic_rotate %152 by %c30_i32_82 dim 1 : vector<8x640xf32>, i32 -> vector<8x640xf32>
    %181 = arith.truncf %180 : vector<8x640xf32> to vector<8x640xbf16>
    %c72_83 = arith.constant 72 : index
    %c0_84 = arith.constant 0 : index
    %182 = vector.load %arg5[%c72_83, %c0_84] : memref<200x640xbf16, #tpu.memory_space<vmem>>, vector<8x640xbf16>
    tpu.vector_store %arg5[%c72_83, %c0_84], %181 {strides = array<i32>} : memref<200x640xbf16, #tpu.memory_space<vmem>>, vector<8x640xbf16>,
    %c2_i32_85 = arith.constant 2 : i32
    %183 = tpu.dynamic_rotate %152 by %c2_i32_85 dim 1 : vector<8x640xf32>, i32 -> vector<8x640xf32>
    %184 = arith.truncf %183 : vector<8x640xf32> to vector<8x640xbf16>
    %c80_86 = arith.constant 80 : index
    %c0_87 = arith.constant 0 : index
    %185 = vector.load %arg5[%c80_86, %c0_87] : memref<200x640xbf16, #tpu.memory_space<vmem>>, vector<8x640xbf16>
    tpu.vector_store %arg5[%c80_86, %c0_87], %184 {strides = array<i32>} : memref<200x640xbf16, #tpu.memory_space<vmem>>, vector<8x640xbf16>,
    %c1_i32_88 = arith.constant 1 : i32
    %186 = tpu.dynamic_rotate %152 by %c1_i32_88 dim 1 : vector<8x640xf32>, i32 -> vector<8x640xf32>
    %187 = arith.truncf %186 : vector<8x640xf32> to vector<8x640xbf16>
    %c88_89 = arith.constant 88 : index
    %c0_90 = arith.constant 0 : index
    %188 = vector.load %arg5[%c88_89, %c0_90] : memref<200x640xbf16, #tpu.memory_space<vmem>>, vector<8x640xbf16>
    tpu.vector_store %arg5[%c88_89, %c0_90], %187 {strides = array<i32>} : memref<200x640xbf16, #tpu.memory_space<vmem>>, vector<8x640xbf16>,
    %189 = arith.truncf %152 : vector<8x640xf32> to vector<8x640xbf16>
    %c96_91 = arith.constant 96 : index
    %c0_92 = arith.constant 0 : index
    %190 = vector.load %arg5[%c96_91, %c0_92] : memref<200x640xbf16, #tpu.memory_space<vmem>>, vector<8x640xbf16>
    tpu.vector_store %arg5[%c96_91, %c0_92], %189 {strides = array<i32>} : memref<200x640xbf16, #tpu.memory_space<vmem>>, vector<8x640xbf16>,
    %c639_i32_93 = arith.constant 639 : i32
    %191 = tpu.dynamic_rotate %152 by %c639_i32_93 dim 1 : vector<8x640xf32>, i32 -> vector<8x640xf32>
    %192 = arith.truncf %191 : vector<8x640xf32> to vector<8x640xbf16>
    %c104_94 = arith.constant 104 : index
    %c0_95 = arith.constant 0 : index
    %193 = vector.load %arg5[%c104_94, %c0_95] : memref<200x640xbf16, #tpu.memory_space<vmem>>, vector<8x640xbf16>
    tpu.vector_store %arg5[%c104_94, %c0_95], %192 {strides = array<i32>} : memref<200x640xbf16, #tpu.memory_space<vmem>>, vector<8x640xbf16>,
    %c638_i32_96 = arith.constant 638 : i32
    %194 = tpu.dynamic_rotate %152 by %c638_i32_96 dim 1 : vector<8x640xf32>, i32 -> vector<8x640xf32>
    %195 = arith.truncf %194 : vector<8x640xf32> to vector<8x640xbf16>
    %c112_97 = arith.constant 112 : index
    %c0_98 = arith.constant 0 : index
    %196 = vector.load %arg5[%c112_97, %c0_98] : memref<200x640xbf16, #tpu.memory_space<vmem>>, vector<8x640xbf16>
    tpu.vector_store %arg5[%c112_97, %c0_98], %195 {strides = array<i32>} : memref<200x640xbf16, #tpu.memory_space<vmem>>, vector<8x640xbf16>,
    %c610_i32_99 = arith.constant 610 : i32
    %197 = tpu.dynamic_rotate %152 by %c610_i32_99 dim 1 : vector<8x640xf32>, i32 -> vector<8x640xf32>
    %198 = arith.truncf %197 : vector<8x640xf32> to vector<8x640xbf16>
    %c120_100 = arith.constant 120 : index
    %c0_101 = arith.constant 0 : index
    %199 = vector.load %arg5[%c120_100, %c0_101] : memref<200x640xbf16, #tpu.memory_space<vmem>>, vector<8x640xbf16>
    tpu.vector_store %arg5[%c120_100, %c0_101], %198 {strides = array<i32>} : memref<200x640xbf16, #tpu.memory_space<vmem>>, vector<8x640xbf16>,
    %c609_i32_102 = arith.constant 609 : i32
    %200 = tpu.dynamic_rotate %152 by %c609_i32_102 dim 1 : vector<8x640xf32>, i32 -> vector<8x640xf32>
    %201 = arith.truncf %200 : vector<8x640xf32> to vector<8x640xbf16>
    %c128_103 = arith.constant 128 : index
    %c0_104 = arith.constant 0 : index
    %202 = vector.load %arg5[%c128_103, %c0_104] : memref<200x640xbf16, #tpu.memory_space<vmem>>, vector<8x640xbf16>
    tpu.vector_store %arg5[%c128_103, %c0_104], %201 {strides = array<i32>} : memref<200x640xbf16, #tpu.memory_space<vmem>>, vector<8x640xbf16>,
    %c608_i32_105 = arith.constant 608 : i32
    %203 = tpu.dynamic_rotate %152 by %c608_i32_105 dim 1 : vector<8x640xf32>, i32 -> vector<8x640xf32>
    %204 = arith.truncf %203 : vector<8x640xf32> to vector<8x640xbf16>
    %c136_106 = arith.constant 136 : index
    %c0_107 = arith.constant 0 : index
    %205 = vector.load %arg5[%c136_106, %c0_107] : memref<200x640xbf16, #tpu.memory_space<vmem>>, vector<8x640xbf16>
    tpu.vector_store %arg5[%c136_106, %c0_107], %204 {strides = array<i32>} : memref<200x640xbf16, #tpu.memory_space<vmem>>, vector<8x640xbf16>,
    %c607_i32_108 = arith.constant 607 : i32
    %206 = tpu.dynamic_rotate %152 by %c607_i32_108 dim 1 : vector<8x640xf32>, i32 -> vector<8x640xf32>
    %207 = arith.truncf %206 : vector<8x640xf32> to vector<8x640xbf16>
    %c144_109 = arith.constant 144 : index
    %c0_110 = arith.constant 0 : index
    %208 = vector.load %arg5[%c144_109, %c0_110] : memref<200x640xbf16, #tpu.memory_space<vmem>>, vector<8x640xbf16>
    tpu.vector_store %arg5[%c144_109, %c0_110], %207 {strides = array<i32>} : memref<200x640xbf16, #tpu.memory_space<vmem>>, vector<8x640xbf16>,
    %c606_i32_111 = arith.constant 606 : i32
    %209 = tpu.dynamic_rotate %152 by %c606_i32_111 dim 1 : vector<8x640xf32>, i32 -> vector<8x640xf32>
    %210 = arith.truncf %209 : vector<8x640xf32> to vector<8x640xbf16>
    %c152_112 = arith.constant 152 : index
    %c0_113 = arith.constant 0 : index
    %211 = vector.load %arg5[%c152_112, %c0_113] : memref<200x640xbf16, #tpu.memory_space<vmem>>, vector<8x640xbf16>
    tpu.vector_store %arg5[%c152_112, %c0_113], %210 {strides = array<i32>} : memref<200x640xbf16, #tpu.memory_space<vmem>>, vector<8x640xbf16>,
    %c578_i32_114 = arith.constant 578 : i32
    %212 = tpu.dynamic_rotate %152 by %c578_i32_114 dim 1 : vector<8x640xf32>, i32 -> vector<8x640xf32>
    %213 = arith.truncf %212 : vector<8x640xf32> to vector<8x640xbf16>
    %c160_115 = arith.constant 160 : index
    %c0_116 = arith.constant 0 : index
    %214 = vector.load %arg5[%c160_115, %c0_116] : memref<200x640xbf16, #tpu.memory_space<vmem>>, vector<8x640xbf16>
    tpu.vector_store %arg5[%c160_115, %c0_116], %213 {strides = array<i32>} : memref<200x640xbf16, #tpu.memory_space<vmem>>, vector<8x640xbf16>,
    %c577_i32_117 = arith.constant 577 : i32
    %215 = tpu.dynamic_rotate %152 by %c577_i32_117 dim 1 : vector<8x640xf32>, i32 -> vector<8x640xf32>
    %216 = arith.truncf %215 : vector<8x640xf32> to vector<8x640xbf16>
    %c168_118 = arith.constant 168 : index
    %c0_119 = arith.constant 0 : index
    %217 = vector.load %arg5[%c168_118, %c0_119] : memref<200x640xbf16, #tpu.memory_space<vmem>>, vector<8x640xbf16>
    tpu.vector_store %arg5[%c168_118, %c0_119], %216 {strides = array<i32>} : memref<200x640xbf16, #tpu.memory_space<vmem>>, vector<8x640xbf16>,
    %c576_i32_120 = arith.constant 576 : i32
    %218 = tpu.dynamic_rotate %152 by %c576_i32_120 dim 1 : vector<8x640xf32>, i32 -> vector<8x640xf32>
    %219 = arith.truncf %218 : vector<8x640xf32> to vector<8x640xbf16>
    %c176_121 = arith.constant 176 : index
    %c0_122 = arith.constant 0 : index
    %220 = vector.load %arg5[%c176_121, %c0_122] : memref<200x640xbf16, #tpu.memory_space<vmem>>, vector<8x640xbf16>
    tpu.vector_store %arg5[%c176_121, %c0_122], %219 {strides = array<i32>} : memref<200x640xbf16, #tpu.memory_space<vmem>>, vector<8x640xbf16>,
    %c575_i32_123 = arith.constant 575 : i32
    %221 = tpu.dynamic_rotate %152 by %c575_i32_123 dim 1 : vector<8x640xf32>, i32 -> vector<8x640xf32>
    %222 = arith.truncf %221 : vector<8x640xf32> to vector<8x640xbf16>
    %c184_124 = arith.constant 184 : index
    %c0_125 = arith.constant 0 : index
    %223 = vector.load %arg5[%c184_124, %c0_125] : memref<200x640xbf16, #tpu.memory_space<vmem>>, vector<8x640xbf16>
    tpu.vector_store %arg5[%c184_124, %c0_125], %222 {strides = array<i32>} : memref<200x640xbf16, #tpu.memory_space<vmem>>, vector<8x640xbf16>,
    %c574_i32_126 = arith.constant 574 : i32
    %224 = tpu.dynamic_rotate %152 by %c574_i32_126 dim 1 : vector<8x640xf32>, i32 -> vector<8x640xf32>
    %225 = arith.truncf %224 : vector<8x640xf32> to vector<8x640xbf16>
    %c192_127 = arith.constant 192 : index
    %c0_128 = arith.constant 0 : index
    %226 = vector.load %arg5[%c192_127, %c0_128] : memref<200x640xbf16, #tpu.memory_space<vmem>>, vector<8x640xbf16>
    tpu.vector_store %arg5[%c192_127, %c0_128], %225 {strides = array<i32>} : memref<200x640xbf16, #tpu.memory_space<vmem>>, vector<8x640xbf16>,
    %c0_129 = arith.constant 0 : index
    %c0_130 = arith.constant 0 : index
    %227 = vector.load %arg3[%c0_129, %c0_130] : memref<8x200xbf16, #tpu.memory_space<vmem>>, vector<8x200xbf16>
    %c0_131 = arith.constant 0 : index
    %c0_132 = arith.constant 0 : index
    %228 = vector.load %arg5[%c0_131, %c0_132] : memref<200x640xbf16, #tpu.memory_space<vmem>>, vector<200x640xbf16>
    %cst_133 = arith.constant dense<0.000000e+00> : vector<8x640xf32>
    %229 = tpu.matmul %227, %228, %cst_133 {dimension_numbers = #tpu.dot_dimension_numbers<[1], [0], [0], [1], [0, 0, 1, 1], [], []>} : vector<8x200xbf16>, vector<200x640xbf16>, vector<8x640xf32> -> vector<8x640xf32>
    %cst_134 = arith.constant 0.000000e+00 : f32
    %230 = vector.broadcast %cst_134 : f32 to vector<8x640xf32>
    %231 = arith.select %15, %229, %230 : vector<8x640xi1>, vector<8x640xf32>
    %cst_135 = arith.constant dense<0.000000e+00> : vector<8xf32>
    %232 = vector.multi_reduction <add>, %231, %cst_135 [1] : vector<8x640xf32> to vector<8xf32>
    %233 = vector.shape_cast %232 : vector<8xf32> to vector<8x1xf32>
    %cst_136 = arith.constant 3.906250e-03 : f32
    %234 = vector.broadcast %cst_136 : f32 to vector<8x1xf32>
    %235 = arith.mulf %233, %234 : vector<8x1xf32>
    %236 = vector.broadcast %235 : vector<8x1xf32> to vector<8x640xf32>
    %237 = arith.subf %229, %236 : vector<8x640xf32>
    %cst_137 = arith.constant 0.000000e+00 : f32
    %238 = vector.broadcast %cst_137 : f32 to vector<8x640xf32>
    %239 = arith.select %15, %237, %238 : vector<8x640xi1>, vector<8x640xf32>
    %240 = arith.mulf %239, %239 : vector<8x640xf32>
    %cst_138 = arith.constant dense<0.000000e+00> : vector<8xf32>
    %241 = vector.multi_reduction <add>, %240, %cst_138 [1] : vector<8x640xf32> to vector<8xf32>
    %242 = vector.shape_cast %241 : vector<8xf32> to vector<8x1xf32>
    %cst_139 = arith.constant 3.906250e-03 : f32
    %243 = vector.broadcast %cst_139 : f32 to vector<8x1xf32>
    %244 = arith.mulf %242, %243 : vector<8x1xf32>
    %245 = vector.broadcast %235 : vector<8x1xf32> to vector<8x640xf32>
    %246 = arith.subf %229, %245 : vector<8x640xf32>
    %cst_140 = arith.constant 9.99999974E-6 : f32
    %247 = vector.broadcast %cst_140 : f32 to vector<8x1xf32>
    %248 = arith.addf %244, %247 : vector<8x1xf32>
    %249 = math.rsqrt %248 : vector<8x1xf32>
    %250 = vector.broadcast %249 : vector<8x1xf32> to vector<8x640xf32>
    %251 = arith.mulf %246, %250 : vector<8x640xf32>
    %cst_141 = arith.constant 0.000000e+00 : f32
    %252 = vector.broadcast %cst_141 : f32 to vector<8x640xf32>
    %253 = arith.select %15, %251, %252 : vector<8x640xi1>, vector<8x640xf32>
    %254 = arith.addf %17, %253 : vector<8x640xf32>
    %c0_142 = arith.constant 0 : index
    %c0_143 = arith.constant 0 : index
    %c0_144 = arith.constant 0 : index
    %255 = vector.load %arg4[%c0_142, %c0_143, %c0_144] : memref<1x8x640xf32, #tpu.memory_space<vmem>>, vector<1x8x640xf32>
    %256 = vector.shape_cast %255 : vector<1x8x640xf32> to vector<8x640xf32>
    %257 = vector.shape_cast %254 : vector<8x640xf32> to vector<1x8x640xf32>
    tpu.vector_store %arg4[%c0_142, %c0_143, %c0_144], %257 {strides = array<i32>} : memref<1x8x640xf32, #tpu.memory_space<vmem>>, vector<1x8x640xf32>,
    return
  }
  func.func @transform_0(%arg0: i32) -> (i32, i32, i32) {
    %c0_i32 = arith.constant 0 : i32
    %c0_i32_0 = arith.constant 0 : i32
    %c0_i32_1 = arith.constant 0 : i32
    return %arg0, %c0_i32, %c0_i32_0 : i32, i32, i32
  }
  func.func @transform_1(%arg0: i32) -> (i32, i32) {
    %c0_i32 = arith.constant 0 : i32
    %c0_i32_0 = arith.constant 0 : i32
    %c0_i32_1 = arith.constant 0 : i32
    return %c0_i32, %c0_i32_0 : i32, i32
  }
  func.func @transform_2(%arg0: i32) -> (i32, i32) {
    %c0_i32 = arith.constant 0 : i32
    %c0_i32_0 = arith.constant 0 : i32
    %c0_i32_1 = arith.constant 0 : i32
    return %c0_i32, %c0_i32_0 : i32, i32
  }
  func.func @transform_3(%arg0: i32) -> (i32, i32, i32) {
    %c0_i32 = arith.constant 0 : i32
    %c0_i32_0 = arith.constant 0 : i32
    %c0_i32_1 = arith.constant 0 : i32
    return %arg0, %c0_i32, %c0_i32_0 : i32, i32, i32
  }
}

</mosaic_0001>

<llo_original>
// kernel: resnet_block_forward.1
$region0: #{resnet_block_forward.1}
  #allocation0 [shape = 'u32[]', space=smem, size = 0x4, offset = 0x4, fixed_abs, tag = 'smem constant byte address 0x4 - core index']
  #allocation1 [shape = 'u32[144,128]{1,0:T(1,128)}', space=vmem, size = 0x12000, scoped, tag = 'internal scratch']
  #allocation2 [shape = 'bf16[200,640]{1,0:T(8,128)(2,1)}', space=vmem, size = 0x3e800, scoped, tag = 'scratch operand']
  %s0 = inlined_call_operand.vmem [shape: f32[2,8,640], index: 0, kind: input, shape index: {}, may-alias: {0,3}]
  %s1 = inlined_call_operand.vmem [shape: bf16[8,200], index: 1, kind: input, shape index: {}]
  %s2 = inlined_call_operand.vmem [shape: bf16[8,200], index: 2, kind: input, shape index: {}]
  %s3 = inlined_call_operand.vmem [shape: f32[2,8,640], index: 3, kind: output, shape index: {}, may-alias: {0,3}]
  %s4 = sld [smem:[#allocation0]]
  $region45: #{resnet_block_forward.1} parent=0
    _
  %s6 = ssub.s32 1, %s4
  %s7 = scalar_select 0, %s6, %s4
  loop: start=0, step=1, limit=4
  $region2: #{resnet_block_forward.1} parent=0 // loop_pre_header
    _
  $region3: #{resnet_block_forward.1} parent=0 // loop_header
    %s9 = sphi 0, %s13
    %p10 = scmp.ge.s32.totalorder %s9, 4
    %s19 = sphi 0, %s21
    %s22 = sphi 0, %s19
    %s23 = sphi 0, %s22
    %s39 = sphi 0, %s23
    %s43 = sphi 0, %s43
    %s45 = sphi 0, %s43
    %s46 = sphi 0, %s45
    %s60 = sphi 0, %s46
    %s64 = sphi 0, %s64
    %s66 = sphi 0, %s64
    %s67 = sphi 0, %s66
    %s81 = sphi 0, %s67
    %s87 = sphi 0, %s89
    %s90 = sphi 0, %s87
    %s91 = sphi 0, %s90
    %s107 = sphi 0, %s91
  $region4: #{resnet_block_forward.1} parent=0 // loop_header_branch
    %12 = sbr.rel (%p10) target = $region8
  $region5: #{resnet_block_forward.1} parent=0 // loop_body
    %s14 = ssub.s32 %s9, 1
    %s15 = ssub.s32 %s9, 2
    %s16 = sadd.s32 %s9, 1
    %s17 = ssub.s32 %s9, %s16
    %p18 = scmp.eq.s32.totalorder %s17, 0
    %s20 = sadd.s32 %s19, 1
    %s21 = scalar_select %p18, %s19, %s20
    %p24 = pneg %p18
    %p25 = scmp.eq.s32.totalorder %s9, 1
    %p26 = por %p24, %p25
    %p27 = scmp.ne.s32.totalorder %s19, %s22
    %p28 = scmp.eq.s32.totalorder %s9, 0
    %p29 = por %p27, %p28
    %p30 = scmp.ne.s32.totalorder %s19, %s22
    %p31 = scmp.eq.s32.totalorder %s14, 1
    %p32 = por %p30, %p31
    %p33 = scmp.ne.s32.totalorder %s22, %s23
    %p34 = scmp.eq.s32.totalorder %s14, 0
    %p35 = por %p33, %p34
    %p36 = scmp.ne.s32.totalorder %s22, %s23
    %p37 = scmp.eq.s32.totalorder %s15, 1
    %p38 = por %p36, %p37
    %p40 = scmp.ne.s32.totalorder %s23, %s39
    %p41 = scmp.eq.s32.totalorder %s15, 0
    %p42 = por %p40, %p41
    %s44 = sadd.s32 %s43, 1
    %p47 = scmp.eq.s32.totalorder %s9, 1
    %p48 = scmp.ne.s32.totalorder %s43, %s45
    %p49 = scmp.eq.s32.totalorder %s9, 0
    %p50 = por %p48, %p49
    %p51 = scmp.ne.s32.totalorder %s43, %s45
    %p52 = scmp.eq.s32.totalorder %s14, 1
    %p53 = por %p51, %p52
    %p54 = scmp.ne.s32.totalorder %s45, %s46
    %p55 = scmp.eq.s32.totalorder %s14, 0
    %p56 = por %p54, %p55
    %p57 = scmp.ne.s32.totalorder %s45, %s46
    %p58 = scmp.eq.s32.totalorder %s15, 1
    %p59 = por %p57, %p58
    %p61 = scmp.ne.s32.totalorder %s46, %s60
    %p62 = scmp.eq.s32.totalorder %s15, 0
    %p63 = por %p61, %p62
    %s65 = sadd.s32 %s64, 1
    %p68 = scmp.eq.s32.totalorder %s9, 1
    %p69 = scmp.ne.s32.totalorder %s64, %s66
    %p70 = scmp.eq.s32.totalorder %s9, 0
    %p71 = por %p69, %p70
    %p72 = scmp.ne.s32.totalorder %s64, %s66
    %p73 = scmp.eq.s32.totalorder %s14, 1
    %p74 = por %p72, %p73
    %p75 = scmp.ne.s32.totalorder %s66, %s67
    %p76 = scmp.eq.s32.totalorder %s14, 0
    %p77 = por %p75, %p76
    %p78 = scmp.ne.s32.totalorder %s66, %s67
    %p79 = scmp.eq.s32.totalorder %s15, 1
    %p80 = por %p78, %p79
    %p82 = scmp.ne.s32.totalorder %s67, %s81
    %p83 = scmp.eq.s32.totalorder %s15, 0
    %p84 = por %p82, %p83
    %s85 = ssub.s32 %s9, %s16
    %p86 = scmp.eq.s32.totalorder %s85, 0
    %s88 = sadd.s32 %s87, 1
    %s89 = scalar_select %p86, %s87, %s88
    %p92 = pneg %p86
    %p93 = scmp.eq.s32.totalorder %s9, 1
    %p94 = por %p92, %p93
    %p95 = scmp.ne.s32.totalorder %s87, %s90
    %p96 = scmp.eq.s32.totalorder %s9, 0
    %p97 = por %p95, %p96
    %p98 = scmp.ne.s32.totalorder %s87, %s90
    %p99 = scmp.eq.s32.totalorder %s14, 1
    %p100 = por %p98, %p99
    %p101 = scmp.ne.s32.totalorder %s90, %s91
    %p102 = scmp.eq.s32.totalorder %s14, 0
    %p103 = por %p101, %p102
    %p104 = scmp.ne.s32.totalorder %s90, %s91
    %p105 = scmp.eq.s32.totalorder %s15, 1
    %p106 = por %p104, %p105
    %p108 = scmp.ne.s32.totalorder %s91, %s107
    %p109 = scmp.eq.s32.totalorder %s15, 0
    %p110 = por %p108, %p109
    %p111 = scmp.le.s32.totalorder 1, %s9
    %p112 = scmp.lt.s32.totalorder %s9, 3
    %p113 = pnand %p111, %p112
    %p114 = pneg %p113
    // Predicated region
    $region9: #{resnet_block_forward.1} parent=5 // pred_check
      _
    $region10: #{resnet_block_forward.1} parent=5 // pred_check_branch
      %116 = sbr.rel (%p113) target = $region12
    $region11: #{resnet_block_forward.1} parent=5 // pred_region
      %s117 = ssub.s32 %s9, 1
      // Predicated region
      $region13: #{resnet_block_forward.1} parent=11 // pred_check
        %p118 = pneg %p56
      $region14: #{resnet_block_forward.1} parent=11 // pred_check_branch
        %120 = sbr.rel (%p118) target = $region16
      $region15: #{resnet_block_forward.1} parent=11 // pred_region
        _
      $region16: #{resnet_block_forward.1} parent=11 // pred_fallthru
        _
      // Predicated region
      $region17: #{resnet_block_forward.1} parent=11 // pred_check
        %p121 = pneg %p77
      $region18: #{resnet_block_forward.1} parent=11 // pred_check_branch
        %123 = sbr.rel (%p121) target = $region20
      $region19: #{resnet_block_forward.1} parent=11 // pred_region
        _
      $region20: #{resnet_block_forward.1} parent=11 // pred_fallthru
        _
    $region12: #{resnet_block_forward.1} parent=5 // pred_fallthru
      _
    %p124 = scmp.lt.s32.totalorder %s9, 2
    // Predicated region
    $region21: #{resnet_block_forward.1} parent=5 // pred_check
      %p125 = pneg %p124
    $region22: #{resnet_block_forward.1} parent=5 // pred_check_branch
      %127 = sbr.rel (%p125) target = $region24
    $region23: #{resnet_block_forward.1} parent=5 // pred_region
      // Predicated region
      $region25: #{resnet_block_forward.1} parent=23 // pred_check
        %p128 = pneg %p29
      $region26: #{resnet_block_forward.1} parent=23 // pred_check_branch
        %130 = sbr.rel (%p128) target = $region28
      $region27: #{resnet_block_forward.1} parent=23 // pred_region
        %p131 = scmp.lt.s32.totalorder %s9, 1
        %s132 = scalar_select %p131, %s9, 1
        %s133 = smul.addr %s132, 5
        %s134 = smul.addr %s133, 8
        %s135 = scalar_lea.vmem %s0, %s134
      $region28: #{resnet_block_forward.1} parent=23 // pred_fallthru
        _
    $region24: #{resnet_block_forward.1} parent=5 // pred_fallthru
      _
    %p136 = scmp.le.s32.totalorder 1, %s9
    %p137 = scmp.lt.s32.totalorder %s9, 3
    %p138 = pnand %p136, %p137
    %p139 = pneg %p138
    // Predicated region
    $region29: #{resnet_block_forward.1} parent=5 // pred_check
      _
    $region30: #{resnet_block_forward.1} parent=5 // pred_check_branch
      %141 = sbr.rel (%p138) target = $region32
    $region31: #{resnet_block_forward.1} parent=5 // pred_region
      %s142 = ssub.s32 %s9, 1
      %p143 = scmp.lt.s32.totalorder %s14, 1
      %s144 = scalar_select %p143, %s14, 1
      %s145 = smul.addr %s144, 5
      %s146 = smul.addr %s145, 8
      %s147 = scalar_lea.vmem %s0, %s146
      %p148 = pneg %p35
      %p149 = pneg %p32
      %p150 = pneg %p56
      %p151 = pneg %p53
      %p152 = pneg %p77
      %p153 = pneg %p74
      %p154 = pneg %p103
      %p155 = pneg %p100
      %p156 = scmp.lt.s32.totalorder %s14, 1
      %s157 = scalar_select %p156, %s14, 1
      %s158 = smul.addr %s157, 5
      %s159 = smul.addr %s158, 8
      %s160 = scalar_lea.vmem %s3, %s159
      %p161 = scmp.lt.s32.totalorder %s14, 1
      %s162 = scalar_select %p161, %s14, 1
      %s163 = smul.addr %s162, 5
      %s164 = smul.addr %s163, 8
      %s165 = scalar_lea.vmem %s0, %s164
      %p166 = scmp.lt.s32.totalorder %s14, 1
      %s167 = scalar_select %p166, %s14, 1
      %s168 = smul.addr %s167, 5
      %s169 = smul.addr %s168, 8
      %s170 = scalar_lea.vmem %s3, %s169
      %v172 = vlaneseq
      %v173 = vand.u32 %v172, 127
      %v174 = vadd.s32 %v173, 128
      %v175 = vadd.s32 %v173, 256
      %v176 = vadd.s32 %v173, 384
      %v177 = vadd.s32 %v173, 512
      %v178 = vshra.s32 %v173, 5
      %v179 = vshra.s32 %v174, 5
      %v180 = vshra.s32 %v175, 5
      %v181 = vshra.s32 %v176, 5
      %v182 = vshra.s32 %v177, 5
      %v183 = vand.u32 %v173, 31
      %v184 = vand.u32 %v174, 31
      %v185 = vand.u32 %v175, 31
      %v186 = vand.u32 %v176, 31
      %v187 = vand.u32 %v177, 31
      %vm188 = vcmp.ge.s32.totalorder %v178, 2
      %vm189 = vcmp.ge.s32.totalorder %v179, 2
      %vm190 = vcmp.ge.s32.totalorder %v180, 2
      %vm191 = vcmp.ge.s32.totalorder %v181, 2
      %vm192 = vcmp.ge.s32.totalorder %v182, 2
      %vm193 = vcmp.lt.s32.totalorder %v178, 18
      %vm194 = vcmp.lt.s32.totalorder %v179, 18
      %vm195 = vcmp.lt.s32.totalorder %v180, 18
      %vm196 = vcmp.lt.s32.totalorder %v181, 18
      %vm197 = vcmp.lt.s32.totalorder %v182, 18
      %vm198 = vmand %vm188, %vm193
      %vm199 = vmand %vm189, %vm194
      %vm200 = vmand %vm190, %vm195
      %vm201 = vmand %vm191, %vm196
      %vm202 = vmand %vm192, %vm197
      %vm203 = vcmp.ge.s32.totalorder %v183, 2
      %vm204 = vcmp.ge.s32.totalorder %v184, 2
      %vm205 = vcmp.ge.s32.totalorder %v185, 2
      %vm206 = vcmp.ge.s32.totalorder %v186, 2
      %vm207 = vcmp.ge.s32.totalorder %v187, 2
      %vm208 = vmand %vm198, %vm203
      %vm209 = vmand %vm199, %vm204
      %vm210 = vmand %vm200, %vm205
      %vm211 = vmand %vm201, %vm206
      %vm212 = vmand %vm202, %vm207
      %vm213 = vcmp.lt.s32.totalorder %v183, 18
      %vm214 = vcmp.lt.s32.totalorder %v184, 18
      %vm215 = vcmp.lt.s32.totalorder %v185, 18
      %vm216 = vcmp.lt.s32.totalorder %v186, 18
      %vm217 = vcmp.lt.s32.totalorder %v187, 18
      %vm218 = vmand %vm208, %vm213
      %vm219 = vmand %vm209, %vm214
      %vm220 = vmand %vm210, %vm215
      %vm221 = vmand %vm211, %vm216
      %vm222 = vmand %vm212, %vm217
      %v223 = vld [vmem:[%s165] sm:$0xff]
      %v224 = vld [vmem:[%s165 + $0x8] sm:$0xff]
      %v225 = vld [vmem:[%s165 + $0x10] sm:$0xff]
      %v226 = vld [vmem:[%s165 + $0x18] sm:$0xff]
      %v227 = vld [vmem:[%s165 + $0x20] sm:$0xff]
      %228 = vrot.lane.b32.xlu0 %v223, 66
      %v229 = vpop.permute.xlu0 %228
      %230 = vrot.lane.b32.xlu0 %v224, 66
      %v231 = vpop.permute.xlu0 %230
      %232 = vrot.lane.b32.xlu0 %v225, 66
      %v233 = vpop.permute.xlu0 %232
      %234 = vrot.lane.b32.xlu0 %v226, 66
      %v235 = vpop.permute.xlu0 %234
      %236 = vrot.lane.b32.xlu0 %v227, 66
      %v237 = vpop.permute.xlu0 %236
      %vm238 = vcmp.lt.s32.totalorder %v173, 66
      %v239 = vsel %vm238, %v235, %v237
      %v240 = vsel %vm238, %v233, %v235
      %v241 = vsel %vm238, %v231, %v233
      %v242 = vsel %vm238, %v229, %v231
      %v243 = vsel %vm238, %v237, %v229
      %v244 = vpack.c.bf16 %v243, %v243
      %v245 = vpack.c.bf16 %v242, %v242
      %v246 = vpack.c.bf16 %v241, %v241
      %v247 = vpack.c.bf16 %v240, %v240
      %v248 = vpack.c.bf16 %v239, %v239
      %v254 = vunpack.c.l.b16 %v244
      %v255 = vunpack.c.l.b16 %v245
      %v256 = vunpack.c.l.b16 %v246
      %v257 = vunpack.c.l.b16 %v247
      %v258 = vunpack.c.l.b16 %v248
      %v259 = vpack.c.b16 %v255, %v254
      %v260 = vpack.c.b16 %v257, %v256
      %v261 = vpack.c.b16 %v258, %v258
      %265 = vst [vmem:[#allocation2] sm:$0xff] %v259
      %266 = vst [vmem:[#allocation2 + $0x8] sm:$0xff] %v260
      %267 = vst [vmem:[#allocation2 + $0x10] sm:$0xf] %v261
      %268 = vrot.lane.b32.xlu0 %v223, 65
      %v269 = vpop.permute.xlu0 %268
      %270 = vrot.lane.b32.xlu0 %v224, 65
      %v271 = vpop.permute.xlu0 %270
      %272 = vrot.lane.b32.xlu0 %v225, 65
      %v273 = vpop.permute.xlu0 %272
      %274 = vrot.lane.b32.xlu0 %v226, 65
      %v275 = vpop.permute.xlu0 %274
      %276 = vrot.lane.b32.xlu0 %v227, 65
      %v277 = vpop.permute.xlu0 %276
      %vm278 = vcmp.lt.s32.totalorder %v173, 65
      %v279 = vsel %vm278, %v275, %v277
      %v280 = vsel %vm278, %v273, %v275
      %v281 = vsel %vm278, %v271, %v273
      %v282 = vsel %vm278, %v269, %v271
      %v283 = vsel %vm278, %v277, %v269
      %v284 = vpack.c.bf16 %v283, %v283
      %v285 = vpack.c.bf16 %v282, %v282
      %v286 = vpack.c.bf16 %v281, %v281
      %v287 = vpack.c.bf16 %v280, %v280
      %v288 = vpack.c.bf16 %v279, %v279
      %v294 = vunpack.c.l.b16 %v284
      %v295 = vunpack.c.l.b16 %v285
      %v296 = vunpack.c.l.b16 %v286
      %v297 = vunpack.c.l.b16 %v287
      %v298 = vunpack.c.l.b16 %v288
      %v299 = vpack.c.b16 %v295, %v294
      %v300 = vpack.c.b16 %v297, %v296
      %v301 = vpack.c.b16 %v298, %v298
      %305 = vst [vmem:[#allocation2 + $0x14] sm:$0xff] %v299
      %306 = vst [vmem:[#allocation2 + $0x1c] sm:$0xff] %v300
      %307 = vst [vmem:[#allocation2 + $0x24] sm:$0xf] %v301
      %308 = vrot.lane.b32.xlu0 %v223, 64
      %v309 = vpop.permute.xlu0 %308
      %310 = vrot.lane.b32.xlu0 %v224, 64
      %v311 = vpop.permute.xlu0 %310
      %312 = vrot.lane.b32.xlu0 %v225, 64
      %v313 = vpop.permute.xlu0 %312
      %314 = vrot.lane.b32.xlu0 %v226, 64
      %v315 = vpop.permute.xlu0 %314
      %316 = vrot.lane.b32.xlu0 %v227, 64
      %v317 = vpop.permute.xlu0 %316
      %vm318 = vcmp.lt.s32.totalorder %v173, 64
      %v319 = vsel %vm318, %v315, %v317
      %v320 = vsel %vm318, %v313, %v315
      %v321 = vsel %vm318, %v311, %v313
      %v322 = vsel %vm318, %v309, %v311
      %v323 = vsel %vm318, %v317, %v309
      %v324 = vpack.c.bf16 %v323, %v323
      %v325 = vpack.c.bf16 %v322, %v322
      %v326 = vpack.c.bf16 %v321, %v321
      %v327 = vpack.c.bf16 %v320, %v320
      %v328 = vpack.c.bf16 %v319, %v319
      %v334 = vunpack.c.l.b16 %v324
      %v335 = vunpack.c.l.b16 %v325
      %v336 = vunpack.c.l.b16 %v326
      %v337 = vunpack.c.l.b16 %v327
      %v338 = vunpack.c.l.b16 %v328
      %v339 = vpack.c.b16 %v335, %v334
      %v340 = vpack.c.b16 %v337, %v336
      %v341 = vpack.c.b16 %v338, %v338
      %345 = vst [vmem:[#allocation2 + $0x28] sm:$0xff] %v339
      %346 = vst [vmem:[#allocation2 + $0x30] sm:$0xff] %v340
      %347 = vst [vmem:[#allocation2 + $0x38] sm:$0xf] %v341
      %348 = vrot.lane.b32.xlu0 %v223, 63
      %v349 = vpop.permute.xlu0 %348
      %350 = vrot.lane.b32.xlu0 %v224, 63
      %v351 = vpop.permute.xlu0 %350
      %352 = vrot.lane.b32.xlu0 %v225, 63
      %v353 = vpop.permute.xlu0 %352
      %354 = vrot.lane.b32.xlu0 %v226, 63
      %v355 = vpop.permute.xlu0 %354
      %356 = vrot.lane.b32.xlu0 %v227, 63
      %v357 = vpop.permute.xlu0 %356
      %vm358 = vcmp.lt.s32.totalorder %v173, 63
      %v359 = vsel %vm358, %v355, %v357
      %v360 = vsel %vm358, %v353, %v355
      %v361 = vsel %vm358, %v351, %v353
      %v362 = vsel %vm358, %v349, %v351
      %v363 = vsel %vm358, %v357, %v349
      %v364 = vpack.c.bf16 %v363, %v363
      %v365 = vpack.c.bf16 %v362, %v362
      %v366 = vpack.c.bf16 %v361, %v361
      %v367 = vpack.c.bf16 %v360, %v360
      %v368 = vpack.c.bf16 %v359, %v359
      %v374 = vunpack.c.l.b16 %v364
      %v375 = vunpack.c.l.b16 %v365
      %v376 = vunpack.c.l.b16 %v366
      %v377 = vunpack.c.l.b16 %v367
      %v378 = vunpack.c.l.b16 %v368
      %v379 = vpack.c.b16 %v375, %v374
      %v380 = vpack.c.b16 %v377, %v376
      %v381 = vpack.c.b16 %v378, %v378
      %385 = vst [vmem:[#allocation2 + $0x3c] sm:$0xff] %v379
      %386 = vst [vmem:[#allocation2 + $0x44] sm:$0xff] %v380
      %387 = vst [vmem:[#allocation2 + $0x4c] sm:$0xf] %v381
      %388 = vrot.lane.b32.xlu0 %v223, 62
      %v389 = vpop.permute.xlu0 %388
      %390 = vrot.lane.b32.xlu0 %v224, 62
      %v391 = vpop.permute.xlu0 %390
      %392 = vrot.lane.b32.xlu0 %v225, 62
      %v393 = vpop.permute.xlu0 %392
      %394 = vrot.lane.b32.xlu0 %v226, 62
      %v395 = vpop.permute.xlu0 %394
      %396 = vrot.lane.b32.xlu0 %v227, 62
      %v397 = vpop.permute.xlu0 %396
      %vm398 = vcmp.lt.s32.totalorder %v173, 62
      %v399 = vsel %vm398, %v395, %v397
      %v400 = vsel %vm398, %v393, %v395
      %v401 = vsel %vm398, %v391, %v393
      %v402 = vsel %vm398, %v389, %v391
      %v403 = vsel %vm398, %v397, %v389
      %v404 = vpack.c.bf16 %v403, %v403
      %v405 = vpack.c.bf16 %v402, %v402
      %v406 = vpack.c.bf16 %v401, %v401
      %v407 = vpack.c.bf16 %v400, %v400
      %v408 = vpack.c.bf16 %v399, %v399
      %v414 = vunpack.c.l.b16 %v404
      %v415 = vunpack.c.l.b16 %v405
      %v416 = vunpack.c.l.b16 %v406
      %v417 = vunpack.c.l.b16 %v407
      %v418 = vunpack.c.l.b16 %v408
      %v419 = vpack.c.b16 %v415, %v414
      %v420 = vpack.c.b16 %v417, %v416
      %v421 = vpack.c.b16 %v418, %v418
      %425 = vst [vmem:[#allocation2 + $0x50] sm:$0xff] %v419
      %426 = vst [vmem:[#allocation2 + $0x58] sm:$0xff] %v420
      %427 = vst [vmem:[#allocation2 + $0x60] sm:$0xf] %v421
      %428 = vrot.lane.b32.xlu0 %v223, 34
      %v429 = vpop.permute.xlu0 %428
      %430 = vrot.lane.b32.xlu0 %v224, 34
      %v431 = vpop.permute.xlu0 %430
      %432 = vrot.lane.b32.xlu0 %v225, 34
      %v433 = vpop.permute.xlu0 %432
      %434 = vrot.lane.b32.xlu0 %v226, 34
      %v435 = vpop.permute.xlu0 %434
      %436 = vrot.lane.b32.xlu0 %v227, 34
      %v437 = vpop.permute.xlu0 %436
      %vm438 = vcmp.lt.s32.totalorder %v173, 34
      %v439 = vsel %vm438, %v435, %v437
      %v440 = vsel %vm438, %v433, %v435
      %v441 = vsel %vm438, %v431, %v433
      %v442 = vsel %vm438, %v429, %v431
      %v443 = vsel %vm438, %v437, %v429
      %v444 = vpack.c.bf16 %v443, %v443
      %v445 = vpack.c.bf16 %v442, %v442
      %v446 = vpack.c.bf16 %v441, %v441
      %v447 = vpack.c.bf16 %v440, %v440
      %v448 = vpack.c.bf16 %v439, %v439
      %v454 = vunpack.c.l.b16 %v444
      %v455 = vunpack.c.l.b16 %v445
      %v456 = vunpack.c.l.b16 %v446
      %v457 = vunpack.c.l.b16 %v447
      %v458 = vunpack.c.l.b16 %v448
      %v459 = vpack.c.b16 %v455, %v454
      %v460 = vpack.c.b16 %v457, %v456
      %v461 = vpack.c.b16 %v458, %v458
      %465 = vst [vmem:[#allocation2 + $0x64] sm:$0xff] %v459
      %466 = vst [vmem:[#allocation2 + $0x6c] sm:$0xff] %v460
      %467 = vst [vmem:[#allocation2 + $0x74] sm:$0xf] %v461
      %468 = vrot.lane.b32.xlu0 %v223, 33
      %v469 = vpop.permute.xlu0 %468
      %470 = vrot.lane.b32.xlu0 %v224, 33
      %v471 = vpop.permute.xlu0 %470
      %472 = vrot.lane.b32.xlu0 %v225, 33
      %v473 = vpop.permute.xlu0 %472
      %474 = vrot.lane.b32.xlu0 %v226, 33
      %v475 = vpop.permute.xlu0 %474
      %476 = vrot.lane.b32.xlu0 %v227, 33
      %v477 = vpop.permute.xlu0 %476
      %vm478 = vcmp.lt.s32.totalorder %v173, 33
      %v479 = vsel %vm478, %v475, %v477
      %v480 = vsel %vm478, %v473, %v475
      %v481 = vsel %vm478, %v471, %v473
      %v482 = vsel %vm478, %v469, %v471
      %v483 = vsel %vm478, %v477, %v469
      %v484 = vpack.c.bf16 %v483, %v483
      %v485 = vpack.c.bf16 %v482, %v482
      %v486 = vpack.c.bf16 %v481, %v481
      %v487 = vpack.c.bf16 %v480, %v480
      %v488 = vpack.c.bf16 %v479, %v479
      %v494 = vunpack.c.l.b16 %v484
      %v495 = vunpack.c.l.b16 %v485
      %v496 = vunpack.c.l.b16 %v486
      %v497 = vunpack.c.l.b16 %v487
      %v498 = vunpack.c.l.b16 %v488
      %v499 = vpack.c.b16 %v495, %v494
      %v500 = vpack.c.b16 %v497, %v496
      %v501 = vpack.c.b16 %v498, %v498
      %505 = vst [vmem:[#allocation2 + $0x78] sm:$0xff] %v499
      %506 = vst [vmem:[#allocation2 + $0x80] sm:$0xff] %v500
      %507 = vst [vmem:[#allocation2 + $0x88] sm:$0xf] %v501
      %508 = vrot.lane.b32.xlu0 %v223, 32
      %v509 = vpop.permute.xlu0 %508
      %510 = vrot.lane.b32.xlu0 %v224, 32
      %v511 = vpop.permute.xlu0 %510
      %512 = vrot.lane.b32.xlu0 %v225, 32
      %v513 = vpop.permute.xlu0 %512
      %514 = vrot.lane.b32.xlu0 %v226, 32
      %v515 = vpop.permute.xlu0 %514
      %516 = vrot.lane.b32.xlu0 %v227, 32
      %v517 = vpop.permute.xlu0 %516
      %vm518 = vcmp.lt.s32.totalorder %v173, 32
      %v519 = vsel %vm518, %v515, %v517
      %v520 = vsel %vm518, %v513, %v515
      %v521 = vsel %vm518, %v511, %v513
      %v522 = vsel %vm518, %v509, %v511
      %v523 = vsel %vm518, %v517, %v509
      %v524 = vpack.c.bf16 %v523, %v523
      %v525 = vpack.c.bf16 %v522, %v522
      %v526 = vpack.c.bf16 %v521, %v521
      %v527 = vpack.c.bf16 %v520, %v520
      %v528 = vpack.c.bf16 %v519, %v519
      %v534 = vunpack.c.l.b16 %v524
      %v535 = vunpack.c.l.b16 %v525
      %v536 = vunpack.c.l.b16 %v526
      %v537 = vunpack.c.l.b16 %v527
      %v538 = vunpack.c.l.b16 %v528
      %v539 = vpack.c.b16 %v535, %v534
      %v540 = vpack.c.b16 %v537, %v536
      %v541 = vpack.c.b16 %v538, %v538
      %545 = vst [vmem:[#allocation2 + $0x8c] sm:$0xff] %v539
      %546 = vst [vmem:[#allocation2 + $0x94] sm:$0xff] %v540
      %547 = vst [vmem:[#allocation2 + $0x9c] sm:$0xf] %v541
      %548 = vrot.lane.b32.xlu0 %v223, 31
      %v549 = vpop.permute.xlu0 %548
      %550 = vrot.lane.b32.xlu0 %v224, 31
      %v551 = vpop.permute.xlu0 %550
      %552 = vrot.lane.b32.xlu0 %v225, 31
      %v553 = vpop.permute.xlu0 %552
      %554 = vrot.lane.b32.xlu0 %v226, 31
      %v555 = vpop.permute.xlu0 %554
      %556 = vrot.lane.b32.xlu0 %v227, 31
      %v557 = vpop.permute.xlu0 %556
      %vm558 = vcmp.lt.s32.totalorder %v173, 31
      %v559 = vsel %vm558, %v555, %v557
      %v560 = vsel %vm558, %v553, %v555
      %v561 = vsel %vm558, %v551, %v553
      %v562 = vsel %vm558, %v549, %v551
      %v563 = vsel %vm558, %v557, %v549
      %v564 = vpack.c.bf16 %v563, %v563
      %v565 = vpack.c.bf16 %v562, %v562
      %v566 = vpack.c.bf16 %v561, %v561
      %v567 = vpack.c.bf16 %v560, %v560
      %v568 = vpack.c.bf16 %v559, %v559
      %v574 = vunpack.c.l.b16 %v564
      %v575 = vunpack.c.l.b16 %v565
      %v576 = vunpack.c.l.b16 %v566
      %v577 = vunpack.c.l.b16 %v567
      %v578 = vunpack.c.l.b16 %v568
      %v579 = vpack.c.b16 %v575, %v574
      %v580 = vpack.c.b16 %v577, %v576
      %v581 = vpack.c.b16 %v578, %v578
      %585 = vst [vmem:[#allocation2 + $0xa0] sm:$0xff] %v579
      %586 = vst [vmem:[#allocation2 + $0xa8] sm:$0xff] %v580
      %587 = vst [vmem:[#allocation2 + $0xb0] sm:$0xf] %v581
      %588 = vrot.lane.b32.xlu0 %v223, 30
      %v589 = vpop.permute.xlu0 %588
      %590 = vrot.lane.b32.xlu0 %v224, 30
      %v591 = vpop.permute.xlu0 %590
      %592 = vrot.lane.b32.xlu0 %v225, 30
      %v593 = vpop.permute.xlu0 %592
      %594 = vrot.lane.b32.xlu0 %v226, 30
      %v595 = vpop.permute.xlu0 %594
      %596 = vrot.lane.b32.xlu0 %v227, 30
      %v597 = vpop.permute.xlu0 %596
      %vm598 = vcmp.lt.s32.totalorder %v173, 30
      %v599 = vsel %vm598, %v595, %v597
      %v600 = vsel %vm598, %v593, %v595
      %v601 = vsel %vm598, %v591, %v593
      %v602 = vsel %vm598, %v589, %v591
      %v603 = vsel %vm598, %v597, %v589
      %v604 = vpack.c.bf16 %v603, %v603
      %v605 = vpack.c.bf16 %v602, %v602
      %v606 = vpack.c.bf16 %v601, %v601
      %v607 = vpack.c.bf16 %v600, %v600
      %v608 = vpack.c.bf16 %v599, %v599
      %v614 = vunpack.c.l.b16 %v604
      %v615 = vunpack.c.l.b16 %v605
      %v616 = vunpack.c.l.b16 %v606
      %v617 = vunpack.c.l.b16 %v607
      %v618 = vunpack.c.l.b16 %v608
      %v619 = vpack.c.b16 %v615, %v614
      %v620 = vpack.c.b16 %v617, %v616
      %v621 = vpack.c.b16 %v618, %v618
      %625 = vst [vmem:[#allocation2 + $0xb4] sm:$0xff] %v619
      %626 = vst [vmem:[#allocation2 + $0xbc] sm:$0xff] %v620
      %627 = vst [vmem:[#allocation2 + $0xc4] sm:$0xf] %v621
      %628 = vrot.lane.b32.xlu0 %v223, 2
      %v629 = vpop.permute.xlu0 %628
      %630 = vrot.lane.b32.xlu0 %v224, 2
      %v631 = vpop.permute.xlu0 %630
      %632 = vrot.lane.b32.xlu0 %v225, 2
      %v633 = vpop.permute.xlu0 %632
      %634 = vrot.lane.b32.xlu0 %v226, 2
      %v635 = vpop.permute.xlu0 %634
      %636 = vrot.lane.b32.xlu0 %v227, 2
      %v637 = vpop.permute.xlu0 %636
      %vm638 = vcmp.lt.s32.totalorder %v173, 2
      %v639 = vsel %vm638, %v635, %v637
      %v640 = vsel %vm638, %v633, %v635
      %v641 = vsel %vm638, %v631, %v633
      %v642 = vsel %vm638, %v629, %v631
      %v643 = vsel %vm638, %v637, %v629
      %v644 = vpack.c.bf16 %v643, %v643
      %v645 = vpack.c.bf16 %v642, %v642
      %v646 = vpack.c.bf16 %v641, %v641
      %v647 = vpack.c.bf16 %v640, %v640
      %v648 = vpack.c.bf16 %v639, %v639
      %v654 = vunpack.c.l.b16 %v644
      %v655 = vunpack.c.l.b16 %v645
      %v656 = vunpack.c.l.b16 %v646
      %v657 = vunpack.c.l.b16 %v647
      %v658 = vunpack.c.l.b16 %v648
      %v659 = vpack.c.b16 %v655, %v654
      %v660 = vpack.c.b16 %v657, %v656
      %v661 = vpack.c.b16 %v658, %v658
      %665 = vst [vmem:[#allocation2 + $0xc8] sm:$0xff] %v659
      %666 = vst [vmem:[#allocation2 + $0xd0] sm:$0xff] %v660
      %667 = vst [vmem:[#allocation2 + $0xd8] sm:$0xf] %v661
      %668 = vrot.lane.b32.xlu0 %v223, 1
      %v669 = vpop.permute.xlu0 %668
      %670 = vrot.lane.b32.xlu0 %v224, 1
      %v671 = vpop.permute.xlu0 %670
      %672 = vrot.lane.b32.xlu0 %v225, 1
      %v673 = vpop.permute.xlu0 %672
      %674 = vrot.lane.b32.xlu0 %v226, 1
      %v675 = vpop.permute.xlu0 %674
      %676 = vrot.lane.b32.xlu0 %v227, 1
      %v677 = vpop.permute.xlu0 %676
      %vm678 = vcmp.lt.s32.totalorder %v173, 1
      %v679 = vsel %vm678, %v675, %v677
      %v680 = vsel %vm678, %v673, %v675
      %v681 = vsel %vm678, %v671, %v673
      %v682 = vsel %vm678, %v669, %v671
      %v683 = vsel %vm678, %v677, %v669
      %v684 = vpack.c.bf16 %v683, %v683
      %v685 = vpack.c.bf16 %v682, %v682
      %v686 = vpack.c.bf16 %v681, %v681
      %v687 = vpack.c.bf16 %v680, %v680
      %v688 = vpack.c.bf16 %v679, %v679
      %v694 = vunpack.c.l.b16 %v684
      %v695 = vunpack.c.l.b16 %v685
      %v696 = vunpack.c.l.b16 %v686
      %v697 = vunpack.c.l.b16 %v687
      %v698 = vunpack.c.l.b16 %v688
      %v699 = vpack.c.b16 %v695, %v694
      %v700 = vpack.c.b16 %v697, %v696
      %v701 = vpack.c.b16 %v698, %v698
      %705 = vst [vmem:[#allocation2 + $0xdc] sm:$0xff] %v699
      %706 = vst [vmem:[#allocation2 + $0xe4] sm:$0xff] %v700
      %707 = vst [vmem:[#allocation2 + $0xec] sm:$0xf] %v701
      %v708 = vpack.c.bf16 %v223, %v223
      %v709 = vpack.c.bf16 %v224, %v224
      %v710 = vpack.c.bf16 %v225, %v225
      %v711 = vpack.c.bf16 %v226, %v226
      %v712 = vpack.c.bf16 %v227, %v227
      %v718 = vunpack.c.l.b16 %v708
      %v719 = vunpack.c.l.b16 %v709
      %v720 = vunpack.c.l.b16 %v710
      %v721 = vunpack.c.l.b16 %v711
      %v722 = vunpack.c.l.b16 %v712
      %v723 = vpack.c.b16 %v719, %v718
      %v724 = vpack.c.b16 %v721, %v720
      %v725 = vpack.c.b16 %v722, %v722
      %729 = vst [vmem:[#allocation2 + $0xf0] sm:$0xff] %v723
      %730 = vst [vmem:[#allocation2 + $0xf8] sm:$0xff] %v724
      %731 = vst [vmem:[#allocation2 + $0x100] sm:$0xf] %v725
      %732 = vrot.lane.b32.xlu0 %v223, 127
      %v733 = vpop.permute.xlu0 %732
      %734 = vrot.lane.b32.xlu0 %v224, 127
      %v735 = vpop.permute.xlu0 %734
      %736 = vrot.lane.b32.xlu0 %v225, 127
      %v737 = vpop.permute.xlu0 %736
      %738 = vrot.lane.b32.xlu0 %v226, 127
      %v739 = vpop.permute.xlu0 %738
      %740 = vrot.lane.b32.xlu0 %v227, 127
      %v741 = vpop.permute.xlu0 %740
      %vm742 = vcmp.lt.s32.totalorder %v173, 127
      %v743 = vsel %vm742, %v739, %v741
      %v744 = vsel %vm742, %v737, %v739
      %v745 = vsel %vm742, %v735, %v737
      %v746 = vsel %vm742, %v733, %v735
      %v747 = vsel %vm742, %v741, %v733
      %v748 = vpack.c.bf16 %v746, %v746
      %v749 = vpack.c.bf16 %v745, %v745
      %v750 = vpack.c.bf16 %v744, %v744
      %v751 = vpack.c.bf16 %v743, %v743
      %v752 = vpack.c.bf16 %v747, %v747
      %v758 = vunpack.c.l.b16 %v748
      %v759 = vunpack.c.l.b16 %v749
      %v760 = vunpack.c.l.b16 %v750
      %v761 = vunpack.c.l.b16 %v751
      %v762 = vunpack.c.l.b16 %v752
      %v763 = vpack.c.b16 %v759, %v758
      %v764 = vpack.c.b16 %v761, %v760
      %v765 = vpack.c.b16 %v762, %v762
      %769 = vst [vmem:[#allocation2 + $0x104] sm:$0xff] %v763
      %770 = vst [vmem:[#allocation2 + $0x10c] sm:$0xff] %v764
      %771 = vst [vmem:[#allocation2 + $0x114] sm:$0xf] %v765
      %772 = vrot.lane.b32.xlu0 %v223, 126
      %v773 = vpop.permute.xlu0 %772
      %774 = vrot.lane.b32.xlu0 %v224, 126
      %v775 = vpop.permute.xlu0 %774
      %776 = vrot.lane.b32.xlu0 %v225, 126
      %v777 = vpop.permute.xlu0 %776
      %778 = vrot.lane.b32.xlu0 %v226, 126
      %v779 = vpop.permute.xlu0 %778
      %780 = vrot.lane.b32.xlu0 %v227, 126
      %v781 = vpop.permute.xlu0 %780
      %vm782 = vcmp.lt.s32.totalorder %v173, 126
      %v783 = vsel %vm782, %v779, %v781
      %v784 = vsel %vm782, %v777, %v779
      %v785 = vsel %vm782, %v775, %v777
      %v786 = vsel %vm782, %v773, %v775
      %v787 = vsel %vm782, %v781, %v773
      %v788 = vpack.c.bf16 %v786, %v786
      %v789 = vpack.c.bf16 %v785, %v785
      %v790 = vpack.c.bf16 %v784, %v784
      %v791 = vpack.c.bf16 %v783, %v783
      %v792 = vpack.c.bf16 %v787, %v787
      %v798 = vunpack.c.l.b16 %v788
      %v799 = vunpack.c.l.b16 %v789
      %v800 = vunpack.c.l.b16 %v790
      %v801 = vunpack.c.l.b16 %v791
      %v802 = vunpack.c.l.b16 %v792
      %v803 = vpack.c.b16 %v799, %v798
      %v804 = vpack.c.b16 %v801, %v800
      %v805 = vpack.c.b16 %v802, %v802
      %809 = vst [vmem:[#allocation2 + $0x118] sm:$0xff] %v803
      %810 = vst [vmem:[#allocation2 + $0x120] sm:$0xff] %v804
      %811 = vst [vmem:[#allocation2 + $0x128] sm:$0xf] %v805
      %812 = vrot.lane.b32.xlu0 %v223, 98
      %v813 = vpop.permute.xlu0 %812
      %814 = vrot.lane.b32.xlu0 %v224, 98
      %v815 = vpop.permute.xlu0 %814
      %816 = vrot.lane.b32.xlu0 %v225, 98
      %v817 = vpop.permute.xlu0 %816
      %818 = vrot.lane.b32.xlu0 %v226, 98
      %v819 = vpop.permute.xlu0 %818
      %820 = vrot.lane.b32.xlu0 %v227, 98
      %v821 = vpop.permute.xlu0 %820
      %vm822 = vcmp.lt.s32.totalorder %v173, 98
      %v823 = vsel %vm822, %v819, %v821
      %v824 = vsel %vm822, %v817, %v819
      %v825 = vsel %vm822, %v815, %v817
      %v826 = vsel %vm822, %v813, %v815
      %v827 = vsel %vm822, %v821, %v813
      %v828 = vpack.c.bf16 %v826, %v826
      %v829 = vpack.c.bf16 %v825, %v825
      %v830 = vpack.c.bf16 %v824, %v824
      %v831 = vpack.c.bf16 %v823, %v823
      %v832 = vpack.c.bf16 %v827, %v827
      %v838 = vunpack.c.l.b16 %v828
      %v839 = vunpack.c.l.b16 %v829
      %v840 = vunpack.c.l.b16 %v830
      %v841 = vunpack.c.l.b16 %v831
      %v842 = vunpack.c.l.b16 %v832
      %v843 = vpack.c.b16 %v839, %v838
      %v844 = vpack.c.b16 %v841, %v840
      %v845 = vpack.c.b16 %v842, %v842
      %849 = vst [vmem:[#allocation2 + $0x12c] sm:$0xff] %v843
      %850 = vst [vmem:[#allocation2 + $0x134] sm:$0xff] %v844
      %851 = vst [vmem:[#allocation2 + $0x13c] sm:$0xf] %v845
      %852 = vrot.lane.b32.xlu0 %v223, 97
      %v853 = vpop.permute.xlu0 %852
      %854 = vrot.lane.b32.xlu0 %v224, 97
      %v855 = vpop.permute.xlu0 %854
      %856 = vrot.lane.b32.xlu0 %v225, 97
      %v857 = vpop.permute.xlu0 %856
      %858 = vrot.lane.b32.xlu0 %v226, 97
      %v859 = vpop.permute.xlu0 %858
      %860 = vrot.lane.b32.xlu0 %v227, 97
      %v861 = vpop.permute.xlu0 %860
      %vm862 = vcmp.lt.s32.totalorder %v173, 97
      %v863 = vsel %vm862, %v859, %v861
      %v864 = vsel %vm862, %v857, %v859
      %v865 = vsel %vm862, %v855, %v857
      %v866 = vsel %vm862, %v853, %v855
      %v867 = vsel %vm862, %v861, %v853
      %v868 = vpack.c.bf16 %v866, %v866
      %v869 = vpack.c.bf16 %v865, %v865
      %v870 = vpack.c.bf16 %v864, %v864
      %v871 = vpack.c.bf16 %v863, %v863
      %v872 = vpack.c.bf16 %v867, %v867
      %v878 = vunpack.c.l.b16 %v868
      %v879 = vunpack.c.l.b16 %v869
      %v880 = vunpack.c.l.b16 %v870
      %v881 = vunpack.c.l.b16 %v871
      %v882 = vunpack.c.l.b16 %v872
      %v883 = vpack.c.b16 %v879, %v878
      %v884 = vpack.c.b16 %v881, %v880
      %v885 = vpack.c.b16 %v882, %v882
      %889 = vst [vmem:[#allocation2 + $0x140] sm:$0xff] %v883
      %890 = vst [vmem:[#allocation2 + $0x148] sm:$0xff] %v884
      %891 = vst [vmem:[#allocation2 + $0x150] sm:$0xf] %v885
      %892 = vrot.lane.b32.xlu0 %v223, 96
      %v893 = vpop.permute.xlu0 %892
      %894 = vrot.lane.b32.xlu0 %v224, 96
      %v895 = vpop.permute.xlu0 %894
      %896 = vrot.lane.b32.xlu0 %v225, 96
      %v897 = vpop.permute.xlu0 %896
      %898 = vrot.lane.b32.xlu0 %v226, 96
      %v899 = vpop.permute.xlu0 %898
      %900 = vrot.lane.b32.xlu0 %v227, 96
      %v901 = vpop.permute.xlu0 %900
      %vm902 = vcmp.lt.s32.totalorder %v173, 96
      %v903 = vsel %vm902, %v899, %v901
      %v904 = vsel %vm902, %v897, %v899
      %v905 = vsel %vm902, %v895, %v897
      %v906 = vsel %vm902, %v893, %v895
      %v907 = vsel %vm902, %v901, %v893
      %v908 = vpack.c.bf16 %v906, %v906
      %v909 = vpack.c.bf16 %v905, %v905
      %v910 = vpack.c.bf16 %v904, %v904
      %v911 = vpack.c.bf16 %v903, %v903
      %v912 = vpack.c.bf16 %v907, %v907
      %v918 = vunpack.c.l.b16 %v908
      %v919 = vunpack.c.l.b16 %v909
      %v920 = vunpack.c.l.b16 %v910
      %v921 = vunpack.c.l.b16 %v911
      %v922 = vunpack.c.l.b16 %v912
      %v923 = vpack.c.b16 %v919, %v918
      %v924 = vpack.c.b16 %v921, %v920
      %v925 = vpack.c.b16 %v922, %v922
      %929 = vst [vmem:[#allocation2 + $0x154] sm:$0xff] %v923
      %930 = vst [vmem:[#allocation2 + $0x15c] sm:$0xff] %v924
      %931 = vst [vmem:[#allocation2 + $0x164] sm:$0xf] %v925
      %932 = vrot.lane.b32.xlu0 %v223, 95
      %v933 = vpop.permute.xlu0 %932
      %934 = vrot.lane.b32.xlu0 %v224, 95
      %v935 = vpop.permute.xlu0 %934
      %936 = vrot.lane.b32.xlu0 %v225, 95
      %v937 = vpop.permute.xlu0 %936
      %938 = vrot.lane.b32.xlu0 %v226, 95
      %v939 = vpop.permute.xlu0 %938
      %940 = vrot.lane.b32.xlu0 %v227, 95
      %v941 = vpop.permute.xlu0 %940
      %vm942 = vcmp.lt.s32.totalorder %v173, 95
      %v943 = vsel %vm942, %v939, %v941
      %v944 = vsel %vm942, %v937, %v939
      %v945 = vsel %vm942, %v935, %v937
      %v946 = vsel %vm942, %v933, %v935
      %v947 = vsel %vm942, %v941, %v933
      %v948 = vpack.c.bf16 %v946, %v946
      %v949 = vpack.c.bf16 %v945, %v945
      %v950 = vpack.c.bf16 %v944, %v944
      %v951 = vpack.c.bf16 %v943, %v943
      %v952 = vpack.c.bf16 %v947, %v947
      %v958 = vunpack.c.l.b16 %v948
      %v959 = vunpack.c.l.b16 %v949
      %v960 = vunpack.c.l.b16 %v950
      %v961 = vunpack.c.l.b16 %v951
      %v962 = vunpack.c.l.b16 %v952
      %v963 = vpack.c.b16 %v959, %v958
      %v964 = vpack.c.b16 %v961, %v960
      %v965 = vpack.c.b16 %v962, %v962
      %969 = vst [vmem:[#allocation2 + $0x168] sm:$0xff] %v963
      %970 = vst [vmem:[#allocation2 + $0x170] sm:$0xff] %v964
      %971 = vst [vmem:[#allocation2 + $0x178] sm:$0xf] %v965
      %972 = vrot.lane.b32.xlu0 %v223, 94
      %v973 = vpop.permute.xlu0 %972
      %974 = vrot.lane.b32.xlu0 %v224, 94
      %v975 = vpop.permute.xlu0 %974
      %976 = vrot.lane.b32.xlu0 %v225, 94
      %v977 = vpop.permute.xlu0 %976
      %978 = vrot.lane.b32.xlu0 %v226, 94
      %v979 = vpop.permute.xlu0 %978
      %980 = vrot.lane.b32.xlu0 %v227, 94
      %v981 = vpop.permute.xlu0 %980
      %vm982 = vcmp.lt.s32.totalorder %v173, 94
      %v983 = vsel %vm982, %v979, %v981
      %v984 = vsel %vm982, %v977, %v979
      %v985 = vsel %vm982, %v975, %v977
      %v986 = vsel %vm982, %v973, %v975
      %v987 = vsel %vm982, %v981, %v973
      %v988 = vpack.c.bf16 %v986, %v986
      %v989 = vpack.c.bf16 %v985, %v985
      %v990 = vpack.c.bf16 %v984, %v984
      %v991 = vpack.c.bf16 %v983, %v983
      %v992 = vpack.c.bf16 %v987, %v987
      %v998 = vunpack.c.l.b16 %v988
      %v999 = vunpack.c.l.b16 %v989
      %v1000 = vunpack.c.l.b16 %v990
      %v1001 = vunpack.c.l.b16 %v991
      %v1002 = vunpack.c.l.b16 %v992
      %v1003 = vpack.c.b16 %v999, %v998
      %v1004 = vpack.c.b16 %v1001, %v1000
      %v1005 = vpack.c.b16 %v1002, %v1002
      %1009 = vst [vmem:[#allocation2 + $0x17c] sm:$0xff] %v1003
      %1010 = vst [vmem:[#allocation2 + $0x184] sm:$0xff] %v1004
      %1011 = vst [vmem:[#allocation2 + $0x18c] sm:$0xf] %v1005
      %v1012 = vpack.c.b16 %v256, %v255
      %v1013 = vpack.c.b16 %v258, %v257
      %v1014 = vpack.c.b16 %v254, %v254
      %1018 = vst [vmem:[#allocation2 + $0x190] sm:$0xff] %v1012
      %1019 = vst [vmem:[#allocation2 + $0x198] sm:$0xff] %v1013
      %1020 = vst [vmem:[#allocation2 + $0x1a0] sm:$0xf] %v1014
      %v1021 = vpack.c.b16 %v296, %v295
      %v1022 = vpack.c.b16 %v298, %v297
      %v1023 = vpack.c.b16 %v294, %v294
      %1027 = vst [vmem:[#allocation2 + $0x1a4] sm:$0xff] %v1021
      %1028 = vst [vmem:[#allocation2 + $0x1ac] sm:$0xff] %v1022
      %1029 = vst [vmem:[#allocation2 + $0x1b4] sm:$0xf] %v1023
      %v1030 = vpack.c.b16 %v336, %v335
      %v1031 = vpack.c.b16 %v338, %v337
      %v1032 = vpack.c.b16 %v334, %v334
      %1036 = vst [vmem:[#allocation2 + $0x1b8] sm:$0xff] %v1030
      %1037 = vst [vmem:[#allocation2 + $0x1c0] sm:$0xff] %v1031
      %1038 = vst [vmem:[#allocation2 + $0x1c8] sm:$0xf] %v1032
      %v1039 = vpack.c.b16 %v376, %v375
      %v1040 = vpack.c.b16 %v378, %v377
      %v1041 = vpack.c.b16 %v374, %v374
      %1045 = vst [vmem:[#allocation2 + $0x1cc] sm:$0xff] %v1039
      %1046 = vst [vmem:[#allocation2 + $0x1d4] sm:$0xff] %v1040
      %1047 = vst [vmem:[#allocation2 + $0x1dc] sm:$0xf] %v1041
      %v1048 = vpack.c.b16 %v416, %v415
      %v1049 = vpack.c.b16 %v418, %v417
      %v1050 = vpack.c.b16 %v414, %v414
      %1054 = vst [vmem:[#allocation2 + $0x1e0] sm:$0xff] %v1048
      %1055 = vst [vmem:[#allocation2 + $0x1e8] sm:$0xff] %v1049
      %1056 = vst [vmem:[#allocation2 + $0x1f0] sm:$0xf] %v1050
      %v1057 = vld [vmem:[%s1] sm:$0xff]
      %v1058 = vld [vmem:[#allocation2] sm:$0xff]
      %v1059 = vld [vmem:[#allocation2 + $0x8] sm:$0xff]
      %v1060 = vld [vmem:[#allocation2 + $0x10] sm:$0xf]
      %v1061 = vld [vmem:[#allocation2 + $0x14] sm:$0xff]
      %v1062 = vld [vmem:[#allocation2 + $0x1c] sm:$0xff]
      %v1063 = vld [vmem:[#allocation2 + $0x24] sm:$0xf]
      %v1064 = vld [vmem:[#allocation2 + $0x28] sm:$0xff]
      %v1065 = vld [vmem:[#allocation2 + $0x30] sm:$0xff]
      %v1066 = vld [vmem:[#allocation2 + $0x38] sm:$0xf]
      %v1067 = vld [vmem:[#allocation2 + $0x3c] sm:$0xff]
      %v1068 = vld [vmem:[#allocation2 + $0x44] sm:$0xff]
      %v1069 = vld [vmem:[#allocation2 + $0x4c] sm:$0xf]
      %v1070 = vld [vmem:[#allocation2 + $0x50] sm:$0xff]
      %v1071 = vld [vmem:[#allocation2 + $0x58] sm:$0xff]
      %v1072 = vld [vmem:[#allocation2 + $0x60] sm:$0xf]
      %v1073 = vld [vmem:[#allocation2 + $0x64] sm:$0xff]
      %v1074 = vld [vmem:[#allocation2 + $0x6c] sm:$0xff]
      %v1075 = vld [vmem:[#allocation2 + $0x74] sm:$0xf]
      %v1076 = vld [vmem:[#allocation2 + $0x78] sm:$0xff]
      %v1077 = vld [vmem:[#allocation2 + $0x80] sm:$0xff]
      %v1078 = vld [vmem:[#allocation2 + $0x88] sm:$0xf]
      %v1079 = vld [vmem:[#allocation2 + $0x8c] sm:$0xff]
      %v1080 = vld [vmem:[#allocation2 + $0x94] sm:$0xff]
      %v1081 = vld [vmem:[#allocation2 + $0x9c] sm:$0xf]
      %v1082 = vld [vmem:[#allocation2 + $0xa0] sm:$0xff]
      %v1083 = vld [vmem:[#allocation2 + $0xa8] sm:$0xff]
      %v1084 = vld [vmem:[#allocation2 + $0xb0] sm:$0xf]
      %v1085 = vld [vmem:[#allocation2 + $0xb4] sm:$0xff]
      %v1086 = vld [vmem:[#allocation2 + $0xbc] sm:$0xff]
      %v1087 = vld [vmem:[#allocation2 + $0xc4] sm:$0xf]
      %v1088 = vld [vmem:[#allocation2 + $0xc8] sm:$0xff]
      %v1089 = vld [vmem:[#allocation2 + $0xd0] sm:$0xff]
      %v1090 = vld [vmem:[#allocation2 + $0xd8] sm:$0xf]
      %v1091 = vld [vmem:[#allocation2 + $0xdc] sm:$0xff]
      %v1092 = vld [vmem:[#allocation2 + $0xe4] sm:$0xff]
      %v1093 = vld [vmem:[#allocation2 + $0xec] sm:$0xf]
      %v1094 = vld [vmem:[#allocation2 + $0xf0] sm:$0xff]
      %v1095 = vld [vmem:[#allocation2 + $0xf8] sm:$0xff]
      %v1096 = vld [vmem:[#allocation2 + $0x100] sm:$0xf]
      %v1097 = vld [vmem:[#allocation2 + $0x104] sm:$0xff]
      %v1098 = vld [vmem:[#allocation2 + $0x10c] sm:$0xff]
      %v1099 = vld [vmem:[#allocation2 + $0x114] sm:$0xf]
      %v1100 = vld [vmem:[#allocation2 + $0x118] sm:$0xff]
      %v1101 = vld [vmem:[#allocation2 + $0x120] sm:$0xff]
      %v1102 = vld [vmem:[#allocation2 + $0x128] sm:$0xf]
      %v1103 = vld [vmem:[#allocation2 + $0x12c] sm:$0xff]
      %v1104 = vld [vmem:[#allocation2 + $0x134] sm:$0xff]
      %v1105 = vld [vmem:[#allocation2 + $0x13c] sm:$0xf]
      %v1106 = vld [vmem:[#allocation2 + $0x140] sm:$0xff]
      %v1107 = vld [vmem:[#allocation2 + $0x148] sm:$0xff]
      %v1108 = vld [vmem:[#allocation2 + $0x150] sm:$0xf]
      %v1109 = vld [vmem:[#allocation2 + $0x154] sm:$0xff]
      %v1110 = vld [vmem:[#allocation2 + $0x15c] sm:$0xff]
      %v1111 = vld [vmem:[#allocation2 + $0x164] sm:$0xf]
      %v1112 = vld [vmem:[#allocation2 + $0x168] sm:$0xff]
      %v1113 = vld [vmem:[#allocation2 + $0x170] sm:$0xff]
      %v1114 = vld [vmem:[#allocation2 + $0x178] sm:$0xf]
      %v1115 = vld [vmem:[#allocation2 + $0x17c] sm:$0xff]
      %v1116 = vld [vmem:[#allocation2 + $0x184] sm:$0xff]
      %v1117 = vld [vmem:[#allocation2 + $0x18c] sm:$0xf]
      %v1118 = vld [vmem:[#allocation2 + $0x190] sm:$0xff]
      %v1119 = vld [vmem:[#allocation2 + $0x198] sm:$0xff]
      %v1120 = vld [vmem:[#allocation2 + $0x1a0] sm:$0xf]
      %v1121 = vld [vmem:[#allocation2 + $0x1a4] sm:$0xff]
      %v1122 = vld [vmem:[#allocation2 + $0x1ac] sm:$0xff]
      %v1123 = vld [vmem:[#allocation2 + $0x1b4] sm:$0xf]
      %v1124 = vld [vmem:[#allocation2 + $0x1b8] sm:$0xff]
      %v1125 = vld [vmem:[#allocation2 + $0x1c0] sm:$0xff]
      %v1126 = vld [vmem:[#allocation2 + $0x1c8] sm:$0xf]
      %v1127 = vld [vmem:[#allocation2 + $0x1cc] sm:$0xff]
      %v1128 = vld [vmem:[#allocation2 + $0x1d4] sm:$0xff]
      %v1129 = vld [vmem:[#allocation2 + $0x1dc] sm:$0xf]
      %v1130 = vld [vmem:[#allocation2 + $0x1e0] sm:$0xff]
      %v1131 = vld [vmem:[#allocation2 + $0x1e8] sm:$0xff]
      %v1132 = vld [vmem:[#allocation2 + $0x1f0] sm:$0xf]
      %v1134 = vunpack.c.l.b16 %v1057
      %v1135 = vunpack.c.h.b16 %v1057
      %v1136 = vpack.c.b16 %v1134, %v1134
      %v1137 = vpack.c.b16 %v1135, %v1135
      %v1214 = vunpack.c.l.b16 %v1058
      %v1215 = vunpack.c.h.b16 %v1058
      %v1216 = vunpack.c.l.b16 %v1059
      %v1217 = vunpack.c.h.b16 %v1059
      %v1218 = vunpack.c.l.b16 %v1060
      %v1219 = vunpack.c.l.b16 %v1061
      %v1220 = vunpack.c.h.b16 %v1061
      %v1221 = vunpack.c.l.b16 %v1062
      %v1222 = vunpack.c.h.b16 %v1062
      %v1223 = vunpack.c.l.b16 %v1063
      %v1224 = vunpack.c.l.b16 %v1064
      %v1225 = vunpack.c.h.b16 %v1064
      %v1226 = vunpack.c.l.b16 %v1065
      %v1227 = vunpack.c.h.b16 %v1065
      %v1228 = vunpack.c.l.b16 %v1066
      %v1229 = vunpack.c.l.b16 %v1067
      %v1230 = vunpack.c.h.b16 %v1067
      %v1231 = vunpack.c.l.b16 %v1068
      %v1232 = vunpack.c.h.b16 %v1068
      %v1233 = vunpack.c.l.b16 %v1069
      %v1234 = vunpack.c.l.b16 %v1070
      %v1235 = vunpack.c.h.b16 %v1070
      %v1236 = vunpack.c.l.b16 %v1071
      %v1237 = vunpack.c.h.b16 %v1071
      %v1238 = vunpack.c.l.b16 %v1072
      %v1239 = vunpack.c.l.b16 %v1073
      %v1240 = vunpack.c.h.b16 %v1073
      %v1241 = vunpack.c.l.b16 %v1074
      %v1242 = vunpack.c.h.b16 %v1074
      %v1243 = vunpack.c.l.b16 %v1075
      %v1244 = vunpack.c.l.b16 %v1076
      %v1245 = vunpack.c.h.b16 %v1076
      %v1246 = vunpack.c.l.b16 %v1077
      %v1247 = vunpack.c.h.b16 %v1077
      %v1248 = vunpack.c.l.b16 %v1078
      %v1249 = vunpack.c.l.b16 %v1079
      %v1250 = vunpack.c.h.b16 %v1079
      %v1251 = vunpack.c.l.b16 %v1080
      %v1252 = vunpack.c.h.b16 %v1080
      %v1253 = vunpack.c.l.b16 %v1081
      %v1254 = vunpack.c.l.b16 %v1082
      %v1255 = vunpack.c.h.b16 %v1082
      %v1256 = vunpack.c.l.b16 %v1083
      %v1257 = vunpack.c.h.b16 %v1083
      %v1258 = vunpack.c.l.b16 %v1084
      %v1259 = vunpack.c.l.b16 %v1085
      %v1260 = vunpack.c.h.b16 %v1085
      %v1261 = vunpack.c.l.b16 %v1086
      %v1262 = vunpack.c.h.b16 %v1086
      %v1263 = vunpack.c.l.b16 %v1087
      %v1264 = vunpack.c.l.b16 %v1088
      %v1265 = vunpack.c.h.b16 %v1088
      %v1266 = vunpack.c.l.b16 %v1089
      %v1267 = vunpack.c.h.b16 %v1089
      %v1268 = vunpack.c.l.b16 %v1090
      %v1269 = vunpack.c.l.b16 %v1091
      %v1270 = vunpack.c.h.b16 %v1091
      %v1271 = vunpack.c.l.b16 %v1092
      %v1272 = vunpack.c.h.b16 %v1092
      %v1273 = vunpack.c.l.b16 %v1093
      %v1274 = vunpack.c.l.b16 %v1094
      %v1275 = vunpack.c.h.b16 %v1094
      %v1276 = vunpack.c.l.b16 %v1095
      %v1277 = vunpack.c.h.b16 %v1095
      %v1278 = vunpack.c.l.b16 %v1096
      %v1279 = vunpack.c.l.b16 %v1097
      %v1280 = vunpack.c.h.b16 %v1097
      %v1281 = vunpack.c.l.b16 %v1098
      %v1282 = vunpack.c.h.b16 %v1098
      %v1283 = vunpack.c.l.b16 %v1099
      %v1284 = vunpack.c.l.b16 %v1100
      %v1285 = vunpack.c.h.b16 %v1100
      %v1286 = vunpack.c.l.b16 %v1101
      %v1287 = vunpack.c.h.b16 %v1101
      %v1288 = vunpack.c.l.b16 %v1102
      %v1289 = vunpack.c.l.b16 %v1103
      %v1290 = vunpack.c.h.b16 %v1103
      %v1291 = vunpack.c.l.b16 %v1104
      %v1292 = vunpack.c.h.b16 %v1104
      %v1293 = vunpack.c.l.b16 %v1105
      %v1294 = vunpack.c.l.b16 %v1106
      %v1295 = vunpack.c.h.b16 %v1106
      %v1296 = vunpack.c.l.b16 %v1107
      %v1297 = vunpack.c.h.b16 %v1107
      %v1298 = vunpack.c.l.b16 %v1108
      %v1299 = vunpack.c.l.b16 %v1109
      %v1300 = vunpack.c.h.b16 %v1109
      %v1301 = vunpack.c.l.b16 %v1110
      %v1302 = vunpack.c.h.b16 %v1110
      %v1303 = vunpack.c.l.b16 %v1111
      %v1304 = vunpack.c.l.b16 %v1112
      %v1305 = vunpack.c.h.b16 %v1112
      %v1306 = vunpack.c.l.b16 %v1113
      %v1307 = vunpack.c.h.b16 %v1113
      %v1308 = vunpack.c.l.b16 %v1114
      %v1309 = vunpack.c.l.b16 %v1115
      %v1310 = vunpack.c.h.b16 %v1115
      %v1311 = vunpack.c.l.b16 %v1116
      %v1312 = vunpack.c.h.b16 %v1116
      %v1313 = vunpack.c.l.b16 %v1117
      %v1314 = vunpack.c.l.b16 %v1118
      %v1315 = vunpack.c.h.b16 %v1118
      %v1316 = vunpack.c.l.b16 %v1119
      %v1317 = vunpack.c.h.b16 %v1119
      %v1318 = vunpack.c.l.b16 %v1120
      %v1319 = vunpack.c.l.b16 %v1121
      %v1320 = vunpack.c.h.b16 %v1121
      %v1321 = vunpack.c.l.b16 %v1122
      %v1322 = vunpack.c.h.b16 %v1122
      %v1323 = vunpack.c.l.b16 %v1123
      %v1324 = vunpack.c.l.b16 %v1124
      %v1325 = vunpack.c.h.b16 %v1124
      %v1326 = vunpack.c.l.b16 %v1125
      %v1327 = vunpack.c.h.b16 %v1125
      %v1328 = vunpack.c.l.b16 %v1126
      %v1329 = vunpack.c.l.b16 %v1127
      %v1330 = vunpack.c.h.b16 %v1127
      %v1331 = vunpack.c.l.b16 %v1128
      %v1332 = vunpack.c.h.b16 %v1128
      %v1333 = vunpack.c.l.b16 %v1129
      %v1334 = vunpack.c.l.b16 %v1130
      %v1335 = vunpack.c.h.b16 %v1130
      %v1336 = vunpack.c.l.b16 %v1131
      %v1337 = vunpack.c.h.b16 %v1131
      %v1338 = vunpack.c.l.b16 %v1132
      %v1339 = vpack.c.b16 %v1219, %v1214
      %v1340 = vpack.c.b16 %v1220, %v1215
      %v1341 = vpack.c.b16 %v1221, %v1216
      %v1342 = vpack.c.b16 %v1222, %v1217
      %v1343 = vpack.c.b16 %v1223, %v1218
      %v1344 = vpack.c.b16 %v1229, %v1224
      %v1345 = vpack.c.b16 %v1230, %v1225
      %v1346 = vpack.c.b16 %v1231, %v1226
      %v1347 = vpack.c.b16 %v1232, %v1227
      %v1348 = vpack.c.b16 %v1233, %v1228
      %v1349 = vpack.c.b16 %v1239, %v1234
      %v1350 = vpack.c.b16 %v1240, %v1235
      %v1351 = vpack.c.b16 %v1241, %v1236
      %v1352 = vpack.c.b16 %v1242, %v1237
      %v1353 = vpack.c.b16 %v1243, %v1238
      %v1354 = vpack.c.b16 %v1249, %v1244
      %v1355 = vpack.c.b16 %v1250, %v1245
      %v1356 = vpack.c.b16 %v1251, %v1246
      %v1357 = vpack.c.b16 %v1252, %v1247
      %v1358 = vpack.c.b16 %v1253, %v1248
      %v1359 = vpack.c.b16 %v1259, %v1254
      %v1360 = vpack.c.b16 %v1260, %v1255
      %v1361 = vpack.c.b16 %v1261, %v1256
      %v1362 = vpack.c.b16 %v1262, %v1257
      %v1363 = vpack.c.b16 %v1263, %v1258
      %v1364 = vpack.c.b16 %v1269, %v1264
      %v1365 = vpack.c.b16 %v1270, %v1265
      %v1366 = vpack.c.b16 %v1271, %v1266
      %v1367 = vpack.c.b16 %v1272, %v1267
      %v1368 = vpack.c.b16 %v1273, %v1268
      %v1369 = vpack.c.b16 %v1279, %v1274
      %v1370 = vpack.c.b16 %v1280, %v1275
      %v1371 = vpack.c.b16 %v1281, %v1276
      %v1372 = vpack.c.b16 %v1282, %v1277
      %v1373 = vpack.c.b16 %v1283, %v1278
      %v1374 = vpack.c.b16 %v1289, %v1284
      %v1375 = vpack.c.b16 %v1290, %v1285
      %v1376 = vpack.c.b16 %v1291, %v1286
      %v1377 = vpack.c.b16 %v1292, %v1287
      %v1378 = vpack.c.b16 %v1293, %v1288
      %v1379 = vpack.c.b16 %v1299, %v1294
      %v1380 = vpack.c.b16 %v1300, %v1295
      %v1381 = vpack.c.b16 %v1301, %v1296
      %v1382 = vpack.c.b16 %v1302, %v1297
      %v1383 = vpack.c.b16 %v1303, %v1298
      %v1384 = vpack.c.b16 %v1309, %v1304
      %v1385 = vpack.c.b16 %v1310, %v1305
      %v1386 = vpack.c.b16 %v1311, %v1306
      %v1387 = vpack.c.b16 %v1312, %v1307
      %v1388 = vpack.c.b16 %v1313, %v1308
      %v1389 = vpack.c.b16 %v1319, %v1314
      %v1390 = vpack.c.b16 %v1320, %v1315
      %v1391 = vpack.c.b16 %v1321, %v1316
      %v1392 = vpack.c.b16 %v1322, %v1317
      %v1393 = vpack.c.b16 %v1323, %v1318
      %v1394 = vpack.c.b16 %v1329, %v1324
      %v1395 = vpack.c.b16 %v1330, %v1325
      %v1396 = vpack.c.b16 %v1331, %v1326
      %v1397 = vpack.c.b16 %v1332, %v1327
      %v1398 = vpack.c.b16 %v1333, %v1328
      %v1399 = vpack.c.b16 %v1334, %v1334
      %v1400 = vpack.c.b16 %v1335, %v1335
      %v1401 = vpack.c.b16 %v1336, %v1336
      %v1402 = vpack.c.b16 %v1337, %v1337
      %v1403 = vpack.c.b16 %v1338, %v1338
      %vm1464 = vcmask 588800
      %v1466 = vsel %vm1464, %v1137, 0
      %vm1468 = vcmask 1043456
      %v1470 = vsel %vm1468, %v1399, 0
      %v1473 = vsel %vm1468, %v1400, 0
      %v1476 = vsel %vm1468, %v1401, 0
      %v1479 = vsel %vm1468, %v1402, 0
      %v1482 = vsel %vm1468, %v1403, 0
      %1484 = vmatprep.subr.bf16.mxu0 %v1375
      %1485 = vmatpush1.bf16.msra.mxu0 %v1374
      %1486 = vmatprep.subr.bf16.mxu0 %v1370
      %1487 = vmatpush1.bf16.msra.mxu0 %v1369
      %1488 = vmatprep.subr.bf16.mxu0 %v1365
      %1489 = vmatpush1.bf16.msra.mxu0 %v1364
      %1490 = vmatprep.subr.bf16.mxu0 %v1360
      %1491 = vmatpush1.bf16.msra.mxu0 %v1359
      %1492 = vmatprep.subr.bf16.mxu0 %v1355
      %1493 = vmatpush1.bf16.msra.mxu0 %v1354
      %1494 = vmatprep.subr.bf16.mxu0 %v1350
      %1495 = vmatpush1.bf16.msra.mxu0 %v1349
      %1496 = vmatprep.subr.bf16.mxu0 %v1345
      %1497 = vmatpush1.bf16.msra.mxu0 %v1344
      %1498 = vmatprep.subr.bf16.mxu0 %v1340
      %1499 = vmatpush1.bf16.msra.mxu0 %v1339
      %1500 = vmatprep.subr.bf16.mxu0 0
      %1501 = vmatpush2.bf16.msra.mxu0 0
      %1502 = vmatprep.subr.bf16.mxu0 0
      %1503 = vmatpush2.bf16.msra.mxu0 0
      %1504 = vmatprep.subr.bf16.mxu0 0
      %1505 = vmatpush2.bf16.msra.mxu0 0
      %1506 = vmatprep.subr.bf16.mxu0 %v1473
      %1507 = vmatpush2.bf16.msra.mxu0 %v1470
      %1508 = vmatprep.subr.bf16.mxu0 %v1395
      %1509 = vmatpush2.bf16.msra.mxu0 %v1394
      %1510 = vmatprep.subr.bf16.mxu0 %v1390
      %1511 = vmatpush2.bf16.msra.mxu0 %v1389
      %1512 = vmatprep.subr.bf16.mxu0 %v1385
      %1513 = vmatpush2.bf16.msra.mxu0 %v1384
      %1514 = vmatprep.subr.bf16.mxu0 %v1380
      %1515 = vmatpush2.bf16.msra.mxu0 %v1379
      %1516 = vmatprep.mubr.bf16.mxu0 %v1466
      %1517 = vmatmul.mubr.bf16.gmra.mxu0 %v1136
      %v1518 = vpop.f32.mrf.mxu0
      %v1519 = vadd.f32 0.0, %v1518
      %v1520 = vpop.f32.mrf.mxu0
      %v1521 = vadd.f32 0.0, %v1520
      %v1522 = vpop.f32.mrf.mxu0
      %v1523 = vpop.f32.mrf.mxu0
      %1524 = vdwg.mxu0
      %1525 = vmatprep.subr.bf16.mxu0 %v1377
      %1526 = vmatpush1.bf16.msra.mxu0 %v1376
      %1527 = vmatprep.subr.bf16.mxu0 %v1372
      %1528 = vmatpush1.bf16.msra.mxu0 %v1371
      %1529 = vmatprep.subr.bf16.mxu0 %v1367
      %1530 = vmatpush1.bf16.msra.mxu0 %v1366
      %1531 = vmatprep.subr.bf16.mxu0 %v1362
      %1532 = vmatpush1.bf16.msra.mxu0 %v1361
      %1533 = vmatprep.subr.bf16.mxu0 %v1357
      %1534 = vmatpush1.bf16.msra.mxu0 %v1356
      %1535 = vmatprep.subr.bf16.mxu0 %v1352
      %1536 = vmatpush1.bf16.msra.mxu0 %v1351
      %1537 = vmatprep.subr.bf16.mxu0 %v1347
      %1538 = vmatpush1.bf16.msra.mxu0 %v1346
      %1539 = vmatprep.subr.bf16.mxu0 %v1342
      %1540 = vmatpush1.bf16.msra.mxu0 %v1341
      %1541 = vmatprep.subr.bf16.mxu0 0
      %1542 = vmatpush2.bf16.msra.mxu0 0
      %1543 = vmatprep.subr.bf16.mxu0 0
      %1544 = vmatpush2.bf16.msra.mxu0 0
      %1545 = vmatprep.subr.bf16.mxu0 0
      %1546 = vmatpush2.bf16.msra.mxu0 0
      %1547 = vmatprep.subr.bf16.mxu0 %v1479
      %1548 = vmatpush2.bf16.msra.mxu0 %v1476
      %1549 = vmatprep.subr.bf16.mxu0 %v1397
      %1550 = vmatpush2.bf16.msra.mxu0 %v1396
      %1551 = vmatprep.subr.bf16.mxu0 %v1392
      %1552 = vmatpush2.bf16.msra.mxu0 %v1391
      %1553 = vmatprep.subr.bf16.mxu0 %v1387
      %1554 = vmatpush2.bf16.msra.mxu0 %v1386
      %1555 = vmatprep.subr.bf16.mxu0 %v1382
      %1556 = vmatpush2.bf16.msra.mxu0 %v1381
      %1557 = vmatprep.mubr.bf16.mxu0 %v1466
      %1558 = vmatmul.mubr.bf16.gmra.mxu0 %v1136
      %v1559 = vpop.f32.mrf.mxu0
      %v1560 = vadd.f32 0.0, %v1559
      %v1561 = vpop.f32.mrf.mxu0
      %v1562 = vadd.f32 0.0, %v1561
      %v1563 = vpop.f32.mrf.mxu0
      %v1564 = vpop.f32.mrf.mxu0
      %1565 = vdwg.mxu0
      %1566 = vmatprep.subr.bf16.mxu0 0
      %1567 = vmatpush1.bf16.msra.mxu0 %v1378
      %1568 = vmatprep.subr.bf16.mxu0 0
      %1569 = vmatpush1.bf16.msra.mxu0 %v1373
      %1570 = vmatprep.subr.bf16.mxu0 0
      %1571 = vmatpush1.bf16.msra.mxu0 %v1368
      %1572 = vmatprep.subr.bf16.mxu0 0
      %1573 = vmatpush1.bf16.msra.mxu0 %v1363
      %1574 = vmatprep.subr.bf16.mxu0 0
      %1575 = vmatpush1.bf16.msra.mxu0 %v1358
      %1576 = vmatprep.subr.bf16.mxu0 0
      %1577 = vmatpush1.bf16.msra.mxu0 %v1353
      %1578 = vmatprep.subr.bf16.mxu0 0
      %1579 = vmatpush1.bf16.msra.mxu0 %v1348
      %1580 = vmatprep.subr.bf16.mxu0 0
      %1581 = vmatpush1.bf16.msra.mxu0 %v1343
      %1582 = vmatprep.subr.bf16.mxu0 0
      %1583 = vmatpush2.bf16.msra.mxu0 0
      %1584 = vmatprep.subr.bf16.mxu0 0
      %1585 = vmatpush2.bf16.msra.mxu0 0
      %1586 = vmatprep.subr.bf16.mxu0 0
      %1587 = vmatpush2.bf16.msra.mxu0 0
      %1588 = vmatprep.subr.bf16.mxu0 0
      %1589 = vmatpush2.bf16.msra.mxu0 %v1482
      %1590 = vmatprep.subr.bf16.mxu0 0
      %1591 = vmatpush2.bf16.msra.mxu0 %v1398
      %1592 = vmatprep.subr.bf16.mxu0 0
      %1593 = vmatpush2.bf16.msra.mxu0 %v1393
      %1594 = vmatprep.subr.bf16.mxu0 0
      %1595 = vmatpush2.bf16.msra.mxu0 %v1388
      %1596 = vmatprep.subr.bf16.mxu0 0
      %1597 = vmatpush2.bf16.msra.mxu0 %v1383
      %1598 = vmatprep.mubr.bf16.mxu0 %v1466
      %1599 = vmatmul.mubr.bf16.gmra.mxu0 %v1136
      %v1600 = vpop.f32.mrf.mxu0
      %v1601 = vadd.f32 0.0, %v1600
      %v1602 = vpop.f32.mrf.mxu0
      %v1603 = vpop.f32.mrf.mxu0
      %v1604 = vpop.f32.mrf.mxu0
      %1605 = vdwg.mxu0
      %v1606 = vsel %vm218, %v1519, 0.0
      %v1607 = vsel %vm219, %v1521, 0.0
      %v1608 = vsel %vm220, %v1560, 0.0
      %v1609 = vsel %vm221, %v1562, 0.0
      %v1610 = vsel %vm222, %v1601, 0.0
      %v1611 = vadd.f32 %v1606, %v1607
      %v1612 = vadd.f32 %v1611, %v1608
      %v1613 = vadd.f32 %v1612, %v1609
      %v1614 = vadd.f32 %v1613, %v1610
      %1615 = vadd.xlane.f32.xlu0 %v1614
      %v1616 = vpop.xlane.xlu0 %1615
      %v1617 = vmul.f32 %v1616, 0.00390625
      %v1618 = vsub.f32 %v1519, %v1617
      %v1619 = vsub.f32 %v1521, %v1617
      %v1620 = vsub.f32 %v1560, %v1617
      %v1621 = vsub.f32 %v1562, %v1617
      %v1622 = vsub.f32 %v1601, %v1617
      %v1623 = vsel %vm218, %v1618, 0.0
      %v1624 = vsel %vm219, %v1619, 0.0
      %v1625 = vsel %vm220, %v1620, 0.0
      %v1626 = vsel %vm221, %v1621, 0.0
      %v1627 = vsel %vm222, %v1622, 0.0
      %v1628 = vmul.f32 %v1623, %v1623
      %v1629 = vmul.f32 %v1624, %v1624
      %v1630 = vmul.f32 %v1625, %v1625
      %v1631 = vmul.f32 %v1626, %v1626
      %v1632 = vmul.f32 %v1627, %v1627
      %v1633 = vadd.f32 %v1628, %v1629
      %v1634 = vadd.f32 %v1633, %v1630
      %v1635 = vadd.f32 %v1634, %v1631
      %v1636 = vadd.f32 %v1635, %v1632
      %1637 = vadd.xlane.f32.xlu0 %v1636
      %v1638 = vpop.xlane.xlu0 %1637
      %v1639 = vmul.f32 %v1638, 0.00390625
      %v1640 = vadd.f32 %v1639, 1e-05
      %v1641 = vrsqrt.pop %v1640
      %v1642 = vmul.f32 %v1618, %v1641
      %v1643 = vmul.f32 %v1619, %v1641
      %v1644 = vmul.f32 %v1620, %v1641
      %v1645 = vmul.f32 %v1621, %v1641
      %v1646 = vmul.f32 %v1622, %v1641
      %v1647 = vmax.f32 %v1642, 0.0
      %v1648 = vmax.f32 %v1643, 0.0
      %v1649 = vmax.f32 %v1644, 0.0
      %v1650 = vmax.f32 %v1645, 0.0
      %v1651 = vmax.f32 %v1646, 0.0
      %v1652 = vsel %vm218, %v1647, 0.0
      %v1653 = vsel %vm219, %v1648, 0.0
      %v1654 = vsel %vm220, %v1649, 0.0
      %v1655 = vsel %vm221, %v1650, 0.0
      %v1656 = vsel %vm222, %v1651, 0.0
      %vm1657 = vcmp.eq.s32.totalorder %v178, 0
      %vm1658 = vcmp.eq.s32.totalorder %v179, 0
      %vm1659 = vcmp.eq.s32.totalorder %v180, 0
      %vm1660 = vcmp.eq.s32.totalorder %v181, 0
      %vm1661 = vcmp.eq.s32.totalorder %v182, 0
      %v1662 = vsel %vm1657, %v1653, %v1652
      %v1663 = vsel %vm1658, %v1654, %v1653
      %v1664 = vsel %vm1659, %v1655, %v1654
      %v1665 = vsel %vm1660, %v1656, %v1655
      %v1666 = vsel %vm1661, %v1652, %v1656
      %vm1667 = vcmp.eq.s32.totalorder %v178, 19
      %vm1668 = vcmp.eq.s32.totalorder %v179, 19
      %vm1669 = vcmp.eq.s32.totalorder %v180, 19
      %vm1670 = vcmp.eq.s32.totalorder %v181, 19
      %vm1671 = vcmp.eq.s32.totalorder %v182, 19
      %v1672 = vsel %vm1667, %v1666, %v1662
      %v1673 = vsel %vm1668, %v1662, %v1663
      %v1674 = vsel %vm1669, %v1663, %v1664
      %v1675 = vsel %vm1670, %v1664, %v1665
      %v1676 = vsel %vm1671, %v1665, %v1666
      %vm1677 = vcmp.eq.s32.totalorder %v178, 1
      %vm1678 = vcmp.eq.s32.totalorder %v179, 1
      %vm1679 = vcmp.eq.s32.totalorder %v180, 1
      %vm1680 = vcmp.eq.s32.totalorder %v181, 1
      %vm1681 = vcmp.eq.s32.totalorder %v182, 1
      %1682 = vrot.lane.b32.xlu0 %v1672, 64
      %v1683 = vpop.permute.xlu0 %1682
      %1684 = vrot.lane.b32.xlu0 %v1673, 64
      %v1685 = vpop.permute.xlu0 %1684
      %1686 = vrot.lane.b32.xlu0 %v1674, 64
      %v1687 = vpop.permute.xlu0 %1686
      %1688 = vrot.lane.b32.xlu0 %v1675, 64
      %v1689 = vpop.permute.xlu0 %1688
      %1690 = vrot.lane.b32.xlu0 %v1676, 64
      %v1691 = vpop.permute.xlu0 %1690
      %v1692 = vsel %vm318, %v1689, %v1691
      %v1693 = vsel %vm318, %v1687, %v1689
      %v1694 = vsel %vm318, %v1685, %v1687
      %v1695 = vsel %vm318, %v1683, %v1685
      %v1696 = vsel %vm318, %v1691, %v1683
      %v1697 = vsel %vm1677, %v1695, %v1672
      %v1698 = vsel %vm1678, %v1694, %v1673
      %v1699 = vsel %vm1679, %v1693, %v1674
      %v1700 = vsel %vm1680, %v1692, %v1675
      %v1701 = vsel %vm1681, %v1696, %v1676
      %vm1702 = vcmp.eq.s32.totalorder %v178, 18
      %vm1703 = vcmp.eq.s32.totalorder %v179, 18
      %vm1704 = vcmp.eq.s32.totalorder %v180, 18
      %vm1705 = vcmp.eq.s32.totalorder %v181, 18
      %vm1706 = vcmp.eq.s32.totalorder %v182, 18
      %1707 = vrot.lane.b32.xlu0 %v1697, 64
      %v1708 = vpop.permute.xlu0 %1707
      %1709 = vrot.lane.b32.xlu0 %v1698, 64
      %v1710 = vpop.permute.xlu0 %1709
      %1711 = vrot.lane.b32.xlu0 %v1699, 64
      %v1712 = vpop.permute.xlu0 %1711
      %1713 = vrot.lane.b32.xlu0 %v1700, 64
      %v1714 = vpop.permute.xlu0 %1713
      %1715 = vrot.lane.b32.xlu0 %v1701, 64
      %v1716 = vpop.permute.xlu0 %1715
      %v1717 = vsel %vm318, %v1714, %v1716
      %v1718 = vsel %vm318, %v1712, %v1714
      %v1719 = vsel %vm318, %v1710, %v1712
      %v1720 = vsel %vm318, %v1708, %v1710
      %v1721 = vsel %vm318, %v1716, %v1708
      %v1722 = vsel %vm1702, %v1721, %v1697
      %v1723 = vsel %vm1703, %v1720, %v1698
      %v1724 = vsel %vm1704, %v1719, %v1699
      %v1725 = vsel %vm1705, %v1718, %v1700
      %v1726 = vsel %vm1706, %v1717, %v1701
      %vm1727 = vcmp.eq.s32.totalorder %v183, 0
      %vm1728 = vcmp.eq.s32.totalorder %v184, 0
      %vm1729 = vcmp.eq.s32.totalorder %v185, 0
      %vm1730 = vcmp.eq.s32.totalorder %v186, 0
      %vm1731 = vcmp.eq.s32.totalorder %v187, 0
      %1732 = vrot.lane.b32.xlu0 %v1722, 124
      %v1733 = vpop.permute.xlu0 %1732
      %1734 = vrot.lane.b32.xlu0 %v1723, 124
      %v1735 = vpop.permute.xlu0 %1734
      %1736 = vrot.lane.b32.xlu0 %v1724, 124
      %v1737 = vpop.permute.xlu0 %1736
      %1738 = vrot.lane.b32.xlu0 %v1725, 124
      %v1739 = vpop.permute.xlu0 %1738
      %1740 = vrot.lane.b32.xlu0 %v1726, 124
      %v1741 = vpop.permute.xlu0 %1740
      %vm1742 = vcmp.lt.s32.totalorder %v173, 124
      %v1743 = vsel %vm1742, %v1739, %v1741
      %v1744 = vsel %vm1742, %v1737, %v1739
      %v1745 = vsel %vm1742, %v1735, %v1737
      %v1746 = vsel %vm1742, %v1733, %v1735
      %v1747 = vsel %vm1742, %v1741, %v1733
      %v1748 = vsel %vm1727, %v1746, %v1722
      %v1749 = vsel %vm1728, %v1745, %v1723
      %v1750 = vsel %vm1729, %v1744, %v1724
      %v1751 = vsel %vm1730, %v1743, %v1725
      %v1752 = vsel %vm1731, %v1747, %v1726
      %vm1753 = vcmp.eq.s32.totalorder %v183, 19
      %vm1754 = vcmp.eq.s32.totalorder %v184, 19
      %vm1755 = vcmp.eq.s32.totalorder %v185, 19
      %vm1756 = vcmp.eq.s32.totalorder %v186, 19
      %vm1757 = vcmp.eq.s32.totalorder %v187, 19
      %1758 = vrot.lane.b32.xlu0 %v1722, 4
      %v1759 = vpop.permute.xlu0 %1758
      %1760 = vrot.lane.b32.xlu0 %v1723, 4
      %v1761 = vpop.permute.xlu0 %1760
      %1762 = vrot.lane.b32.xlu0 %v1724, 4
      %v1763 = vpop.permute.xlu0 %1762
      %1764 = vrot.lane.b32.xlu0 %v1725, 4
      %v1765 = vpop.permute.xlu0 %1764
      %1766 = vrot.lane.b32.xlu0 %v1726, 4
      %v1767 = vpop.permute.xlu0 %1766
      %vm1768 = vcmp.lt.s32.totalorder %v173, 4
      %v1769 = vsel %vm1768, %v1765, %v1767
      %v1770 = vsel %vm1768, %v1763, %v1765
      %v1771 = vsel %vm1768, %v1761, %v1763
      %v1772 = vsel %vm1768, %v1759, %v1761
      %v1773 = vsel %vm1768, %v1767, %v1759
      %v1774 = vsel %vm1753, %v1773, %v1748
      %v1775 = vsel %vm1754, %v1772, %v1749
      %v1776 = vsel %vm1755, %v1771, %v1750
      %v1777 = vsel %vm1756, %v1770, %v1751
      %v1778 = vsel %vm1757, %v1769, %v1752
      %vm1779 = vcmp.eq.s32.totalorder %v183, 1
      %vm1780 = vcmp.eq.s32.totalorder %v184, 1
      %vm1781 = vcmp.eq.s32.totalorder %v185, 1
      %vm1782 = vcmp.eq.s32.totalorder %v186, 1
      %vm1783 = vcmp.eq.s32.totalorder %v187, 1
      %1784 = vrot.lane.b32.xlu0 %v1722, 126
      %v1785 = vpop.permute.xlu0 %1784
      %1786 = vrot.lane.b32.xlu0 %v1723, 126
      %v1787 = vpop.permute.xlu0 %1786
      %1788 = vrot.lane.b32.xlu0 %v1724, 126
      %v1789 = vpop.permute.xlu0 %1788
      %1790 = vrot.lane.b32.xlu0 %v1725, 126
      %v1791 = vpop.permute.xlu0 %1790
      %1792 = vrot.lane.b32.xlu0 %v1726, 126
      %v1793 = vpop.permute.xlu0 %1792
      %v1794 = vsel %vm782, %v1791, %v1793
      %v1795 = vsel %vm782, %v1789, %v1791
      %v1796 = vsel %vm782, %v1787, %v1789
      %v1797 = vsel %vm782, %v1785, %v1787
      %v1798 = vsel %vm782, %v1793, %v1785
      %v1799 = vsel %vm1779, %v1797, %v1774
      %v1800 = vsel %vm1780, %v1796, %v1775
      %v1801 = vsel %vm1781, %v1795, %v1776
      %v1802 = vsel %vm1782, %v1794, %v1777
      %v1803 = vsel %vm1783, %v1798, %v1778
      %vm1804 = vcmp.eq.s32.totalorder %v183, 18
      %vm1805 = vcmp.eq.s32.totalorder %v184, 18
      %vm1806 = vcmp.eq.s32.totalorder %v185, 18
      %vm1807 = vcmp.eq.s32.totalorder %v186, 18
      %vm1808 = vcmp.eq.s32.totalorder %v187, 18
      %1809 = vrot.lane.b32.xlu0 %v1722, 2
      %v1810 = vpop.permute.xlu0 %1809
      %1811 = vrot.lane.b32.xlu0 %v1723, 2
      %v1812 = vpop.permute.xlu0 %1811
      %1813 = vrot.lane.b32.xlu0 %v1724, 2
      %v1814 = vpop.permute.xlu0 %1813
      %1815 = vrot.lane.b32.xlu0 %v1725, 2
      %v1816 = vpop.permute.xlu0 %1815
      %1817 = vrot.lane.b32.xlu0 %v1726, 2
      %v1818 = vpop.permute.xlu0 %1817
      %v1819 = vsel %vm638, %v1816, %v1818
      %v1820 = vsel %vm638, %v1814, %v1816
      %v1821 = vsel %vm638, %v1812, %v1814
      %v1822 = vsel %vm638, %v1810, %v1812
      %v1823 = vsel %vm638, %v1818, %v1810
      %v1824 = vsel %vm1804, %v1823, %v1799
      %v1825 = vsel %vm1805, %v1822, %v1800
      %v1826 = vsel %vm1806, %v1821, %v1801
      %v1827 = vsel %vm1807, %v1820, %v1802
      %v1828 = vsel %vm1808, %v1819, %v1803
      %1829 = vrot.lane.b32.xlu0 %v1824, 66
      %v1830 = vpop.permute.xlu0 %1829
      %1831 = vrot.lane.b32.xlu0 %v1825, 66
      %v1832 = vpop.permute.xlu0 %1831
      %1833 = vrot.lane.b32.xlu0 %v1826, 66
      %v1834 = vpop.permute.xlu0 %1833
      %1835 = vrot.lane.b32.xlu0 %v1827, 66
      %v1836 = vpop.permute.xlu0 %1835
      %1837 = vrot.lane.b32.xlu0 %v1828, 66
      %v1838 = vpop.permute.xlu0 %1837
      %v1839 = vsel %vm238, %v1836, %v1838
      %v1840 = vsel %vm238, %v1834, %v1836
      %v1841 = vsel %vm238, %v1832, %v1834
      %v1842 = vsel %vm238, %v1830, %v1832
      %v1843 = vsel %vm238, %v1838, %v1830
      %v1844 = vpack.c.bf16 %v1843, %v1843
      %v1845 = vpack.c.bf16 %v1842, %v1842
      %v1846 = vpack.c.bf16 %v1841, %v1841
      %v1847 = vpack.c.bf16 %v1840, %v1840
      %v1848 = vpack.c.bf16 %v1839, %v1839
      %v1854 = vunpack.c.l.b16 %v1844
      %v1855 = vunpack.c.l.b16 %v1845
      %v1856 = vunpack.c.l.b16 %v1846
      %v1857 = vunpack.c.l.b16 %v1847
      %v1858 = vunpack.c.l.b16 %v1848
      %v1859 = vpack.c.b16 %v1855, %v1854
      %v1860 = vpack.c.b16 %v1857, %v1856
      %v1861 = vpack.c.b16 %v1858, %v1858
      %1865 = vst [vmem:[#allocation2] sm:$0xff] %v1859
      %1866 = vst [vmem:[#allocation2 + $0x8] sm:$0xff] %v1860
      %1867 = vst [vmem:[#allocation2 + $0x10] sm:$0xf] %v1861
      %1868 = vrot.lane.b32.xlu0 %v1824, 65
      %v1869 = vpop.permute.xlu0 %1868
      %1870 = vrot.lane.b32.xlu0 %v1825, 65
      %v1871 = vpop.permute.xlu0 %1870
      %1872 = vrot.lane.b32.xlu0 %v1826, 65
      %v1873 = vpop.permute.xlu0 %1872
      %1874 = vrot.lane.b32.xlu0 %v1827, 65
      %v1875 = vpop.permute.xlu0 %1874
      %1876 = vrot.lane.b32.xlu0 %v1828, 65
      %v1877 = vpop.permute.xlu0 %1876
      %v1878 = vsel %vm278, %v1875, %v1877
      %v1879 = vsel %vm278, %v1873, %v1875
      %v1880 = vsel %vm278, %v1871, %v1873
      %v1881 = vsel %vm278, %v1869, %v1871
      %v1882 = vsel %vm278, %v1877, %v1869
      %v1883 = vpack.c.bf16 %v1882, %v1882
      %v1884 = vpack.c.bf16 %v1881, %v1881
      %v1885 = vpack.c.bf16 %v1880, %v1880
      %v1886 = vpack.c.bf16 %v1879, %v1879
      %v1887 = vpack.c.bf16 %v1878, %v1878
      %v1893 = vunpack.c.l.b16 %v1883
      %v1894 = vunpack.c.l.b16 %v1884
      %v1895 = vunpack.c.l.b16 %v1885
      %v1896 = vunpack.c.l.b16 %v1886
      %v1897 = vunpack.c.l.b16 %v1887
      %v1898 = vpack.c.b16 %v1894, %v1893
      %v1899 = vpack.c.b16 %v1896, %v1895
      %v1900 = vpack.c.b16 %v1897, %v1897
      %1904 = vst [vmem:[#allocation2 + $0x14] sm:$0xff] %v1898
      %1905 = vst [vmem:[#allocation2 + $0x1c] sm:$0xff] %v1899
      %1906 = vst [vmem:[#allocation2 + $0x24] sm:$0xf] %v1900
      %1907 = vrot.lane.b32.xlu0 %v1824, 64
      %v1908 = vpop.permute.xlu0 %1907
      %1909 = vrot.lane.b32.xlu0 %v1825, 64
      %v1910 = vpop.permute.xlu0 %1909
      %1911 = vrot.lane.b32.xlu0 %v1826, 64
      %v1912 = vpop.permute.xlu0 %1911
      %1913 = vrot.lane.b32.xlu0 %v1827, 64
      %v1914 = vpop.permute.xlu0 %1913
      %1915 = vrot.lane.b32.xlu0 %v1828, 64
      %v1916 = vpop.permute.xlu0 %1915
      %v1917 = vsel %vm318, %v1914, %v1916
      %v1918 = vsel %vm318, %v1912, %v1914
      %v1919 = vsel %vm318, %v1910, %v1912
      %v1920 = vsel %vm318, %v1908, %v1910
      %v1921 = vsel %vm318, %v1916, %v1908
      %v1922 = vpack.c.bf16 %v1921, %v1921
      %v1923 = vpack.c.bf16 %v1920, %v1920
      %v1924 = vpack.c.bf16 %v1919, %v1919
      %v1925 = vpack.c.bf16 %v1918, %v1918
      %v1926 = vpack.c.bf16 %v1917, %v1917
      %v1932 = vunpack.c.l.b16 %v1922
      %v1933 = vunpack.c.l.b16 %v1923
      %v1934 = vunpack.c.l.b16 %v1924
      %v1935 = vunpack.c.l.b16 %v1925
      %v1936 = vunpack.c.l.b16 %v1926
      %v1937 = vpack.c.b16 %v1933, %v1932
      %v1938 = vpack.c.b16 %v1935, %v1934
      %v1939 = vpack.c.b16 %v1936, %v1936
      %1943 = vst [vmem:[#allocation2 + $0x28] sm:$0xff] %v1937
      %1944 = vst [vmem:[#allocation2 + $0x30] sm:$0xff] %v1938
      %1945 = vst [vmem:[#allocation2 + $0x38] sm:$0xf] %v1939
      %1946 = vrot.lane.b32.xlu0 %v1824, 63
      %v1947 = vpop.permute.xlu0 %1946
      %1948 = vrot.lane.b32.xlu0 %v1825, 63
      %v1949 = vpop.permute.xlu0 %1948
      %1950 = vrot.lane.b32.xlu0 %v1826, 63
      %v1951 = vpop.permute.xlu0 %1950
      %1952 = vrot.lane.b32.xlu0 %v1827, 63
      %v1953 = vpop.permute.xlu0 %1952
      %1954 = vrot.lane.b32.xlu0 %v1828, 63
      %v1955 = vpop.permute.xlu0 %1954
      %v1956 = vsel %vm358, %v1953, %v1955
      %v1957 = vsel %vm358, %v1951, %v1953
      %v1958 = vsel %vm358, %v1949, %v1951
      %v1959 = vsel %vm358, %v1947, %v1949
      %v1960 = vsel %vm358, %v1955, %v1947
      %v1961 = vpack.c.bf16 %v1960, %v1960
      %v1962 = vpack.c.bf16 %v1959, %v1959
      %v1963 = vpack.c.bf16 %v1958, %v1958
      %v1964 = vpack.c.bf16 %v1957, %v1957
      %v1965 = vpack.c.bf16 %v1956, %v1956
      %v1971 = vunpack.c.l.b16 %v1961
      %v1972 = vunpack.c.l.b16 %v1962
      %v1973 = vunpack.c.l.b16 %v1963
      %v1974 = vunpack.c.l.b16 %v1964
      %v1975 = vunpack.c.l.b16 %v1965
      %v1976 = vpack.c.b16 %v1972, %v1971
      %v1977 = vpack.c.b16 %v1974, %v1973
      %v1978 = vpack.c.b16 %v1975, %v1975
      %1982 = vst [vmem:[#allocation2 + $0x3c] sm:$0xff] %v1976
      %1983 = vst [vmem:[#allocation2 + $0x44] sm:$0xff] %v1977
      %1984 = vst [vmem:[#allocation2 + $0x4c] sm:$0xf] %v1978
      %1985 = vrot.lane.b32.xlu0 %v1824, 62
      %v1986 = vpop.permute.xlu0 %1985
      %1987 = vrot.lane.b32.xlu0 %v1825, 62
      %v1988 = vpop.permute.xlu0 %1987
      %1989 = vrot.lane.b32.xlu0 %v1826, 62
      %v1990 = vpop.permute.xlu0 %1989
      %1991 = vrot.lane.b32.xlu0 %v1827, 62
      %v1992 = vpop.permute.xlu0 %1991
      %1993 = vrot.lane.b32.xlu0 %v1828, 62
      %v1994 = vpop.permute.xlu0 %1993
      %v1995 = vsel %vm398, %v1992, %v1994
      %v1996 = vsel %vm398, %v1990, %v1992
      %v1997 = vsel %vm398, %v1988, %v1990
      %v1998 = vsel %vm398, %v1986, %v1988
      %v1999 = vsel %vm398, %v1994, %v1986
      %v2000 = vpack.c.bf16 %v1999, %v1999
      %v2001 = vpack.c.bf16 %v1998, %v1998
      %v2002 = vpack.c.bf16 %v1997, %v1997
      %v2003 = vpack.c.bf16 %v1996, %v1996
      %v2004 = vpack.c.bf16 %v1995, %v1995
      %v2010 = vunpack.c.l.b16 %v2000
      %v2011 = vunpack.c.l.b16 %v2001
      %v2012 = vunpack.c.l.b16 %v2002
      %v2013 = vunpack.c.l.b16 %v2003
      %v2014 = vunpack.c.l.b16 %v2004
      %v2015 = vpack.c.b16 %v2011, %v2010
      %v2016 = vpack.c.b16 %v2013, %v2012
      %v2017 = vpack.c.b16 %v2014, %v2014
      %2021 = vst [vmem:[#allocation2 + $0x50] sm:$0xff] %v2015
      %2022 = vst [vmem:[#allocation2 + $0x58] sm:$0xff] %v2016
      %2023 = vst [vmem:[#allocation2 + $0x60] sm:$0xf] %v2017
      %2024 = vrot.lane.b32.xlu0 %v1824, 34
      %v2025 = vpop.permute.xlu0 %2024
      %2026 = vrot.lane.b32.xlu0 %v1825, 34
      %v2027 = vpop.permute.xlu0 %2026
      %2028 = vrot.lane.b32.xlu0 %v1826, 34
      %v2029 = vpop.permute.xlu0 %2028
      %2030 = vrot.lane.b32.xlu0 %v1827, 34
      %v2031 = vpop.permute.xlu0 %2030
      %2032 = vrot.lane.b32.xlu0 %v1828, 34
      %v2033 = vpop.permute.xlu0 %2032
      %v2034 = vsel %vm438, %v2031, %v2033
      %v2035 = vsel %vm438, %v2029, %v2031
      %v2036 = vsel %vm438, %v2027, %v2029
      %v2037 = vsel %vm438, %v2025, %v2027
      %v2038 = vsel %vm438, %v2033, %v2025
      %v2039 = vpack.c.bf16 %v2038, %v2038
      %v2040 = vpack.c.bf16 %v2037, %v2037
      %v2041 = vpack.c.bf16 %v2036, %v2036
      %v2042 = vpack.c.bf16 %v2035, %v2035
      %v2043 = vpack.c.bf16 %v2034, %v2034
      %v2049 = vunpack.c.l.b16 %v2039
      %v2050 = vunpack.c.l.b16 %v2040
      %v2051 = vunpack.c.l.b16 %v2041
      %v2052 = vunpack.c.l.b16 %v2042
      %v2053 = vunpack.c.l.b16 %v2043
      %v2054 = vpack.c.b16 %v2050, %v2049
      %v2055 = vpack.c.b16 %v2052, %v2051
      %v2056 = vpack.c.b16 %v2053, %v2053
      %2060 = vst [vmem:[#allocation2 + $0x64] sm:$0xff] %v2054
      %2061 = vst [vmem:[#allocation2 + $0x6c] sm:$0xff] %v2055
      %2062 = vst [vmem:[#allocation2 + $0x74] sm:$0xf] %v2056
      %2063 = vrot.lane.b32.xlu0 %v1824, 33
      %v2064 = vpop.permute.xlu0 %2063
      %2065 = vrot.lane.b32.xlu0 %v1825, 33
      %v2066 = vpop.permute.xlu0 %2065
      %2067 = vrot.lane.b32.xlu0 %v1826, 33
      %v2068 = vpop.permute.xlu0 %2067
      %2069 = vrot.lane.b32.xlu0 %v1827, 33
      %v2070 = vpop.permute.xlu0 %2069
      %2071 = vrot.lane.b32.xlu0 %v1828, 33
      %v2072 = vpop.permute.xlu0 %2071
      %v2073 = vsel %vm478, %v2070, %v2072
      %v2074 = vsel %vm478, %v2068, %v2070
      %v2075 = vsel %vm478, %v2066, %v2068
      %v2076 = vsel %vm478, %v2064, %v2066
      %v2077 = vsel %vm478, %v2072, %v2064
      %v2078 = vpack.c.bf16 %v2077, %v2077
      %v2079 = vpack.c.bf16 %v2076, %v2076
      %v2080 = vpack.c.bf16 %v2075, %v2075
      %v2081 = vpack.c.bf16 %v2074, %v2074
      %v2082 = vpack.c.bf16 %v2073, %v2073
      %v2088 = vunpack.c.l.b16 %v2078
      %v2089 = vunpack.c.l.b16 %v2079
      %v2090 = vunpack.c.l.b16 %v2080
      %v2091 = vunpack.c.l.b16 %v2081
      %v2092 = vunpack.c.l.b16 %v2082
      %v2093 = vpack.c.b16 %v2089, %v2088
      %v2094 = vpack.c.b16 %v2091, %v2090
      %v2095 = vpack.c.b16 %v2092, %v2092
      %2099 = vst [vmem:[#allocation2 + $0x78] sm:$0xff] %v2093
      %2100 = vst [vmem:[#allocation2 + $0x80] sm:$0xff] %v2094
      %2101 = vst [vmem:[#allocation2 + $0x88] sm:$0xf] %v2095
      %2102 = vrot.lane.b32.xlu0 %v1824, 32
      %v2103 = vpop.permute.xlu0 %2102
      %2104 = vrot.lane.b32.xlu0 %v1825, 32
      %v2105 = vpop.permute.xlu0 %2104
      %2106 = vrot.lane.b32.xlu0 %v1826, 32
      %v2107 = vpop.permute.xlu0 %2106
      %2108 = vrot.lane.b32.xlu0 %v1827, 32
      %v2109 = vpop.permute.xlu0 %2108
      %2110 = vrot.lane.b32.xlu0 %v1828, 32
      %v2111 = vpop.permute.xlu0 %2110
      %v2112 = vsel %vm518, %v2109, %v2111
      %v2113 = vsel %vm518, %v2107, %v2109
      %v2114 = vsel %vm518, %v2105, %v2107
      %v2115 = vsel %vm518, %v2103, %v2105
      %v2116 = vsel %vm518, %v2111, %v2103
      %v2117 = vpack.c.bf16 %v2116, %v2116
      %v2118 = vpack.c.bf16 %v2115, %v2115
      %v2119 = vpack.c.bf16 %v2114, %v2114
      %v2120 = vpack.c.bf16 %v2113, %v2113
      %v2121 = vpack.c.bf16 %v2112, %v2112
      %v2127 = vunpack.c.l.b16 %v2117
      %v2128 = vunpack.c.l.b16 %v2118
      %v2129 = vunpack.c.l.b16 %v2119
      %v2130 = vunpack.c.l.b16 %v2120
      %v2131 = vunpack.c.l.b16 %v2121
      %v2132 = vpack.c.b16 %v2128, %v2127
      %v2133 = vpack.c.b16 %v2130, %v2129
      %v2134 = vpack.c.b16 %v2131, %v2131
      %2138 = vst [vmem:[#allocation2 + $0x8c] sm:$0xff] %v2132
      %2139 = vst [vmem:[#allocation2 + $0x94] sm:$0xff] %v2133
      %2140 = vst [vmem:[#allocation2 + $0x9c] sm:$0xf] %v2134
      %2141 = vrot.lane.b32.xlu0 %v1824, 31
      %v2142 = vpop.permute.xlu0 %2141
      %2143 = vrot.lane.b32.xlu0 %v1825, 31
      %v2144 = vpop.permute.xlu0 %2143
      %2145 = vrot.lane.b32.xlu0 %v1826, 31
      %v2146 = vpop.permute.xlu0 %2145
      %2147 = vrot.lane.b32.xlu0 %v1827, 31
      %v2148 = vpop.permute.xlu0 %2147
      %2149 = vrot.lane.b32.xlu0 %v1828, 31
      %v2150 = vpop.permute.xlu0 %2149
      %v2151 = vsel %vm558, %v2148, %v2150
      %v2152 = vsel %vm558, %v2146, %v2148
      %v2153 = vsel %vm558, %v2144, %v2146
      %v2154 = vsel %vm558, %v2142, %v2144
      %v2155 = vsel %vm558, %v2150, %v2142
      %v2156 = vpack.c.bf16 %v2155, %v2155
      %v2157 = vpack.c.bf16 %v2154, %v2154
      %v2158 = vpack.c.bf16 %v2153, %v2153
      %v2159 = vpack.c.bf16 %v2152, %v2152
      %v2160 = vpack.c.bf16 %v2151, %v2151
      %v2166 = vunpack.c.l.b16 %v2156
      %v2167 = vunpack.c.l.b16 %v2157
      %v2168 = vunpack.c.l.b16 %v2158
      %v2169 = vunpack.c.l.b16 %v2159
      %v2170 = vunpack.c.l.b16 %v2160
      %v2171 = vpack.c.b16 %v2167, %v2166
      %v2172 = vpack.c.b16 %v2169, %v2168
      %v2173 = vpack.c.b16 %v2170, %v2170
      %2177 = vst [vmem:[#allocation2 + $0xa0] sm:$0xff] %v2171
      %2178 = vst [vmem:[#allocation2 + $0xa8] sm:$0xff] %v2172
      %2179 = vst [vmem:[#allocation2 + $0xb0] sm:$0xf] %v2173
      %2180 = vrot.lane.b32.xlu0 %v1824, 30
      %v2181 = vpop.permute.xlu0 %2180
      %2182 = vrot.lane.b32.xlu0 %v1825, 30
      %v2183 = vpop.permute.xlu0 %2182
      %2184 = vrot.lane.b32.xlu0 %v1826, 30
      %v2185 = vpop.permute.xlu0 %2184
      %2186 = vrot.lane.b32.xlu0 %v1827, 30
      %v2187 = vpop.permute.xlu0 %2186
      %2188 = vrot.lane.b32.xlu0 %v1828, 30
      %v2189 = vpop.permute.xlu0 %2188
      %v2190 = vsel %vm598, %v2187, %v2189
      %v2191 = vsel %vm598, %v2185, %v2187
      %v2192 = vsel %vm598, %v2183, %v2185
      %v2193 = vsel %vm598, %v2181, %v2183
      %v2194 = vsel %vm598, %v2189, %v2181
      %v2195 = vpack.c.bf16 %v2194, %v2194
      %v2196 = vpack.c.bf16 %v2193, %v2193
      %v2197 = vpack.c.bf16 %v2192, %v2192
      %v2198 = vpack.c.bf16 %v2191, %v2191
      %v2199 = vpack.c.bf16 %v2190, %v2190
      %v2205 = vunpack.c.l.b16 %v2195
      %v2206 = vunpack.c.l.b16 %v2196
      %v2207 = vunpack.c.l.b16 %v2197
      %v2208 = vunpack.c.l.b16 %v2198
      %v2209 = vunpack.c.l.b16 %v2199
      %v2210 = vpack.c.b16 %v2206, %v2205
      %v2211 = vpack.c.b16 %v2208, %v2207
      %v2212 = vpack.c.b16 %v2209, %v2209
      %2216 = vst [vmem:[#allocation2 + $0xb4] sm:$0xff] %v2210
      %2217 = vst [vmem:[#allocation2 + $0xbc] sm:$0xff] %v2211
      %2218 = vst [vmem:[#allocation2 + $0xc4] sm:$0xf] %v2212
      %2219 = vrot.lane.b32.xlu0 %v1824, 2
      %v2220 = vpop.permute.xlu0 %2219
      %2221 = vrot.lane.b32.xlu0 %v1825, 2
      %v2222 = vpop.permute.xlu0 %2221
      %2223 = vrot.lane.b32.xlu0 %v1826, 2
      %v2224 = vpop.permute.xlu0 %2223
      %2225 = vrot.lane.b32.xlu0 %v1827, 2
      %v2226 = vpop.permute.xlu0 %2225
      %2227 = vrot.lane.b32.xlu0 %v1828, 2
      %v2228 = vpop.permute.xlu0 %2227
      %v2229 = vsel %vm638, %v2226, %v2228
      %v2230 = vsel %vm638, %v2224, %v2226
      %v2231 = vsel %vm638, %v2222, %v2224
      %v2232 = vsel %vm638, %v2220, %v2222
      %v2233 = vsel %vm638, %v2228, %v2220
      %v2234 = vpack.c.bf16 %v2233, %v2233
      %v2235 = vpack.c.bf16 %v2232, %v2232
      %v2236 = vpack.c.bf16 %v2231, %v2231
      %v2237 = vpack.c.bf16 %v2230, %v2230
      %v2238 = vpack.c.bf16 %v2229, %v2229
      %v2244 = vunpack.c.l.b16 %v2234
      %v2245 = vunpack.c.l.b16 %v2235
      %v2246 = vunpack.c.l.b16 %v2236
      %v2247 = vunpack.c.l.b16 %v2237
      %v2248 = vunpack.c.l.b16 %v2238
      %v2249 = vpack.c.b16 %v2245, %v2244
      %v2250 = vpack.c.b16 %v2247, %v2246
      %v2251 = vpack.c.b16 %v2248, %v2248
      %2255 = vst [vmem:[#allocation2 + $0xc8] sm:$0xff] %v2249
      %2256 = vst [vmem:[#allocation2 + $0xd0] sm:$0xff] %v2250
      %2257 = vst [vmem:[#allocation2 + $0xd8] sm:$0xf] %v2251
      %2258 = vrot.lane.b32.xlu0 %v1824, 1
      %v2259 = vpop.permute.xlu0 %2258
      %2260 = vrot.lane.b32.xlu0 %v1825, 1
      %v2261 = vpop.permute.xlu0 %2260
      %2262 = vrot.lane.b32.xlu0 %v1826, 1
      %v2263 = vpop.permute.xlu0 %2262
      %2264 = vrot.lane.b32.xlu0 %v1827, 1
      %v2265 = vpop.permute.xlu0 %2264
      %2266 = vrot.lane.b32.xlu0 %v1828, 1
      %v2267 = vpop.permute.xlu0 %2266
      %v2268 = vsel %vm678, %v2265, %v2267
      %v2269 = vsel %vm678, %v2263, %v2265
      %v2270 = vsel %vm678, %v2261, %v2263
      %v2271 = vsel %vm678, %v2259, %v2261
      %v2272 = vsel %vm678, %v2267, %v2259
      %v2273 = vpack.c.bf16 %v2272, %v2272
      %v2274 = vpack.c.bf16 %v2271, %v2271
      %v2275 = vpack.c.bf16 %v2270, %v2270
      %v2276 = vpack.c.bf16 %v2269, %v2269
      %v2277 = vpack.c.bf16 %v2268, %v2268
      %v2283 = vunpack.c.l.b16 %v2273
      %v2284 = vunpack.c.l.b16 %v2274
      %v2285 = vunpack.c.l.b16 %v2275
      %v2286 = vunpack.c.l.b16 %v2276
      %v2287 = vunpack.c.l.b16 %v2277
      %v2288 = vpack.c.b16 %v2284, %v2283
      %v2289 = vpack.c.b16 %v2286, %v2285
      %v2290 = vpack.c.b16 %v2287, %v2287
      %2294 = vst [vmem:[#allocation2 + $0xdc] sm:$0xff] %v2288
      %2295 = vst [vmem:[#allocation2 + $0xe4] sm:$0xff] %v2289
      %2296 = vst [vmem:[#allocation2 + $0xec] sm:$0xf] %v2290
      %v2297 = vpack.c.bf16 %v1824, %v1824
      %v2298 = vpack.c.bf16 %v1825, %v1825
      %v2299 = vpack.c.bf16 %v1826, %v1826
      %v2300 = vpack.c.bf16 %v1827, %v1827
      %v2301 = vpack.c.bf16 %v1828, %v1828
      %v2307 = vunpack.c.l.b16 %v2297
      %v2308 = vunpack.c.l.b16 %v2298
      %v2309 = vunpack.c.l.b16 %v2299
      %v2310 = vunpack.c.l.b16 %v2300
      %v2311 = vunpack.c.l.b16 %v2301
      %v2312 = vpack.c.b16 %v2308, %v2307
      %v2313 = vpack.c.b16 %v2310, %v2309
      %v2314 = vpack.c.b16 %v2311, %v2311
      %2318 = vst [vmem:[#allocation2 + $0xf0] sm:$0xff] %v2312
      %2319 = vst [vmem:[#allocation2 + $0xf8] sm:$0xff] %v2313
      %2320 = vst [vmem:[#allocation2 + $0x100] sm:$0xf] %v2314
      %2321 = vrot.lane.b32.xlu0 %v1824, 127
      %v2322 = vpop.permute.xlu0 %2321
      %2323 = vrot.lane.b32.xlu0 %v1825, 127
      %v2324 = vpop.permute.xlu0 %2323
      %2325 = vrot.lane.b32.xlu0 %v1826, 127
      %v2326 = vpop.permute.xlu0 %2325
      %2327 = vrot.lane.b32.xlu0 %v1827, 127
      %v2328 = vpop.permute.xlu0 %2327
      %2329 = vrot.lane.b32.xlu0 %v1828, 127
      %v2330 = vpop.permute.xlu0 %2329
      %v2331 = vsel %vm742, %v2328, %v2330
      %v2332 = vsel %vm742, %v2326, %v2328
      %v2333 = vsel %vm742, %v2324, %v2326
      %v2334 = vsel %vm742, %v2322, %v2324
      %v2335 = vsel %vm742, %v2330, %v2322
      %v2336 = vpack.c.bf16 %v2334, %v2334
      %v2337 = vpack.c.bf16 %v2333, %v2333
      %v2338 = vpack.c.bf16 %v2332, %v2332
      %v2339 = vpack.c.bf16 %v2331, %v2331
      %v2340 = vpack.c.bf16 %v2335, %v2335
      %v2346 = vunpack.c.l.b16 %v2336
      %v2347 = vunpack.c.l.b16 %v2337
      %v2348 = vunpack.c.l.b16 %v2338
      %v2349 = vunpack.c.l.b16 %v2339
      %v2350 = vunpack.c.l.b16 %v2340
      %v2351 = vpack.c.b16 %v2347, %v2346
      %v2352 = vpack.c.b16 %v2349, %v2348
      %v2353 = vpack.c.b16 %v2350, %v2350
      %2357 = vst [vmem:[#allocation2 + $0x104] sm:$0xff] %v2351
      %2358 = vst [vmem:[#allocation2 + $0x10c] sm:$0xff] %v2352
      %2359 = vst [vmem:[#allocation2 + $0x114] sm:$0xf] %v2353
      %2360 = vrot.lane.b32.xlu0 %v1824, 126
      %v2361 = vpop.permute.xlu0 %2360
      %2362 = vrot.lane.b32.xlu0 %v1825, 126
      %v2363 = vpop.permute.xlu0 %2362
      %2364 = vrot.lane.b32.xlu0 %v1826, 126
      %v2365 = vpop.permute.xlu0 %2364
      %2366 = vrot.lane.b32.xlu0 %v1827, 126
      %v2367 = vpop.permute.xlu0 %2366
      %2368 = vrot.lane.b32.xlu0 %v1828, 126
      %v2369 = vpop.permute.xlu0 %2368
      %v2370 = vsel %vm782, %v2367, %v2369
      %v2371 = vsel %vm782, %v2365, %v2367
      %v2372 = vsel %vm782, %v2363, %v2365
      %v2373 = vsel %vm782, %v2361, %v2363
      %v2374 = vsel %vm782, %v2369, %v2361
      %v2375 = vpack.c.bf16 %v2373, %v2373
      %v2376 = vpack.c.bf16 %v2372, %v2372
      %v2377 = vpack.c.bf16 %v2371, %v2371
      %v2378 = vpack.c.bf16 %v2370, %v2370
      %v2379 = vpack.c.bf16 %v2374, %v2374
      %v2385 = vunpack.c.l.b16 %v2375
      %v2386 = vunpack.c.l.b16 %v2376
      %v2387 = vunpack.c.l.b16 %v2377
      %v2388 = vunpack.c.l.b16 %v2378
      %v2389 = vunpack.c.l.b16 %v2379
      %v2390 = vpack.c.b16 %v2386, %v2385
      %v2391 = vpack.c.b16 %v2388, %v2387
      %v2392 = vpack.c.b16 %v2389, %v2389
      %2396 = vst [vmem:[#allocation2 + $0x118] sm:$0xff] %v2390
      %2397 = vst [vmem:[#allocation2 + $0x120] sm:$0xff] %v2391
      %2398 = vst [vmem:[#allocation2 + $0x128] sm:$0xf] %v2392
      %2399 = vrot.lane.b32.xlu0 %v1824, 98
      %v2400 = vpop.permute.xlu0 %2399
      %2401 = vrot.lane.b32.xlu0 %v1825, 98
      %v2402 = vpop.permute.xlu0 %2401
      %2403 = vrot.lane.b32.xlu0 %v1826, 98
      %v2404 = vpop.permute.xlu0 %2403
      %2405 = vrot.lane.b32.xlu0 %v1827, 98
      %v2406 = vpop.permute.xlu0 %2405
      %2407 = vrot.lane.b32.xlu0 %v1828, 98
      %v2408 = vpop.permute.xlu0 %2407
      %v2409 = vsel %vm822, %v2406, %v2408
      %v2410 = vsel %vm822, %v2404, %v2406
      %v2411 = vsel %vm822, %v2402, %v2404
      %v2412 = vsel %vm822, %v2400, %v2402
      %v2413 = vsel %vm822, %v2408, %v2400
      %v2414 = vpack.c.bf16 %v2412, %v2412
      %v2415 = vpack.c.bf16 %v2411, %v2411
      %v2416 = vpack.c.bf16 %v2410, %v2410
      %v2417 = vpack.c.bf16 %v2409, %v2409
      %v2418 = vpack.c.bf16 %v2413, %v2413
      %v2424 = vunpack.c.l.b16 %v2414
      %v2425 = vunpack.c.l.b16 %v2415
      %v2426 = vunpack.c.l.b16 %v2416
      %v2427 = vunpack.c.l.b16 %v2417
      %v2428 = vunpack.c.l.b16 %v2418
      %v2429 = vpack.c.b16 %v2425, %v2424
      %v2430 = vpack.c.b16 %v2427, %v2426
      %v2431 = vpack.c.b16 %v2428, %v2428
      %2435 = vst [vmem:[#allocation2 + $0x12c] sm:$0xff] %v2429
      %2436 = vst [vmem:[#allocation2 + $0x134] sm:$0xff] %v2430
      %2437 = vst [vmem:[#allocation2 + $0x13c] sm:$0xf] %v2431
      %2438 = vrot.lane.b32.xlu0 %v1824, 97
      %v2439 = vpop.permute.xlu0 %2438
      %2440 = vrot.lane.b32.xlu0 %v1825, 97
      %v2441 = vpop.permute.xlu0 %2440
      %2442 = vrot.lane.b32.xlu0 %v1826, 97
      %v2443 = vpop.permute.xlu0 %2442
      %2444 = vrot.lane.b32.xlu0 %v1827, 97
      %v2445 = vpop.permute.xlu0 %2444
      %2446 = vrot.lane.b32.xlu0 %v1828, 97
      %v2447 = vpop.permute.xlu0 %2446
      %v2448 = vsel %vm862, %v2445, %v2447
      %v2449 = vsel %vm862, %v2443, %v2445
      %v2450 = vsel %vm862, %v2441, %v2443
      %v2451 = vsel %vm862, %v2439, %v2441
      %v2452 = vsel %vm862, %v2447, %v2439
      %v2453 = vpack.c.bf16 %v2451, %v2451
      %v2454 = vpack.c.bf16 %v2450, %v2450
      %v2455 = vpack.c.bf16 %v2449, %v2449
      %v2456 = vpack.c.bf16 %v2448, %v2448
      %v2457 = vpack.c.bf16 %v2452, %v2452
      %v2463 = vunpack.c.l.b16 %v2453
      %v2464 = vunpack.c.l.b16 %v2454
      %v2465 = vunpack.c.l.b16 %v2455
      %v2466 = vunpack.c.l.b16 %v2456
      %v2467 = vunpack.c.l.b16 %v2457
      %v2468 = vpack.c.b16 %v2464, %v2463
      %v2469 = vpack.c.b16 %v2466, %v2465
      %v2470 = vpack.c.b16 %v2467, %v2467
      %2474 = vst [vmem:[#allocation2 + $0x140] sm:$0xff] %v2468
      %2475 = vst [vmem:[#allocation2 + $0x148] sm:$0xff] %v2469
      %2476 = vst [vmem:[#allocation2 + $0x150] sm:$0xf] %v2470
      %2477 = vrot.lane.b32.xlu0 %v1824, 96
      %v2478 = vpop.permute.xlu0 %2477
      %2479 = vrot.lane.b32.xlu0 %v1825, 96
      %v2480 = vpop.permute.xlu0 %2479
      %2481 = vrot.lane.b32.xlu0 %v1826, 96
      %v2482 = vpop.permute.xlu0 %2481
      %2483 = vrot.lane.b32.xlu0 %v1827, 96
      %v2484 = vpop.permute.xlu0 %2483
      %2485 = vrot.lane.b32.xlu0 %v1828, 96
      %v2486 = vpop.permute.xlu0 %2485
      %v2487 = vsel %vm902, %v2484, %v2486
      %v2488 = vsel %vm902, %v2482, %v2484
      %v2489 = vsel %vm902, %v2480, %v2482
      %v2490 = vsel %vm902, %v2478, %v2480
      %v2491 = vsel %vm902, %v2486, %v2478
      %v2492 = vpack.c.bf16 %v2490, %v2490
      %v2493 = vpack.c.bf16 %v2489, %v2489
      %v2494 = vpack.c.bf16 %v2488, %v2488
      %v2495 = vpack.c.bf16 %v2487, %v2487
      %v2496 = vpack.c.bf16 %v2491, %v2491
      %v2502 = vunpack.c.l.b16 %v2492
      %v2503 = vunpack.c.l.b16 %v2493
      %v2504 = vunpack.c.l.b16 %v2494
      %v2505 = vunpack.c.l.b16 %v2495
      %v2506 = vunpack.c.l.b16 %v2496
      %v2507 = vpack.c.b16 %v2503, %v2502
      %v2508 = vpack.c.b16 %v2505, %v2504
      %v2509 = vpack.c.b16 %v2506, %v2506
      %2513 = vst [vmem:[#allocation2 + $0x154] sm:$0xff] %v2507
      %2514 = vst [vmem:[#allocation2 + $0x15c] sm:$0xff] %v2508
      %2515 = vst [vmem:[#allocation2 + $0x164] sm:$0xf] %v2509
      %2516 = vrot.lane.b32.xlu0 %v1824, 95
      %v2517 = vpop.permute.xlu0 %2516
      %2518 = vrot.lane.b32.xlu0 %v1825, 95
      %v2519 = vpop.permute.xlu0 %2518
      %2520 = vrot.lane.b32.xlu0 %v1826, 95
      %v2521 = vpop.permute.xlu0 %2520
      %2522 = vrot.lane.b32.xlu0 %v1827, 95
      %v2523 = vpop.permute.xlu0 %2522
      %2524 = vrot.lane.b32.xlu0 %v1828, 95
      %v2525 = vpop.permute.xlu0 %2524
      %v2526 = vsel %vm942, %v2523, %v2525
      %v2527 = vsel %vm942, %v2521, %v2523
      %v2528 = vsel %vm942, %v2519, %v2521
      %v2529 = vsel %vm942, %v2517, %v2519
      %v2530 = vsel %vm942, %v2525, %v2517
      %v2531 = vpack.c.bf16 %v2529, %v2529
      %v2532 = vpack.c.bf16 %v2528, %v2528
      %v2533 = vpack.c.bf16 %v2527, %v2527
      %v2534 = vpack.c.bf16 %v2526, %v2526
      %v2535 = vpack.c.bf16 %v2530, %v2530
      %v2541 = vunpack.c.l.b16 %v2531
      %v2542 = vunpack.c.l.b16 %v2532
      %v2543 = vunpack.c.l.b16 %v2533
      %v2544 = vunpack.c.l.b16 %v2534
      %v2545 = vunpack.c.l.b16 %v2535
      %v2546 = vpack.c.b16 %v2542, %v2541
      %v2547 = vpack.c.b16 %v2544, %v2543
      %v2548 = vpack.c.b16 %v2545, %v2545
      %2552 = vst [vmem:[#allocation2 + $0x168] sm:$0xff] %v2546
      %2553 = vst [vmem:[#allocation2 + $0x170] sm:$0xff] %v2547
      %2554 = vst [vmem:[#allocation2 + $0x178] sm:$0xf] %v2548
      %2555 = vrot.lane.b32.xlu0 %v1824, 94
      %v2556 = vpop.permute.xlu0 %2555
      %2557 = vrot.lane.b32.xlu0 %v1825, 94
      %v2558 = vpop.permute.xlu0 %2557
      %2559 = vrot.lane.b32.xlu0 %v1826, 94
      %v2560 = vpop.permute.xlu0 %2559
      %2561 = vrot.lane.b32.xlu0 %v1827, 94
      %v2562 = vpop.permute.xlu0 %2561
      %2563 = vrot.lane.b32.xlu0 %v1828, 94
      %v2564 = vpop.permute.xlu0 %2563
      %v2565 = vsel %vm982, %v2562, %v2564
      %v2566 = vsel %vm982, %v2560, %v2562
      %v2567 = vsel %vm982, %v2558, %v2560
      %v2568 = vsel %vm982, %v2556, %v2558
      %v2569 = vsel %vm982, %v2564, %v2556
      %v2570 = vpack.c.bf16 %v2568, %v2568
      %v2571 = vpack.c.bf16 %v2567, %v2567
      %v2572 = vpack.c.bf16 %v2566, %v2566
      %v2573 = vpack.c.bf16 %v2565, %v2565
      %v2574 = vpack.c.bf16 %v2569, %v2569
      %v2580 = vunpack.c.l.b16 %v2570
      %v2581 = vunpack.c.l.b16 %v2571
      %v2582 = vunpack.c.l.b16 %v2572
      %v2583 = vunpack.c.l.b16 %v2573
      %v2584 = vunpack.c.l.b16 %v2574
      %v2585 = vpack.c.b16 %v2581, %v2580
      %v2586 = vpack.c.b16 %v2583, %v2582
      %v2587 = vpack.c.b16 %v2584, %v2584
      %2591 = vst [vmem:[#allocation2 + $0x17c] sm:$0xff] %v2585
      %2592 = vst [vmem:[#allocation2 + $0x184] sm:$0xff] %v2586
      %2593 = vst [vmem:[#allocation2 + $0x18c] sm:$0xf] %v2587
      %v2594 = vpack.c.b16 %v1856, %v1855
      %v2595 = vpack.c.b16 %v1858, %v1857
      %v2596 = vpack.c.b16 %v1854, %v1854
      %2600 = vst [vmem:[#allocation2 + $0x190] sm:$0xff] %v2594
      %2601 = vst [vmem:[#allocation2 + $0x198] sm:$0xff] %v2595
      %2602 = vst [vmem:[#allocation2 + $0x1a0] sm:$0xf] %v2596
      %v2603 = vpack.c.b16 %v1895, %v1894
      %v2604 = vpack.c.b16 %v1897, %v1896
      %v2605 = vpack.c.b16 %v1893, %v1893
      %2609 = vst [vmem:[#allocation2 + $0x1a4] sm:$0xff] %v2603
      %2610 = vst [vmem:[#allocation2 + $0x1ac] sm:$0xff] %v2604
      %2611 = vst [vmem:[#allocation2 + $0x1b4] sm:$0xf] %v2605
      %v2612 = vpack.c.b16 %v1934, %v1933
      %v2613 = vpack.c.b16 %v1936, %v1935
      %v2614 = vpack.c.b16 %v1932, %v1932
      %2618 = vst [vmem:[#allocation2 + $0x1b8] sm:$0xff] %v2612
      %2619 = vst [vmem:[#allocation2 + $0x1c0] sm:$0xff] %v2613
      %2620 = vst [vmem:[#allocation2 + $0x1c8] sm:$0xf] %v2614
      %v2621 = vpack.c.b16 %v1973, %v1972
      %v2622 = vpack.c.b16 %v1975, %v1974
      %v2623 = vpack.c.b16 %v1971, %v1971
      %2627 = vst [vmem:[#allocation2 + $0x1cc] sm:$0xff] %v2621
      %2628 = vst [vmem:[#allocation2 + $0x1d4] sm:$0xff] %v2622
      %2629 = vst [vmem:[#allocation2 + $0x1dc] sm:$0xf] %v2623
      %v2630 = vpack.c.b16 %v2012, %v2011
      %v2631 = vpack.c.b16 %v2014, %v2013
      %v2632 = vpack.c.b16 %v2010, %v2010
      %2636 = vst [vmem:[#allocation2 + $0x1e0] sm:$0xff] %v2630
      %2637 = vst [vmem:[#allocation2 + $0x1e8] sm:$0xff] %v2631
      %2638 = vst [vmem:[#allocation2 + $0x1f0] sm:$0xf] %v2632
      %v2639 = vld [vmem:[%s2] sm:$0xff]
      %v2640 = vld [vmem:[#allocation2] sm:$0xff]
      %v2641 = vld [vmem:[#allocation2 + $0x8] sm:$0xff]
      %v2642 = vld [vmem:[#allocation2 + $0x10] sm:$0xf]
      %v2643 = vld [vmem:[#allocation2 + $0x14] sm:$0xff]
      %v2644 = vld [vmem:[#allocation2 + $0x1c] sm:$0xff]
      %v2645 = vld [vmem:[#allocation2 + $0x24] sm:$0xf]
      %v2646 = vld [vmem:[#allocation2 + $0x28] sm:$0xff]
      %v2647 = vld [vmem:[#allocation2 + $0x30] sm:$0xff]
      %v2648 = vld [vmem:[#allocation2 + $0x38] sm:$0xf]
      %v2649 = vld [vmem:[#allocation2 + $0x3c] sm:$0xff]
      %v2650 = vld [vmem:[#allocation2 + $0x44] sm:$0xff]
      %v2651 = vld [vmem:[#allocation2 + $0x4c] sm:$0xf]
      %v2652 = vld [vmem:[#allocation2 + $0x50] sm:$0xff]
      %v2653 = vld [vmem:[#allocation2 + $0x58] sm:$0xff]
      %v2654 = vld [vmem:[#allocation2 + $0x60] sm:$0xf]
      %v2655 = vld [vmem:[#allocation2 + $0x64] sm:$0xff]
      %v2656 = vld [vmem:[#allocation2 + $0x6c] sm:$0xff]
      %v2657 = vld [vmem:[#allocation2 + $0x74] sm:$0xf]
      %v2658 = vld [vmem:[#allocation2 + $0x78] sm:$0xff]
      %v2659 = vld [vmem:[#allocation2 + $0x80] sm:$0xff]
      %v2660 = vld [vmem:[#allocation2 + $0x88] sm:$0xf]
      %v2661 = vld [vmem:[#allocation2 + $0x8c] sm:$0xff]
      %v2662 = vld [vmem:[#allocation2 + $0x94] sm:$0xff]
      %v2663 = vld [vmem:[#allocation2 + $0x9c] sm:$0xf]
      %v2664 = vld [vmem:[#allocation2 + $0xa0] sm:$0xff]
      %v2665 = vld [vmem:[#allocation2 + $0xa8] sm:$0xff]
      %v2666 = vld [vmem:[#allocation2 + $0xb0] sm:$0xf]
      %v2667 = vld [vmem:[#allocation2 + $0xb4] sm:$0xff]
      %v2668 = vld [vmem:[#allocation2 + $0xbc] sm:$0xff]
      %v2669 = vld [vmem:[#allocation2 + $0xc4] sm:$0xf]
      %v2670 = vld [vmem:[#allocation2 + $0xc8] sm:$0xff]
      %v2671 = vld [vmem:[#allocation2 + $0xd0] sm:$0xff]
      %v2672 = vld [vmem:[#allocation2 + $0xd8] sm:$0xf]
      %v2673 = vld [vmem:[#allocation2 + $0xdc] sm:$0xff]
      %v2674 = vld [vmem:[#allocation2 + $0xe4] sm:$0xff]
      %v2675 = vld [vmem:[#allocation2 + $0xec] sm:$0xf]
      %v2676 = vld [vmem:[#allocation2 + $0xf0] sm:$0xff]
      %v2677 = vld [vmem:[#allocation2 + $0xf8] sm:$0xff]
      %v2678 = vld [vmem:[#allocation2 + $0x100] sm:$0xf]
      %v2679 = vld [vmem:[#allocation2 + $0x104] sm:$0xff]
      %v2680 = vld [vmem:[#allocation2 + $0x10c] sm:$0xff]
      %v2681 = vld [vmem:[#allocation2 + $0x114] sm:$0xf]
      %v2682 = vld [vmem:[#allocation2 + $0x118] sm:$0xff]
      %v2683 = vld [vmem:[#allocation2 + $0x120] sm:$0xff]
      %v2684 = vld [vmem:[#allocation2 + $0x128] sm:$0xf]
      %v2685 = vld [vmem:[#allocation2 + $0x12c] sm:$0xff]
      %v2686 = vld [vmem:[#allocation2 + $0x134] sm:$0xff]
      %v2687 = vld [vmem:[#allocation2 + $0x13c] sm:$0xf]
      %v2688 = vld [vmem:[#allocation2 + $0x140] sm:$0xff]
      %v2689 = vld [vmem:[#allocation2 + $0x148] sm:$0xff]
      %v2690 = vld [vmem:[#allocation2 + $0x150] sm:$0xf]
      %v2691 = vld [vmem:[#allocation2 + $0x154] sm:$0xff]
      %v2692 = vld [vmem:[#allocation2 + $0x15c] sm:$0xff]
      %v2693 = vld [vmem:[#allocation2 + $0x164] sm:$0xf]
      %v2694 = vld [vmem:[#allocation2 + $0x168] sm:$0xff]
      %v2695 = vld [vmem:[#allocation2 + $0x170] sm:$0xff]
      %v2696 = vld [vmem:[#allocation2 + $0x178] sm:$0xf]
      %v2697 = vld [vmem:[#allocation2 + $0x17c] sm:$0xff]
      %v2698 = vld [vmem:[#allocation2 + $0x184] sm:$0xff]
      %v2699 = vld [vmem:[#allocation2 + $0x18c] sm:$0xf]
      %v2700 = vld [vmem:[#allocation2 + $0x190] sm:$0xff]
      %v2701 = vld [vmem:[#allocation2 + $0x198] sm:$0xff]
      %v2702 = vld [vmem:[#allocation2 + $0x1a0] sm:$0xf]
      %v2703 = vld [vmem:[#allocation2 + $0x1a4] sm:$0xff]
      %v2704 = vld [vmem:[#allocation2 + $0x1ac] sm:$0xff]
      %v2705 = vld [vmem:[#allocation2 + $0x1b4] sm:$0xf]
      %v2706 = vld [vmem:[#allocation2 + $0x1b8] sm:$0xff]
      %v2707 = vld [vmem:[#allocation2 + $0x1c0] sm:$0xff]
      %v2708 = vld [vmem:[#allocation2 + $0x1c8] sm:$0xf]
      %v2709 = vld [vmem:[#allocation2 + $0x1cc] sm:$0xff]
      %v2710 = vld [vmem:[#allocation2 + $0x1d4] sm:$0xff]
      %v2711 = vld [vmem:[#allocation2 + $0x1dc] sm:$0xf]
      %v2712 = vld [vmem:[#allocation2 + $0x1e0] sm:$0xff]
      %v2713 = vld [vmem:[#allocation2 + $0x1e8] sm:$0xff]
      %v2714 = vld [vmem:[#allocation2 + $0x1f0] sm:$0xf]
      %v2716 = vunpack.c.l.b16 %v2639
      %v2717 = vunpack.c.h.b16 %v2639
      %v2718 = vpack.c.b16 %v2716, %v2716
      %v2719 = vpack.c.b16 %v2717, %v2717
      %v2796 = vunpack.c.l.b16 %v2640
      %v2797 = vunpack.c.h.b16 %v2640
      %v2798 = vunpack.c.l.b16 %v2641
      %v2799 = vunpack.c.h.b16 %v2641
      %v2800 = vunpack.c.l.b16 %v2642
      %v2801 = vunpack.c.l.b16 %v2643
      %v2802 = vunpack.c.h.b16 %v2643
      %v2803 = vunpack.c.l.b16 %v2644
      %v2804 = vunpack.c.h.b16 %v2644
      %v2805 = vunpack.c.l.b16 %v2645
      %v2806 = vunpack.c.l.b16 %v2646
      %v2807 = vunpack.c.h.b16 %v2646
      %v2808 = vunpack.c.l.b16 %v2647
      %v2809 = vunpack.c.h.b16 %v2647
      %v2810 = vunpack.c.l.b16 %v2648
      %v2811 = vunpack.c.l.b16 %v2649
      %v2812 = vunpack.c.h.b16 %v2649
      %v2813 = vunpack.c.l.b16 %v2650
      %v2814 = vunpack.c.h.b16 %v2650
      %v2815 = vunpack.c.l.b16 %v2651
      %v2816 = vunpack.c.l.b16 %v2652
      %v2817 = vunpack.c.h.b16 %v2652
      %v2818 = vunpack.c.l.b16 %v2653
      %v2819 = vunpack.c.h.b16 %v2653
      %v2820 = vunpack.c.l.b16 %v2654
      %v2821 = vunpack.c.l.b16 %v2655
      %v2822 = vunpack.c.h.b16 %v2655
      %v2823 = vunpack.c.l.b16 %v2656
      %v2824 = vunpack.c.h.b16 %v2656
      %v2825 = vunpack.c.l.b16 %v2657
      %v2826 = vunpack.c.l.b16 %v2658
      %v2827 = vunpack.c.h.b16 %v2658
      %v2828 = vunpack.c.l.b16 %v2659
      %v2829 = vunpack.c.h.b16 %v2659
      %v2830 = vunpack.c.l.b16 %v2660
      %v2831 = vunpack.c.l.b16 %v2661
      %v2832 = vunpack.c.h.b16 %v2661
      %v2833 = vunpack.c.l.b16 %v2662
      %v2834 = vunpack.c.h.b16 %v2662
      %v2835 = vunpack.c.l.b16 %v2663
      %v2836 = vunpack.c.l.b16 %v2664
      %v2837 = vunpack.c.h.b16 %v2664
      %v2838 = vunpack.c.l.b16 %v2665
      %v2839 = vunpack.c.h.b16 %v2665
      %v2840 = vunpack.c.l.b16 %v2666
      %v2841 = vunpack.c.l.b16 %v2667
      %v2842 = vunpack.c.h.b16 %v2667
      %v2843 = vunpack.c.l.b16 %v2668
      %v2844 = vunpack.c.h.b16 %v2668
      %v2845 = vunpack.c.l.b16 %v2669
      %v2846 = vunpack.c.l.b16 %v2670
      %v2847 = vunpack.c.h.b16 %v2670
      %v2848 = vunpack.c.l.b16 %v2671
      %v2849 = vunpack.c.h.b16 %v2671
      %v2850 = vunpack.c.l.b16 %v2672
      %v2851 = vunpack.c.l.b16 %v2673
      %v2852 = vunpack.c.h.b16 %v2673
      %v2853 = vunpack.c.l.b16 %v2674
      %v2854 = vunpack.c.h.b16 %v2674
      %v2855 = vunpack.c.l.b16 %v2675
      %v2856 = vunpack.c.l.b16 %v2676
      %v2857 = vunpack.c.h.b16 %v2676
      %v2858 = vunpack.c.l.b16 %v2677
      %v2859 = vunpack.c.h.b16 %v2677
      %v2860 = vunpack.c.l.b16 %v2678
      %v2861 = vunpack.c.l.b16 %v2679
      %v2862 = vunpack.c.h.b16 %v2679
      %v2863 = vunpack.c.l.b16 %v2680
      %v2864 = vunpack.c.h.b16 %v2680
      %v2865 = vunpack.c.l.b16 %v2681
      %v2866 = vunpack.c.l.b16 %v2682
      %v2867 = vunpack.c.h.b16 %v2682
      %v2868 = vunpack.c.l.b16 %v2683
      %v2869 = vunpack.c.h.b16 %v2683
      %v2870 = vunpack.c.l.b16 %v2684
      %v2871 = vunpack.c.l.b16 %v2685
      %v2872 = vunpack.c.h.b16 %v2685
      %v2873 = vunpack.c.l.b16 %v2686
      %v2874 = vunpack.c.h.b16 %v2686
      %v2875 = vunpack.c.l.b16 %v2687
      %v2876 = vunpack.c.l.b16 %v2688
      %v2877 = vunpack.c.h.b16 %v2688
      %v2878 = vunpack.c.l.b16 %v2689
      %v2879 = vunpack.c.h.b16 %v2689
      %v2880 = vunpack.c.l.b16 %v2690
      %v2881 = vunpack.c.l.b16 %v2691
      %v2882 = vunpack.c.h.b16 %v2691
      %v2883 = vunpack.c.l.b16 %v2692
      %v2884 = vunpack.c.h.b16 %v2692
      %v2885 = vunpack.c.l.b16 %v2693
      %v2886 = vunpack.c.l.b16 %v2694
      %v2887 = vunpack.c.h.b16 %v2694
      %v2888 = vunpack.c.l.b16 %v2695
      %v2889 = vunpack.c.h.b16 %v2695
      %v2890 = vunpack.c.l.b16 %v2696
      %v2891 = vunpack.c.l.b16 %v2697
      %v2892 = vunpack.c.h.b16 %v2697
      %v2893 = vunpack.c.l.b16 %v2698
      %v2894 = vunpack.c.h.b16 %v2698
      %v2895 = vunpack.c.l.b16 %v2699
      %v2896 = vunpack.c.l.b16 %v2700
      %v2897 = vunpack.c.h.b16 %v2700
      %v2898 = vunpack.c.l.b16 %v2701
      %v2899 = vunpack.c.h.b16 %v2701
      %v2900 = vunpack.c.l.b16 %v2702
      %v2901 = vunpack.c.l.b16 %v2703
      %v2902 = vunpack.c.h.b16 %v2703
      %v2903 = vunpack.c.l.b16 %v2704
      %v2904 = vunpack.c.h.b16 %v2704
      %v2905 = vunpack.c.l.b16 %v2705
      %v2906 = vunpack.c.l.b16 %v2706
      %v2907 = vunpack.c.h.b16 %v2706
      %v2908 = vunpack.c.l.b16 %v2707
      %v2909 = vunpack.c.h.b16 %v2707
      %v2910 = vunpack.c.l.b16 %v2708
      %v2911 = vunpack.c.l.b16 %v2709
      %v2912 = vunpack.c.h.b16 %v2709
      %v2913 = vunpack.c.l.b16 %v2710
      %v2914 = vunpack.c.h.b16 %v2710
      %v2915 = vunpack.c.l.b16 %v2711
      %v2916 = vunpack.c.l.b16 %v2712
      %v2917 = vunpack.c.h.b16 %v2712
      %v2918 = vunpack.c.l.b16 %v2713
      %v2919 = vunpack.c.h.b16 %v2713
      %v2920 = vunpack.c.l.b16 %v2714
      %v2921 = vpack.c.b16 %v2801, %v2796
      %v2922 = vpack.c.b16 %v2802, %v2797
      %v2923 = vpack.c.b16 %v2803, %v2798
      %v2924 = vpack.c.b16 %v2804, %v2799
      %v2925 = vpack.c.b16 %v2805, %v2800
      %v2926 = vpack.c.b16 %v2811, %v2806
      %v2927 = vpack.c.b16 %v2812, %v2807
      %v2928 = vpack.c.b16 %v2813, %v2808
      %v2929 = vpack.c.b16 %v2814, %v2809
      %v2930 = vpack.c.b16 %v2815, %v2810
      %v2931 = vpack.c.b16 %v2821, %v2816
      %v2932 = vpack.c.b16 %v2822, %v2817
      %v2933 = vpack.c.b16 %v2823, %v2818
      %v2934 = vpack.c.b16 %v2824, %v2819
      %v2935 = vpack.c.b16 %v2825, %v2820
      %v2936 = vpack.c.b16 %v2831, %v2826
      %v2937 = vpack.c.b16 %v2832, %v2827
      %v2938 = vpack.c.b16 %v2833, %v2828
      %v2939 = vpack.c.b16 %v2834, %v2829
      %v2940 = vpack.c.b16 %v2835, %v2830
      %v2941 = vpack.c.b16 %v2841, %v2836
      %v2942 = vpack.c.b16 %v2842, %v2837
      %v2943 = vpack.c.b16 %v2843, %v2838
      %v2944 = vpack.c.b16 %v2844, %v2839
      %v2945 = vpack.c.b16 %v2845, %v2840
      %v2946 = vpack.c.b16 %v2851, %v2846
      %v2947 = vpack.c.b16 %v2852, %v2847
      %v2948 = vpack.c.b16 %v2853, %v2848
      %v2949 = vpack.c.b16 %v2854, %v2849
      %v2950 = vpack.c.b16 %v2855, %v2850
      %v2951 = vpack.c.b16 %v2861, %v2856
      %v2952 = vpack.c.b16 %v2862, %v2857
      %v2953 = vpack.c.b16 %v2863, %v2858
      %v2954 = vpack.c.b16 %v2864, %v2859
      %v2955 = vpack.c.b16 %v2865, %v2860
      %v2956 = vpack.c.b16 %v2871, %v2866
      %v2957 = vpack.c.b16 %v2872, %v2867
      %v2958 = vpack.c.b16 %v2873, %v2868
      %v2959 = vpack.c.b16 %v2874, %v2869
      %v2960 = vpack.c.b16 %v2875, %v2870
      %v2961 = vpack.c.b16 %v2881, %v2876
      %v2962 = vpack.c.b16 %v2882, %v2877
      %v2963 = vpack.c.b16 %v2883, %v2878
      %v2964 = vpack.c.b16 %v2884, %v2879
      %v2965 = vpack.c.b16 %v2885, %v2880
      %v2966 = vpack.c.b16 %v2891, %v2886
      %v2967 = vpack.c.b16 %v2892, %v2887
      %v2968 = vpack.c.b16 %v2893, %v2888
      %v2969 = vpack.c.b16 %v2894, %v2889
      %v2970 = vpack.c.b16 %v2895, %v2890
      %v2971 = vpack.c.b16 %v2901, %v2896
      %v2972 = vpack.c.b16 %v2902, %v2897
      %v2973 = vpack.c.b16 %v2903, %v2898
      %v2974 = vpack.c.b16 %v2904, %v2899
      %v2975 = vpack.c.b16 %v2905, %v2900
      %v2976 = vpack.c.b16 %v2911, %v2906
      %v2977 = vpack.c.b16 %v2912, %v2907
      %v2978 = vpack.c.b16 %v2913, %v2908
      %v2979 = vpack.c.b16 %v2914, %v2909
      %v2980 = vpack.c.b16 %v2915, %v2910
      %v2981 = vpack.c.b16 %v2916, %v2916
      %v2982 = vpack.c.b16 %v2917, %v2917
      %v2983 = vpack.c.b16 %v2918, %v2918
      %v2984 = vpack.c.b16 %v2919, %v2919
      %v2985 = vpack.c.b16 %v2920, %v2920
      %v3047 = vsel %vm1464, %v2719, 0
      %v3050 = vsel %vm1468, %v2981, 0
      %v3053 = vsel %vm1468, %v2982, 0
      %v3056 = vsel %vm1468, %v2983, 0
      %v3059 = vsel %vm1468, %v2984, 0
      %v3062 = vsel %vm1468, %v2985, 0
      %3064 = vmatprep.subr.bf16.mxu0 %v2957
      %3065 = vmatpush1.bf16.msra.mxu0 %v2956
      %3066 = vmatprep.subr.bf16.mxu0 %v2952
      %3067 = vmatpush1.bf16.msra.mxu0 %v2951
      %3068 = vmatprep.subr.bf16.mxu0 %v2947
      %3069 = vmatpush1.bf16.msra.mxu0 %v2946
      %3070 = vmatprep.subr.bf16.mxu0 %v2942
      %3071 = vmatpush1.bf16.msra.mxu0 %v2941
      %3072 = vmatprep.subr.bf16.mxu0 %v2937
      %3073 = vmatpush1.bf16.msra.mxu0 %v2936
      %3074 = vmatprep.subr.bf16.mxu0 %v2932
      %3075 = vmatpush1.bf16.msra.mxu0 %v2931
      %3076 = vmatprep.subr.bf16.mxu0 %v2927
      %3077 = vmatpush1.bf16.msra.mxu0 %v2926
      %3078 = vmatprep.subr.bf16.mxu0 %v2922
      %3079 = vmatpush1.bf16.msra.mxu0 %v2921
      %3080 = vmatprep.subr.bf16.mxu0 0
      %3081 = vmatpush2.bf16.msra.mxu0 0
      %3082 = vmatprep.subr.bf16.mxu0 0
      %3083 = vmatpush2.bf16.msra.mxu0 0
      %3084 = vmatprep.subr.bf16.mxu0 0
      %3085 = vmatpush2.bf16.msra.mxu0 0
      %3086 = vmatprep.subr.bf16.mxu0 %v3053
      %3087 = vmatpush2.bf16.msra.mxu0 %v3050
      %3088 = vmatprep.subr.bf16.mxu0 %v2977
      %3089 = vmatpush2.bf16.msra.mxu0 %v2976
      %3090 = vmatprep.subr.bf16.mxu0 %v2972
      %3091 = vmatpush2.bf16.msra.mxu0 %v2971
      %3092 = vmatprep.subr.bf16.mxu0 %v2967
      %3093 = vmatpush2.bf16.msra.mxu0 %v2966
      %3094 = vmatprep.subr.bf16.mxu0 %v2962
      %3095 = vmatpush2.bf16.msra.mxu0 %v2961
      %3096 = vmatprep.mubr.bf16.mxu0 %v3047
      %3097 = vmatmul.mubr.bf16.gmra.mxu0 %v2718
      %v3098 = vpop.f32.mrf.mxu0
      %v3099 = vadd.f32 0.0, %v3098
      %v3100 = vpop.f32.mrf.mxu0
      %v3101 = vadd.f32 0.0, %v3100
      %v3102 = vpop.f32.mrf.mxu0
      %v3103 = vpop.f32.mrf.mxu0
      %3104 = vdwg.mxu0
      %3105 = vmatprep.subr.bf16.mxu0 %v2959
      %3106 = vmatpush1.bf16.msra.mxu0 %v2958
      %3107 = vmatprep.subr.bf16.mxu0 %v2954
      %3108 = vmatpush1.bf16.msra.mxu0 %v2953
      %3109 = vmatprep.subr.bf16.mxu0 %v2949
      %3110 = vmatpush1.bf16.msra.mxu0 %v2948
      %3111 = vmatprep.subr.bf16.mxu0 %v2944
      %3112 = vmatpush1.bf16.msra.mxu0 %v2943
      %3113 = vmatprep.subr.bf16.mxu0 %v2939
      %3114 = vmatpush1.bf16.msra.mxu0 %v2938
      %3115 = vmatprep.subr.bf16.mxu0 %v2934
      %3116 = vmatpush1.bf16.msra.mxu0 %v2933
      %3117 = vmatprep.subr.bf16.mxu0 %v2929
      %3118 = vmatpush1.bf16.msra.mxu0 %v2928
      %3119 = vmatprep.subr.bf16.mxu0 %v2924
      %3120 = vmatpush1.bf16.msra.mxu0 %v2923
      %3121 = vmatprep.subr.bf16.mxu0 0
      %3122 = vmatpush2.bf16.msra.mxu0 0
      %3123 = vmatprep.subr.bf16.mxu0 0
      %3124 = vmatpush2.bf16.msra.mxu0 0
      %3125 = vmatprep.subr.bf16.mxu0 0
      %3126 = vmatpush2.bf16.msra.mxu0 0
      %3127 = vmatprep.subr.bf16.mxu0 %v3059
      %3128 = vmatpush2.bf16.msra.mxu0 %v3056
      %3129 = vmatprep.subr.bf16.mxu0 %v2979
      %3130 = vmatpush2.bf16.msra.mxu0 %v2978
      %3131 = vmatprep.subr.bf16.mxu0 %v2974
      %3132 = vmatpush2.bf16.msra.mxu0 %v2973
      %3133 = vmatprep.subr.bf16.mxu0 %v2969
      %3134 = vmatpush2.bf16.msra.mxu0 %v2968
      %3135 = vmatprep.subr.bf16.mxu0 %v2964
      %3136 = vmatpush2.bf16.msra.mxu0 %v2963
      %3137 = vmatprep.mubr.bf16.mxu0 %v3047
      %3138 = vmatmul.mubr.bf16.gmra.mxu0 %v2718
      %v3139 = vpop.f32.mrf.mxu0
      %v3140 = vadd.f32 0.0, %v3139
      %v3141 = vpop.f32.mrf.mxu0
      %v3142 = vadd.f32 0.0, %v3141
      %v3143 = vpop.f32.mrf.mxu0
      %v3144 = vpop.f32.mrf.mxu0
      %3145 = vdwg.mxu0
      %3146 = vmatprep.subr.bf16.mxu0 0
      %3147 = vmatpush1.bf16.msra.mxu0 %v2960
      %3148 = vmatprep.subr.bf16.mxu0 0
      %3149 = vmatpush1.bf16.msra.mxu0 %v2955
      %3150 = vmatprep.subr.bf16.mxu0 0
      %3151 = vmatpush1.bf16.msra.mxu0 %v2950
      %3152 = vmatprep.subr.bf16.mxu0 0
      %3153 = vmatpush1.bf16.msra.mxu0 %v2945
      %3154 = vmatprep.subr.bf16.mxu0 0
      %3155 = vmatpush1.bf16.msra.mxu0 %v2940
      %3156 = vmatprep.subr.bf16.mxu0 0
      %3157 = vmatpush1.bf16.msra.mxu0 %v2935
      %3158 = vmatprep.subr.bf16.mxu0 0
      %3159 = vmatpush1.bf16.msra.mxu0 %v2930
      %3160 = vmatprep.subr.bf16.mxu0 0
      %3161 = vmatpush1.bf16.msra.mxu0 %v2925
      %3162 = vmatprep.subr.bf16.mxu0 0
      %3163 = vmatpush2.bf16.msra.mxu0 0
      %3164 = vmatprep.subr.bf16.mxu0 0
      %3165 = vmatpush2.bf16.msra.mxu0 0
      %3166 = vmatprep.subr.bf16.mxu0 0
      %3167 = vmatpush2.bf16.msra.mxu0 0
      %3168 = vmatprep.subr.bf16.mxu0 0
      %3169 = vmatpush2.bf16.msra.mxu0 %v3062
      %3170 = vmatprep.subr.bf16.mxu0 0
      %3171 = vmatpush2.bf16.msra.mxu0 %v2980
      %3172 = vmatprep.subr.bf16.mxu0 0
      %3173 = vmatpush2.bf16.msra.mxu0 %v2975
      %3174 = vmatprep.subr.bf16.mxu0 0
      %3175 = vmatpush2.bf16.msra.mxu0 %v2970
      %3176 = vmatprep.subr.bf16.mxu0 0
      %3177 = vmatpush2.bf16.msra.mxu0 %v2965
      %3178 = vmatprep.mubr.bf16.mxu0 %v3047
      %3179 = vmatmul.mubr.bf16.gmra.mxu0 %v2718
      %v3180 = vpop.f32.mrf.mxu0
      %v3181 = vadd.f32 0.0, %v3180
      %v3182 = vpop.f32.mrf.mxu0
      %v3183 = vpop.f32.mrf.mxu0
      %v3184 = vpop.f32.mrf.mxu0
      %3185 = vdwg.mxu0
      %v3186 = vsel %vm218, %v3099, 0.0
      %v3187 = vsel %vm219, %v3101, 0.0
      %v3188 = vsel %vm220, %v3140, 0.0
      %v3189 = vsel %vm221, %v3142, 0.0
      %v3190 = vsel %vm222, %v3181, 0.0
      %v3191 = vadd.f32 %v3186, %v3187
      %v3192 = vadd.f32 %v3191, %v3188
      %v3193 = vadd.f32 %v3192, %v3189
      %v3194 = vadd.f32 %v3193, %v3190
      %3195 = vadd.xlane.f32.xlu0 %v3194
      %v3196 = vpop.xlane.xlu0 %3195
      %v3197 = vmul.f32 %v3196, 0.00390625
      %v3198 = vsub.f32 %v3099, %v3197
      %v3199 = vsub.f32 %v3101, %v3197
      %v3200 = vsub.f32 %v3140, %v3197
      %v3201 = vsub.f32 %v3142, %v3197
      %v3202 = vsub.f32 %v3181, %v3197
      %v3203 = vsel %vm218, %v3198, 0.0
      %v3204 = vsel %vm219, %v3199, 0.0
      %v3205 = vsel %vm220, %v3200, 0.0
      %v3206 = vsel %vm221, %v3201, 0.0
      %v3207 = vsel %vm222, %v3202, 0.0
      %v3208 = vmul.f32 %v3203, %v3203
      %v3209 = vmul.f32 %v3204, %v3204
      %v3210 = vmul.f32 %v3205, %v3205
      %v3211 = vmul.f32 %v3206, %v3206
      %v3212 = vmul.f32 %v3207, %v3207
      %v3213 = vadd.f32 %v3208, %v3209
      %v3214 = vadd.f32 %v3213, %v3210
      %v3215 = vadd.f32 %v3214, %v3211
      %v3216 = vadd.f32 %v3215, %v3212
      %3217 = vadd.xlane.f32.xlu0 %v3216
      %v3218 = vpop.xlane.xlu0 %3217
      %v3219 = vmul.f32 %v3218, 0.00390625
      %v3220 = vadd.f32 %v3219, 1e-05
      %v3221 = vrsqrt.pop %v3220
      %v3222 = vmul.f32 %v3198, %v3221
      %v3223 = vmul.f32 %v3199, %v3221
      %v3224 = vmul.f32 %v3200, %v3221
      %v3225 = vmul.f32 %v3201, %v3221
      %v3226 = vmul.f32 %v3202, %v3221
      %v3227 = vsel %vm218, %v3222, 0.0
      %v3228 = vsel %vm219, %v3223, 0.0
      %v3229 = vsel %vm220, %v3224, 0.0
      %v3230 = vsel %vm221, %v3225, 0.0
      %v3231 = vsel %vm222, %v3226, 0.0
      %v3232 = vadd.f32 %v223, %v3227
      %v3233 = vadd.f32 %v224, %v3228
      %v3234 = vadd.f32 %v225, %v3229
      %v3235 = vadd.f32 %v226, %v3230
      %v3236 = vadd.f32 %v227, %v3231
      %3237 = vst [vmem:[%s170] sm:$0xff] %v3232
      %3238 = vst [vmem:[%s170 + $0x8] sm:$0xff] %v3233
      %3239 = vst [vmem:[%s170 + $0x10] sm:$0xff] %v3234
      %3240 = vst [vmem:[%s170 + $0x18] sm:$0xff] %v3235
      %3241 = vst [vmem:[%s170 + $0x20] sm:$0xff] %v3236
      %p3242 = scmp.lt.s32.totalorder %s14, 1
      %s3243 = scalar_select %p3242, %s14, 1
      %s3244 = smul.addr %s3243, 5
      %s3245 = smul.addr %s3244, 8
      %s3246 = scalar_lea.vmem %s3, %s3245
      // Predicated region
      $region33: #{resnet_block_forward.1} parent=31 // pred_check
        %p3247 = pneg %p100
      $region34: #{resnet_block_forward.1} parent=31 // pred_check_branch
        %3249 = sbr.rel (%p3247) target = $region36
      $region35: #{resnet_block_forward.1} parent=31 // pred_region
        _
      $region36: #{resnet_block_forward.1} parent=31 // pred_fallthru
        _
    $region32: #{resnet_block_forward.1} parent=5 // pred_fallthru
      _
    %p3250 = scmp.le.s32.totalorder 2, %s9
    // Predicated region
    $region37: #{resnet_block_forward.1} parent=5 // pred_check
      %p3251 = pneg %p3250
    $region38: #{resnet_block_forward.1} parent=5 // pred_check_branch
      %3253 = sbr.rel (%p3251) target = $region40
    $region39: #{resnet_block_forward.1} parent=5 // pred_region
      %s3254 = ssub.s32 %s9, 2
      // Predicated region
      $region41: #{resnet_block_forward.1} parent=39 // pred_check
        %p3255 = pneg %p106
      $region42: #{resnet_block_forward.1} parent=39 // pred_check_branch
        %3257 = sbr.rel (%p3255) target = $region44
      $region43: #{resnet_block_forward.1} parent=39 // pred_region
        %p3258 = scmp.lt.s32.totalorder %s15, 1
        %s3259 = scalar_select %p3258, %s15, 1
        %s3260 = smul.addr %s3259, 5
        %s3261 = smul.addr %s3260, 8
        %s3262 = scalar_lea.vmem %s3, %s3261
      $region44: #{resnet_block_forward.1} parent=39 // pred_fallthru
        _
    $region40: #{resnet_block_forward.1} parent=5 // pred_fallthru
      _
  $region6: #{resnet_block_forward.1} parent=0 // loop_footer
    %s13 = sadd.s32 1, %s9
  $region7: #{resnet_block_forward.1} parent=0 // loop_footer_branch
    %8 = sbr.rel target = $region3
  $region8: #{resnet_block_forward.1} parent=0 // loop_exit
    _

</llo_original>
